<compile_context>
chip_gen: v7x
topology: tpu7x:2x2x1
jax: 0.10.0
libtpu: 0.0.40
codegen_flags: <defaults>
</compile_context>

<pallas_src>
import functools

import jax
import jax.numpy as jnp
from jax.experimental import pallas as pl
from jax.experimental.pallas import tpu as pltpu

LRELU_SLOPE = 0.2
BN_EPS = 1e-5
LANE = 128   # channel padding target for lane-dense outputs
SUB = 8      # sublane multiple for the conv1 contraction dim


def _round_up(x, m):
    return ((x + m - 1) // m) * m


@functools.lru_cache(maxsize=None)
def _vmem_limit_bytes():
    # Per-generation scoped-VMEM budget: ~half of physical, capped at 64 MiB
    # (=> 32 MiB on v7x's 64 MiB VMEM, 64 MiB on v5e/v6e's 128 MiB).
    try:
        cap = int(pltpu.get_tpu_info().vmem_capacity_bytes)
        return max(16 * 1024 * 1024, min(cap // 2, 64 * 1024 * 1024))
    except Exception:
        return 32 * 1024 * 1024


def _compiler_params():
    return pltpu.CompilerParams(
        dimension_semantics=("parallel",),
        vmem_limit_bytes=_vmem_limit_bytes(),
    )


# --------------------------------------------------------------------------------------------
# In-register helpers (no HBM mask input, no per-step batch reduction).
# --------------------------------------------------------------------------------------------
def _valid_row_mask(l_acc, lanes, Wp):
    """Lane-dense bool mask of flat rows that correspond to a real (h, w) output (w < Wp).

    Uses an exact f32 floor-division trick (col = r - ws*floor((r+0.5)/ws)) so no integer
    div/mod is needed on the VPU.
    """
    ws = Wp + 2
    r = jax.lax.broadcasted_iota(jnp.int32, (l_acc, lanes), 0).astype(jnp.float32)
    h = jnp.floor((r + 0.5) * (1.0 / float(ws)))
    col = r - h * float(ws)
    return col < float(Wp)


def _masked_stats(acc, Wp):
    """Per-image [sum(z); sum(z^2)] over valid rows, from the f32 accumulator (single store)."""
    l_acc, lanes = acc.shape
    zm = jnp.where(_valid_row_mask(l_acc, lanes, Wp), acc, 0.0)
    return jnp.concatenate(
        [jnp.sum(zm, axis=0, keepdims=True),
         jnp.sum(zm * acc, axis=0, keepdims=True)], axis=0)          # (2, lanes)


def _bn_scale_shift(s_ref, gb_ref, inv_m):
    """Finish batch-stat BN: per-channel scale/shift from reduced [sum, sum^2] and [gamma, beta]."""
    mean = s_ref[0:1, :] * inv_m
    var = jnp.maximum(s_ref[1:2, :] * inv_m - mean * mean, 0.0)
    scale = gb_ref[0:1, :] * jax.lax.rsqrt(var + BN_EPS)
    shift = gb_ref[1:2, :] - mean * scale
    return scale, shift


# --------------------------------------------------------------------------------------------
# Pass 1: conv1 as 9 shifted GEMM taps (MXU, bf16 in / f32 acc) + per-image BN1 partial stats.
# --------------------------------------------------------------------------------------------
def _make_conv1_kernel(Wp, l_acc, cmid_p):
    w_stride = Wp + 2

    def kernel(x_ref, w_ref, z_ref, st_ref):
        # x_ref : (1, r_pad, cin_p) bf16  zero-padded flat activation (rows = (h_pad, w_pad))
        # w_ref : (9, cin_p, cmid_p) bf16 tap-major GEMM weights (tap = dy*3+dx)
        # z_ref : (1, l_acc, cmid_p) bf16 pre-BN conv1 output
        # st_ref: (1, 2, cmid_p)    f32   per-image [sum(z), sum(z^2)] over valid rows
        acc = jnp.zeros((l_acc, cmid_p), jnp.float32)
        for t in range(9):
            dy, dx = divmod(t, 3)
            patch = x_ref[0, pl.ds(dy * w_stride + dx, l_acc), :]     # (l_acc, cin_p) bf16
            acc = acc + jnp.dot(patch, w_ref[t], preferred_element_type=jnp.float32)
        z_ref[0] = acc.astype(z_ref.dtype)
        st_ref[0] = _masked_stats(acc, Wp)

    return kernel


# --------------------------------------------------------------------------------------------
# Pass 2 (fused): finish BN1 + LeakyReLU into a VMEM-only padded bf16 buffer, then conv2 as
#                 paired GEMM taps (K = 2*cmid_p) + per-image BN2 partial stats.
# --------------------------------------------------------------------------------------------
def _make_bn1_conv2_kernel(Wp, l_acc, r_pad, cmid_p, cout_p, inv_m):
    w_stride = Wp + 2
    head = Wp + 3                      # uncovered pad rows before the activation block
    tail = r_pad - head - l_acc        # uncovered pad rows after it (incl. 2 extra rows)

    def kernel(z1_ref, s1_ref, gb1_ref, w2_ref, z2_ref, st2_ref, pad_ref):
        # z1_ref : (1, l_acc, cmid_p)     bf16
        # s1_ref : (2, cmid_p)            f32   batch-reduced conv1 [sum, sum^2]
        # gb1_ref: (2, cmid_p)            f32   [gamma1; beta1]
        # w2_ref : (5, 2*cmid_p, cout_p)  bf16  tap-pair GEMM weights (last pair half is zero)
        # z2_ref : (1, l_acc, cout_p)     bf16  pre-BN conv2 output
        # st2_ref: (1, 2, cout_p)         f32
        # pad_ref: (r_pad, cmid_p)        bf16  VMEM scratch: padded flat conv2 input (no HBM)
        scale, shift = _bn_scale_shift(s1_ref, gb1_ref, inv_m)
        y = z1_ref[0].astype(jnp.float32) * scale + shift
        y = jnp.where(y > 0, y, LRELU_SLOPE * y)
        y = jnp.where(_valid_row_mask(l_acc, cmid_p, Wp), y, 0.0)

        # Only the uncovered head/tail pad rows need explicit zeros; the masked garbage rows of
        # `y` land exactly on the interior pad positions (valid (h,w) -> row q + Wp + 3).
        pad_ref[pl.ds(0, head), :] = jnp.zeros((head, cmid_p), pad_ref.dtype)
        pad_ref[pl.ds(head + l_acc, tail), :] = jnp.zeros((tail, cmid_p), pad_ref.dtype)
        pad_ref[pl.ds(head, l_acc), :] = y.astype(pad_ref.dtype)

        # conv2: 9 taps, paired along the contraction dim (lane-aligned concat of two 128-wide
        # slabs) so each MXU push sees K = 2*cmid_p; pure acc += dot(...) chain.
        acc = jnp.zeros((l_acc, cout_p), jnp.float32)
        for g in range(5):
            t0 = 2 * g
            t1 = min(t0 + 1, 8)        # pair 4 reuses tap 8; its weight half is zero
            o0 = (t0 // 3) * w_stride + (t0 % 3)
            o1 = (t1 // 3) * w_stride + (t1 % 3)
            lhs = jnp.concatenate(
                [pad_ref[pl.ds(o0, l_acc), :], pad_ref[pl.ds(o1, l_acc), :]], axis=-1)
            acc = acc + jnp.dot(lhs, w2_ref[g], preferred_element_type=jnp.float32)
        z2_ref[0] = acc.astype(z2_ref.dtype)
        st2_ref[0] = _masked_stats(acc, Wp)

    return kernel


# --------------------------------------------------------------------------------------------
# Pass 3: finish BN2 + LeakyReLU -> final activations (garbage rows are sliced off outside).
# --------------------------------------------------------------------------------------------
def _make_bn2_kernel(inv_m):
    def kernel(z_ref, s_ref, gb_ref, o_ref):
        scale, shift = _bn_scale_shift(s_ref, gb_ref, inv_m)
        y = z_ref[0].astype(jnp.float32) * scale + shift
        o_ref[0] = jnp.where(y > 0, y, LRELU_SLOPE * y).astype(o_ref.dtype)

    return kernel


# --------------------------------------------------------------------------------------------
# Down.forward : maxpool(2) -> DoubleConv.  Input/output NCHW like PyTorch.
# --------------------------------------------------------------------------------------------
def down_forward(x_nchw, packed, out_ch):
    N, cin, H, W = x_nchw.shape
    Hp, Wp = H // 2, W // 2
    cin_p = packed["w1"].shape[1]
    cmid_p = packed["w1"].shape[2]
    cout_p = packed["w2"].shape[2]
    w_stride = Wp + 2
    l_acc = Hp * w_stride
    r_pad = (Hp + 2) * w_stride + 2
    inv_m = 1.0 / float(N * Hp * Wp)
    cparams = _compiler_params()

    # --- XLA glue: NCHW->NHWC, 2x2 max pool, 1px zero-pad, flatten to (rows, C), cast bf16.
    # TODO(synk): fuse this prep into pass 1's input stage with strided in-kernel loads.
    x = jnp.transpose(x_nchw, (0, 2, 3, 1))
    x = x.reshape(N, Hp, 2, Wp, 2, cin).max(axis=(2, 4))               # (N, Hp, Wp, Cin)
    x = jnp.pad(x, ((0, 0), (1, 1), (1, 1), (0, 0)))                   # (N, Hp+2, Wp+2, Cin)
    x = x.reshape(N, (Hp + 2) * w_stride, cin)
    x = jnp.pad(x, ((0, 0), (0, 2), (0, cin_p - cin)))                 # 2 tail rows + chan pad
    x = x.astype(jnp.bfloat16)                                         # (N, r_pad, cin_p)

    # --- Pass 1: conv1 + per-image BN1 partial stats.
    z1, st1 = pl.pallas_call(
        _make_conv1_kernel(Wp, l_acc, cmid_p),
        grid=(N,),
        in_specs=[
            pl.BlockSpec((1, r_pad, cin_p), lambda i: (i, 0, 0)),
            pl.BlockSpec((9, cin_p, cmid_p), lambda i: (0, 0, 0)),
        ],
        out_specs=(
            pl.BlockSpec((1, l_acc, cmid_p), lambda i: (i, 0, 0)),
            pl.BlockSpec((1, 2, cmid_p), lambda i: (i, 0, 0)),
        ),
        out_shape=(
            jax.ShapeDtypeStruct((N, l_acc, cmid_p), jnp.bfloat16),
            jax.ShapeDtypeStruct((N, 2, cmid_p), jnp.float32),
        ),
        compiler_params=cparams,
    )(x, packed["w1"])

    s1 = jnp.sum(st1, axis=0)          # (2, cmid_p): tiny XLA reduce, done once (not per step)

    # --- Pass 2 (fused): BN1 apply + LeakyReLU -> VMEM padded buffer -> conv2 + BN2 stats.
    z2, st2 = pl.pallas_call(
        _make_bn1_conv2_kernel(Wp, l_acc, r_pad, cmid_p, cout_p, inv_m),
        grid=(N,),
        in_specs=[
            pl.BlockSpec((1, l_acc, cmid_p), lambda i: (i, 0, 0)),
            pl.BlockSpec((2, cmid_p), lambda i: (0, 0)),
            pl.BlockSpec((2, cmid_p), lambda i: (0, 0)),
            pl.BlockSpec((5, 2 * cmid_p, cout_p), lambda i: (0, 0, 0)),
        ],
        out_specs=(
            pl.BlockSpec((1, l_acc, cout_p), lambda i: (i, 0, 0)),
            pl.BlockSpec((1, 2, cout_p), lambda i: (i, 0, 0)),
        ),
        out_shape=(
            jax.ShapeDtypeStruct((N, l_acc, cout_p), jnp.bfloat16),
            jax.ShapeDtypeStruct((N, 2, cout_p), jnp.float32),
        ),
        scratch_shapes=[pltpu.VMEM((r_pad, cmid_p), jnp.bfloat16)],
        compiler_params=cparams,
    )(z1, s1, packed["gb1"], packed["w2"])

    s2 = jnp.sum(st2, axis=0)          # (2, cout_p)

    # --- Pass 3: BN2 apply + LeakyReLU.
    y2 = pl.pallas_call(
        _make_bn2_kernel(inv_m),
        grid=(N,),
        in_specs=[
            pl.BlockSpec((1, l_acc, cout_p), lambda i: (i, 0, 0)),
            pl.BlockSpec((2, cout_p), lambda i: (0, 0)),
            pl.BlockSpec((2, cout_p), lambda i: (0, 0)),
        ],
        out_specs=pl.BlockSpec((1, l_acc, cout_p), lambda i: (i, 0, 0)),
        out_shape=jax.ShapeDtypeStruct((N, l_acc, cout_p), jnp.float32),
        compiler_params=cparams,
    )(z2, s2, packed["gb2"])

    y = y2.reshape(N, Hp, w_stride, cout_p)[:, :, :Wp, :out_ch]        # drop garbage cols / lanes
    return jnp.transpose(y, (0, 3, 1, 2))                              # NHWC -> NCHW


# --------------------------------------------------------------------------------------------
# Parameters (deterministic) + GEMM-layout packing (done once, outside the jitted forward).
# --------------------------------------------------------------------------------------------
def init_params(key, in_ch, out_ch):
    mid = out_ch  # DoubleConv default: mid_channels = out_channels
    k1, k2, k3, k4, k5, k6 = jax.random.split(key, 6)

    def conv_init(k, cout, cin):
        fan_in = cin * 9
        bound = 1.0 / jnp.sqrt(jnp.float32(fan_in))
        kw, kb = jax.random.split(k)
        w = jax.random.uniform(kw, (cout, cin, 3, 3), jnp.float32, -bound, bound)
        b = jax.random.uniform(kb, (cout,), jnp.float32, -bound, bound)
        return w, b

    w1, b1 = conv_init(k1, mid, in_ch)
    w2, b2 = conv_init(k2, out_ch, mid)
    g1 = 1.0 + 0.1 * jax.random.normal(k3, (mid,), jnp.float32)
    beta1 = 0.1 * jax.random.normal(k4, (mid,), jnp.float32)
    g2 = 1.0 + 0.1 * jax.random.normal(k5, (out_ch,), jnp.float32)
    beta2 = 0.1 * jax.random.normal(k6, (out_ch,), jnp.float32)
    return dict(w1=w1, b1=b1, g1=g1, beta1=beta1, w2=w2, b2=b2, g2=g2, beta2=beta2)


def pack_params(params, in_ch, out_ch):
    mid = out_ch
    cin_p = _round_up(in_ch, SUB)
    cmid_p = _round_up(mid, LANE)
    cout_p = _round_up(out_ch, LANE)

    def tap_major(w, k_pad, n_pad):
        cout, cin = w.shape[0], w.shape[1]
        wm = jnp.transpose(w, (2, 3, 1, 0)).reshape(9, cin, cout)       # (tap, cin, cout)
        return jnp.pad(wm, ((0, 0), (0, k_pad - cin), (0, n_pad - cout)))

    def pack_gb(g, b, n_pad):
        gb = jnp.stack([g, b], axis=0)
        return jnp.pad(gb, ((0, 0), (0, n_pad - g.shape[0]))).astype(jnp.float32)

    w1 = tap_major(params["w1"], cin_p, cmid_p).astype(jnp.bfloat16)    # (9, cin_p, cmid_p)

    # conv2 weights packed as tap PAIRS along the contraction dim (K = 2*cmid_p); the last
    # group's second half is zero so the kernel can reuse tap 8's patch there.
    wt2 = tap_major(params["w2"], cmid_p, cout_p)                       # (9, cmid_p, cout_p)
    zeros = jnp.zeros_like(wt2[0])
    pairs = [jnp.concatenate([wt2[2 * g], wt2[2 * g + 1] if 2 * g + 1 < 9 else zeros], axis=0)
             for g in range(5)]
    w2 = jnp.stack(pairs, axis=0).astype(jnp.bfloat16)                  # (5, 2*cmid_p, cout_p)

    # NOTE: conv biases b1/b2 are intentionally dropped -- exactly cancelled by the BN mean.
    return dict(
        w1=w1,
        gb1=pack_gb(params["g1"], params["beta1"], cmid_p),
        w2=w2,
        gb2=pack_gb(params["g2"], params["beta2"], cout_p),
    )


# --------------------------------------------------------------------------------------------
# Plain-JAX f32 reference (keeps the conv bias; matches because BN cancels it).
# --------------------------------------------------------------------------------------------
def _ref_conv_bn_lrelu(x_nhwc, w_oihw, b, gamma, beta):
    z = jax.lax.conv_general_dilated(
        x_nhwc, w_oihw, window_strides=(1, 1), padding="SAME",
        dimension_numbers=("NHWC", "OIHW", "NHWC"),
        precision=jax.lax.Precision.HIGHEST)
    z = z + b[None, None, None, :]
    mean = z.mean(axis=(0, 1, 2), keepdims=True)
    var = ((z - mean) ** 2).mean(axis=(0, 1, 2), keepdims=True)
    y = (z - mean) / jnp.sqrt(var + BN_EPS) * gamma[None, None, None, :] + beta[None, None, None, :]
    return jnp.where(y > 0, y, LRELU_SLOPE * y)


def ref_forward(x_nchw, params):
    x = jnp.transpose(x_nchw, (0, 2, 3, 1))
    N, H, W, C = x.shape
    x = x.reshape(N, H // 2, 2, W // 2, 2, C).max(axis=(2, 4))
    x = _ref_conv_bn_lrelu(x, params["w1"], params["b1"], params["g1"], params["beta1"])
    x = _ref_conv_bn_lrelu(x, params["w2"], params["b2"], params["g2"], params["beta2"])
    return jnp.transpose(x, (0, 3, 1, 2))


# --------------------------------------------------------------------------------------------
if __name__ == "__main__":
    key = jax.random.PRNGKey(0)
    kx, kp = jax.random.split(key)
    in_ch, out_ch = 4, 8
    x = jax.random.normal(kx, (2, in_ch, 16, 16), jnp.float32)          # NCHW, like PyTorch
    params = init_params(kp, in_ch, out_ch)
    packed = pack_params(params, in_ch, out_ch)                         # hoisted GEMM-layout weights

    fwd = jax.jit(lambda xx, pp: down_forward(xx, pp, out_ch))
    y = jax.block_until_ready(fwd(x, packed))

    assert y.shape == (2, out_ch, 8, 8), y.shape
    y_ref = ref_forward(x, params)
    max_err = float(jnp.max(jnp.abs(y - y_ref)))
    mean_err = float(jnp.mean(jnp.abs(y - y_ref)))
    # Tolerances sized for bf16 MXU inputs and bf16 z1/z2/inter-conv storage vs the f32 reference.
    assert max_err < 1.0e-1, (max_err, mean_err)
    assert mean_err < 2.5e-2, (max_err, mean_err)
    print("KERNEL_OK")
</pallas_src>

<mosaic_0001>
module attributes {stable_mosaic.version = 11 : i64} {
  func.func @kernel(%arg0: i32, %arg1: memref<1x80x128xbf16, #tpu.memory_space<vmem>>, %arg2: memref<2x128xf32, #tpu.memory_space<vmem>>, %arg3: memref<2x128xf32, #tpu.memory_space<vmem>>, %arg4: memref<5x256x128xbf16, #tpu.memory_space<vmem>>, %arg5: memref<1x80x128xbf16, #tpu.memory_space<vmem>>, %arg6: memref<1x2x128xf32, #tpu.memory_space<vmem>>, %arg7: memref<102x128xbf16, #tpu.memory_space<vmem>>) attributes {dimension_semantics = [#tpu.dimension_semantics<parallel>], iteration_bounds = array<i64: 2>, scalar_prefetch = 0 : i64, scratch_operands = 1 : i64, tpu.core_type = #tpu.core_type<tc>, window_params = [{transform_indices = @transform_0, window_bounds = array<i64: 1, 80, 128>}, {pipeline_mode = #tpu.pipeline_mode<synchronous>, transform_indices = @transform_1, window_bounds = array<i64: 2, 128>}, {pipeline_mode = #tpu.pipeline_mode<synchronous>, transform_indices = @transform_2, window_bounds = array<i64: 2, 128>}, {pipeline_mode = #tpu.pipeline_mode<synchronous>, transform_indices = @transform_3, window_bounds = array<i64: 5, 256, 128>}, {transform_indices = @transform_4, window_bounds = array<i64: 1, 80, 128>}, {transform_indices = @transform_5, window_bounds = array<i64: 1, 2, 128>}]} {
    %c0 = arith.constant 0 : index
    %c0_0 = arith.constant 0 : index
    %0 = vector.load %arg2[%c0, %c0_0] : memref<2x128xf32, #tpu.memory_space<vmem>>, vector<1x128xf32>
    %cst = arith.constant 7.812500e-03 : f32
    %1 = vector.broadcast %cst : f32 to vector<1x128xf32>
    %2 = arith.mulf %0, %1 : vector<1x128xf32>
    %c1 = arith.constant 1 : index
    %c0_1 = arith.constant 0 : index
    %3 = vector.load %arg2[%c1, %c0_1] : memref<2x128xf32, #tpu.memory_space<vmem>>, vector<1x128xf32>
    %cst_2 = arith.constant 7.812500e-03 : f32
    %4 = vector.broadcast %cst_2 : f32 to vector<1x128xf32>
    %5 = arith.mulf %3, %4 : vector<1x128xf32>
    %6 = arith.mulf %2, %2 : vector<1x128xf32>
    %7 = arith.subf %5, %6 : vector<1x128xf32>
    %cst_3 = arith.constant 0.000000e+00 : f32
    %8 = vector.broadcast %cst_3 : f32 to vector<1x128xf32>
    %9 = arith.maximumf %7, %8 : vector<1x128xf32>
    %c0_4 = arith.constant 0 : index
    %c0_5 = arith.constant 0 : index
    %10 = vector.load %arg3[%c0_4, %c0_5] : memref<2x128xf32, #tpu.memory_space<vmem>>, vector<1x128xf32>
    %cst_6 = arith.constant 9.99999974E-6 : f32
    %11 = vector.broadcast %cst_6 : f32 to vector<1x128xf32>
    %12 = arith.addf %9, %11 : vector<1x128xf32>
    %13 = math.rsqrt %12 : vector<1x128xf32>
    %14 = arith.mulf %10, %13 : vector<1x128xf32>
    %c1_7 = arith.constant 1 : index
    %c0_8 = arith.constant 0 : index
    %15 = vector.load %arg3[%c1_7, %c0_8] : memref<2x128xf32, #tpu.memory_space<vmem>>, vector<1x128xf32>
    %16 = arith.mulf %2, %14 : vector<1x128xf32>
    %17 = arith.subf %15, %16 : vector<1x128xf32>
    %c0_9 = arith.constant 0 : index
    %c0_10 = arith.constant 0 : index
    %c0_11 = arith.constant 0 : index
    %18 = vector.load %arg1[%c0_9, %c0_10, %c0_11] : memref<1x80x128xbf16, #tpu.memory_space<vmem>>, vector<1x80x128xbf16>
    %19 = vector.shape_cast %18 : vector<1x80x128xbf16> to vector<80x128xbf16>
    %20 = arith.extf %19 : vector<80x128xbf16> to vector<80x128xf32>
    %21 = vector.broadcast %14 : vector<1x128xf32> to vector<80x128xf32>
    %22 = arith.mulf %20, %21 : vector<80x128xf32>
    %23 = vector.broadcast %17 : vector<1x128xf32> to vector<80x128xf32>
    %24 = arith.addf %22, %23 : vector<80x128xf32>
    %cst_12 = arith.constant 0.000000e+00 : f32
    %25 = vector.broadcast %cst_12 : f32 to vector<80x128xf32>
    %26 = arith.cmpf ogt, %24, %25 : vector<80x128xf32>
    %cst_13 = arith.constant 2.000000e-01 : f32
    %27 = vector.broadcast %cst_13 : f32 to vector<80x128xf32>
    %28 = arith.mulf %27, %24 : vector<80x128xf32>
    %29 = arith.select %26, %24, %28 : vector<80x128xi1>, vector<80x128xf32>
    %30 = tpu.iota {dimensions = array<i32: 0>} : vector<80x128xi32>
    %31 = arith.sitofp %30 : vector<80x128xi32> to vector<80x128xf32>
    %cst_14 = arith.constant 5.000000e-01 : f32
    %32 = vector.broadcast %cst_14 : f32 to vector<80x128xf32>
    %33 = arith.addf %31, %32 : vector<80x128xf32>
    %cst_15 = arith.constant 1.000000e-01 : f32
    %34 = vector.broadcast %cst_15 : f32 to vector<80x128xf32>
    %35 = arith.mulf %33, %34 : vector<80x128xf32>
    %36 = math.floor %35 : vector<80x128xf32>
    %cst_16 = arith.constant 1.000000e+01 : f32
    %37 = vector.broadcast %cst_16 : f32 to vector<80x128xf32>
    %38 = arith.mulf %36, %37 : vector<80x128xf32>
    %39 = arith.subf %31, %38 : vector<80x128xf32>
    %cst_17 = arith.constant 8.000000e+00 : f32
    %40 = vector.broadcast %cst_17 : f32 to vector<80x128xf32>
    %41 = arith.cmpf olt, %39, %40 : vector<80x128xf32>
    %cst_18 = arith.constant 0.000000e+00 : f32
    %42 = vector.broadcast %cst_18 : f32 to vector<80x128xf32>
    %43 = arith.select %41, %29, %42 : vector<80x128xi1>, vector<80x128xf32>
    %cst_19 = arith.constant 0.000000e+00 : bf16
    %44 = vector.broadcast %cst_19 : bf16 to vector<11x128xbf16>
    %c0_20 = arith.constant 0 : index
    %c0_21 = arith.constant 0 : index
    %45 = vector.load %arg7[%c0_20, %c0_21] : memref<102x128xbf16, #tpu.memory_space<vmem>>, vector<11x128xbf16>
    tpu.vector_store %arg7[%c0_20, %c0_21], %44 {strides = array<i32>} : memref<102x128xbf16, #tpu.memory_space<vmem>>, vector<11x128xbf16>,
    %cst_22 = arith.constant 0.000000e+00 : bf16
    %46 = vector.broadcast %cst_22 : bf16 to vector<11x128xbf16>
    %c91 = arith.constant 91 : index
    %c0_23 = arith.constant 0 : index
    %47 = vector.load %arg7[%c91, %c0_23] : memref<102x128xbf16, #tpu.memory_space<vmem>>, vector<11x128xbf16>
    tpu.vector_store %arg7[%c91, %c0_23], %46 {strides = array<i32>} : memref<102x128xbf16, #tpu.memory_space<vmem>>, vector<11x128xbf16>,
    %48 = arith.truncf %43 : vector<80x128xf32> to vector<80x128xbf16>
    %c11 = arith.constant 11 : index
    %c0_24 = arith.constant 0 : index
    %49 = vector.load %arg7[%c11, %c0_24] : memref<102x128xbf16, #tpu.memory_space<vmem>>, vector<80x128xbf16>
    tpu.vector_store %arg7[%c11, %c0_24], %48 {strides = array<i32>} : memref<102x128xbf16, #tpu.memory_space<vmem>>, vector<80x128xbf16>,
    %cst_25 = arith.constant 0.000000e+00 : f32
    %50 = vector.broadcast %cst_25 : f32 to vector<80x128xf32>
    %c0_26 = arith.constant 0 : index
    %c0_27 = arith.constant 0 : index
    %51 = vector.load %arg7[%c0_26, %c0_27] : memref<102x128xbf16, #tpu.memory_space<vmem>>, vector<80x128xbf16>
    %c1_28 = arith.constant 1 : index
    %c0_29 = arith.constant 0 : index
    %52 = vector.load %arg7[%c1_28, %c0_29] : memref<102x128xbf16, #tpu.memory_space<vmem>>, vector<80x128xbf16>
    %53 = tpu.concatenate %51, %52 in 1 : vector<80x128xbf16>, vector<80x128xbf16> -> vector<80x256xbf16>
    %c0_30 = arith.constant 0 : index
    %c0_31 = arith.constant 0 : index
    %c0_32 = arith.constant 0 : index
    %54 = vector.load %arg4[%c0_30, %c0_31, %c0_32] : memref<5x256x128xbf16, #tpu.memory_space<vmem>>, vector<1x256x128xbf16>
    %55 = vector.shape_cast %54 : vector<1x256x128xbf16> to vector<256x128xbf16>
    %cst_33 = arith.constant dense<0.000000e+00> : vector<80x128xf32>
    %56 = tpu.matmul %53, %55, %cst_33 {dimension_numbers = #tpu.dot_dimension_numbers<[1], [0], [0], [1], [0, 0, 1, 1], [], []>} : vector<80x256xbf16>, vector<256x128xbf16>, vector<80x128xf32> -> vector<80x128xf32>
    %57 = arith.addf %50, %56 : vector<80x128xf32>
    %c2 = arith.constant 2 : index
    %c0_34 = arith.constant 0 : index
    %58 = vector.load %arg7[%c2, %c0_34] : memref<102x128xbf16, #tpu.memory_space<vmem>>, vector<80x128xbf16>
    %c10 = arith.constant 10 : index
    %c0_35 = arith.constant 0 : index
    %59 = vector.load %arg7[%c10, %c0_35] : memref<102x128xbf16, #tpu.memory_space<vmem>>, vector<80x128xbf16>
    %60 = tpu.concatenate %58, %59 in 1 : vector<80x128xbf16>, vector<80x128xbf16> -> vector<80x256xbf16>
    %c1_36 = arith.constant 1 : index
    %c0_37 = arith.constant 0 : index
    %c0_38 = arith.constant 0 : index
    %61 = vector.load %arg4[%c1_36, %c0_37, %c0_38] : memref<5x256x128xbf16, #tpu.memory_space<vmem>>, vector<1x256x128xbf16>
    %62 = vector.shape_cast %61 : vector<1x256x128xbf16> to vector<256x128xbf16>
    %cst_39 = arith.constant dense<0.000000e+00> : vector<80x128xf32>
    %63 = tpu.matmul %60, %62, %cst_39 {dimension_numbers = #tpu.dot_dimension_numbers<[1], [0], [0], [1], [0, 0, 1, 1], [], []>} : vector<80x256xbf16>, vector<256x128xbf16>, vector<80x128xf32> -> vector<80x128xf32>
    %64 = arith.addf %57, %63 : vector<80x128xf32>
    %c11_40 = arith.constant 11 : index
    %c0_41 = arith.constant 0 : index
    %65 = vector.load %arg7[%c11_40, %c0_41] : memref<102x128xbf16, #tpu.memory_space<vmem>>, vector<80x128xbf16>
    %c12 = arith.constant 12 : index
    %c0_42 = arith.constant 0 : index
    %66 = vector.load %arg7[%c12, %c0_42] : memref<102x128xbf16, #tpu.memory_space<vmem>>, vector<80x128xbf16>
    %67 = tpu.concatenate %65, %66 in 1 : vector<80x128xbf16>, vector<80x128xbf16> -> vector<80x256xbf16>
    %c2_43 = arith.constant 2 : index
    %c0_44 = arith.constant 0 : index
    %c0_45 = arith.constant 0 : index
    %68 = vector.load %arg4[%c2_43, %c0_44, %c0_45] : memref<5x256x128xbf16, #tpu.memory_space<vmem>>, vector<1x256x128xbf16>
    %69 = vector.shape_cast %68 : vector<1x256x128xbf16> to vector<256x128xbf16>
    %cst_46 = arith.constant dense<0.000000e+00> : vector<80x128xf32>
    %70 = tpu.matmul %67, %69, %cst_46 {dimension_numbers = #tpu.dot_dimension_numbers<[1], [0], [0], [1], [0, 0, 1, 1], [], []>} : vector<80x256xbf16>, vector<256x128xbf16>, vector<80x128xf32> -> vector<80x128xf32>
    %71 = arith.addf %64, %70 : vector<80x128xf32>
    %c20 = arith.constant 20 : index
    %c0_47 = arith.constant 0 : index
    %72 = vector.load %arg7[%c20, %c0_47] : memref<102x128xbf16, #tpu.memory_space<vmem>>, vector<80x128xbf16>
    %c21 = arith.constant 21 : index
    %c0_48 = arith.constant 0 : index
    %73 = vector.load %arg7[%c21, %c0_48] : memref<102x128xbf16, #tpu.memory_space<vmem>>, vector<80x128xbf16>
    %74 = tpu.concatenate %72, %73 in 1 : vector<80x128xbf16>, vector<80x128xbf16> -> vector<80x256xbf16>
    %c3 = arith.constant 3 : index
    %c0_49 = arith.constant 0 : index
    %c0_50 = arith.constant 0 : index
    %75 = vector.load %arg4[%c3, %c0_49, %c0_50] : memref<5x256x128xbf16, #tpu.memory_space<vmem>>, vector<1x256x128xbf16>
    %76 = vector.shape_cast %75 : vector<1x256x128xbf16> to vector<256x128xbf16>
    %cst_51 = arith.constant dense<0.000000e+00> : vector<80x128xf32>
    %77 = tpu.matmul %74, %76, %cst_51 {dimension_numbers = #tpu.dot_dimension_numbers<[1], [0], [0], [1], [0, 0, 1, 1], [], []>} : vector<80x256xbf16>, vector<256x128xbf16>, vector<80x128xf32> -> vector<80x128xf32>
    %78 = arith.addf %71, %77 : vector<80x128xf32>
    %c22 = arith.constant 22 : index
    %c0_52 = arith.constant 0 : index
    %79 = vector.load %arg7[%c22, %c0_52] : memref<102x128xbf16, #tpu.memory_space<vmem>>, vector<80x128xbf16>
    %c22_53 = arith.constant 22 : index
    %c0_54 = arith.constant 0 : index
    %80 = vector.load %arg7[%c22_53, %c0_54] : memref<102x128xbf16, #tpu.memory_space<vmem>>, vector<80x128xbf16>
    %81 = tpu.concatenate %79, %80 in 1 : vector<80x128xbf16>, vector<80x128xbf16> -> vector<80x256xbf16>
    %c4 = arith.constant 4 : index
    %c0_55 = arith.constant 0 : index
    %c0_56 = arith.constant 0 : index
    %82 = vector.load %arg4[%c4, %c0_55, %c0_56] : memref<5x256x128xbf16, #tpu.memory_space<vmem>>, vector<1x256x128xbf16>
    %83 = vector.shape_cast %82 : vector<1x256x128xbf16> to vector<256x128xbf16>
    %cst_57 = arith.constant dense<0.000000e+00> : vector<80x128xf32>
    %84 = tpu.matmul %81, %83, %cst_57 {dimension_numbers = #tpu.dot_dimension_numbers<[1], [0], [0], [1], [0, 0, 1, 1], [], []>} : vector<80x256xbf16>, vector<256x128xbf16>, vector<80x128xf32> -> vector<80x128xf32>
    %85 = arith.addf %78, %84 : vector<80x128xf32>
    %86 = arith.truncf %85 : vector<80x128xf32> to vector<80x128xbf16>
    %c0_58 = arith.constant 0 : index
    %c0_59 = arith.constant 0 : index
    %c0_60 = arith.constant 0 : index
    %87 = vector.load %arg5[%c0_58, %c0_59, %c0_60] : memref<1x80x128xbf16, #tpu.memory_space<vmem>>, vector<1x80x128xbf16>
    %88 = vector.shape_cast %87 : vector<1x80x128xbf16> to vector<80x128xbf16>
    %89 = vector.shape_cast %86 : vector<80x128xbf16> to vector<1x80x128xbf16>
    tpu.vector_store %arg5[%c0_58, %c0_59, %c0_60], %89 {strides = array<i32>} : memref<1x80x128xbf16, #tpu.memory_space<vmem>>, vector<1x80x128xbf16>,
    %90 = tpu.iota {dimensions = array<i32: 0>} : vector<80x128xi32>
    %91 = arith.sitofp %90 : vector<80x128xi32> to vector<80x128xf32>
    %cst_61 = arith.constant 5.000000e-01 : f32
    %92 = vector.broadcast %cst_61 : f32 to vector<80x128xf32>
    %93 = arith.addf %91, %92 : vector<80x128xf32>
    %cst_62 = arith.constant 1.000000e-01 : f32
    %94 = vector.broadcast %cst_62 : f32 to vector<80x128xf32>
    %95 = arith.mulf %93, %94 : vector<80x128xf32>
    %96 = math.floor %95 : vector<80x128xf32>
    %cst_63 = arith.constant 1.000000e+01 : f32
    %97 = vector.broadcast %cst_63 : f32 to vector<80x128xf32>
    %98 = arith.mulf %96, %97 : vector<80x128xf32>
    %99 = arith.subf %91, %98 : vector<80x128xf32>
    %cst_64 = arith.constant 8.000000e+00 : f32
    %100 = vector.broadcast %cst_64 : f32 to vector<80x128xf32>
    %101 = arith.cmpf olt, %99, %100 : vector<80x128xf32>
    %cst_65 = arith.constant 0.000000e+00 : f32
    %102 = vector.broadcast %cst_65 : f32 to vector<80x128xf32>
    %103 = arith.select %101, %85, %102 : vector<80x128xi1>, vector<80x128xf32>
    %cst_66 = arith.constant dense<0.000000e+00> : vector<128xf32>
    %104 = vector.multi_reduction <add>, %103, %cst_66 [0] : vector<80x128xf32> to vector<128xf32>
    %105 = vector.shape_cast %104 : vector<128xf32> to vector<1x128xf32>
    %106 = arith.mulf %103, %85 : vector<80x128xf32>
    %cst_67 = arith.constant dense<0.000000e+00> : vector<128xf32>
    %107 = vector.multi_reduction <add>, %106, %cst_67 [0] : vector<80x128xf32> to vector<128xf32>
    %108 = vector.shape_cast %107 : vector<128xf32> to vector<1x128xf32>
    %109 = tpu.concatenate %105, %108 in 0 : vector<1x128xf32>, vector<1x128xf32> -> vector<2x128xf32>
    %c0_68 = arith.constant 0 : index
    %c0_69 = arith.constant 0 : index
    %c0_70 = arith.constant 0 : index
    %110 = vector.load %arg6[%c0_68, %c0_69, %c0_70] : memref<1x2x128xf32, #tpu.memory_space<vmem>>, vector<1x2x128xf32>
    %111 = vector.shape_cast %110 : vector<1x2x128xf32> to vector<2x128xf32>
    %112 = vector.shape_cast %109 : vector<2x128xf32> to vector<1x2x128xf32>
    tpu.vector_store %arg6[%c0_68, %c0_69, %c0_70], %112 {strides = array<i32>} : memref<1x2x128xf32, #tpu.memory_space<vmem>>, vector<1x2x128xf32>,
    return
  }
  func.func @transform_0(%arg0: i32) -> (i32, i32, i32) {
    %c0_i32 = arith.constant 0 : i32
    %c0_i32_0 = arith.constant 0 : i32
    %c0_i32_1 = arith.constant 0 : i32
    return %arg0, %c0_i32, %c0_i32_0 : i32, i32, i32
  }
  func.func @transform_1(%arg0: i32) -> (i32, i32) {
    %c0_i32 = arith.constant 0 : i32
    %c0_i32_0 = arith.constant 0 : i32
    %c0_i32_1 = arith.constant 0 : i32
    return %c0_i32, %c0_i32_0 : i32, i32
  }
  func.func @transform_2(%arg0: i32) -> (i32, i32) {
    %c0_i32 = arith.constant 0 : i32
    %c0_i32_0 = arith.constant 0 : i32
    %c0_i32_1 = arith.constant 0 : i32
    return %c0_i32, %c0_i32_0 : i32, i32
  }
  func.func @transform_3(%arg0: i32) -> (i32, i32, i32) {
    %c0_i32 = arith.constant 0 : i32
    %c0_i32_0 = arith.constant 0 : i32
    %c0_i32_1 = arith.constant 0 : i32
    %c0_i32_2 = arith.constant 0 : i32
    return %c0_i32, %c0_i32_0, %c0_i32_1 : i32, i32, i32
  }
  func.func @transform_4(%arg0: i32) -> (i32, i32, i32) {
    %c0_i32 = arith.constant 0 : i32
    %c0_i32_0 = arith.constant 0 : i32
    %c0_i32_1 = arith.constant 0 : i32
    return %arg0, %c0_i32, %c0_i32_0 : i32, i32, i32
  }
  func.func @transform_5(%arg0: i32) -> (i32, i32, i32) {
    %c0_i32 = arith.constant 0 : i32
    %c0_i32_0 = arith.constant 0 : i32
    %c0_i32_1 = arith.constant 0 : i32
    return %arg0, %c0_i32, %c0_i32_0 : i32, i32, i32
  }
}

module attributes {stable_mosaic.version = 11 : i64} {
  func.func @kernel(%arg0: i32, %arg1: memref<1x102x8xbf16, #tpu.memory_space<vmem>>, %arg2: memref<9x8x128xbf16, #tpu.memory_space<vmem>>, %arg3: memref<1x80x128xbf16, #tpu.memory_space<vmem>>, %arg4: memref<1x2x128xf32, #tpu.memory_space<vmem>>) attributes {dimension_semantics = [#tpu.dimension_semantics<parallel>], iteration_bounds = array<i64: 2>, scalar_prefetch = 0 : i64, scratch_operands = 0 : i64, tpu.core_type = #tpu.core_type<tc>, window_params = [{transform_indices = @transform_0, window_bounds = array<i64: 1, 102, 8>}, {pipeline_mode = #tpu.pipeline_mode<synchronous>, transform_indices = @transform_1, window_bounds = array<i64: 9, 8, 128>}, {transform_indices = @transform_2, window_bounds = array<i64: 1, 80, 128>}, {transform_indices = @transform_3, window_bounds = array<i64: 1, 2, 128>}]} {
    %cst = arith.constant 0.000000e+00 : f32
    %0 = vector.broadcast %cst : f32 to vector<80x128xf32>
    %c0 = arith.constant 0 : index
    %c0_0 = arith.constant 0 : index
    %c0_1 = arith.constant 0 : index
    %1 = vector.load %arg1[%c0, %c0_0, %c0_1] : memref<1x102x8xbf16, #tpu.memory_space<vmem>>, vector<1x80x8xbf16>
    %2 = vector.shape_cast %1 : vector<1x80x8xbf16> to vector<80x8xbf16>
    %c0_2 = arith.constant 0 : index
    %c0_3 = arith.constant 0 : index
    %c0_4 = arith.constant 0 : index
    %3 = vector.load %arg2[%c0_2, %c0_3, %c0_4] : memref<9x8x128xbf16, #tpu.memory_space<vmem>>, vector<1x8x128xbf16>
    %4 = vector.shape_cast %3 : vector<1x8x128xbf16> to vector<8x128xbf16>
    %cst_5 = arith.constant dense<0.000000e+00> : vector<80x128xf32>
    %5 = tpu.matmul %2, %4, %cst_5 {dimension_numbers = #tpu.dot_dimension_numbers<[1], [0], [0], [1], [0, 0, 1, 1], [], []>} : vector<80x8xbf16>, vector<8x128xbf16>, vector<80x128xf32> -> vector<80x128xf32>
    %6 = arith.addf %0, %5 : vector<80x128xf32>
    %c0_6 = arith.constant 0 : index
    %c1 = arith.constant 1 : index
    %c0_7 = arith.constant 0 : index
    %7 = vector.load %arg1[%c0_6, %c1, %c0_7] : memref<1x102x8xbf16, #tpu.memory_space<vmem>>, vector<1x80x8xbf16>
    %8 = vector.shape_cast %7 : vector<1x80x8xbf16> to vector<80x8xbf16>
    %c1_8 = arith.constant 1 : index
    %c0_9 = arith.constant 0 : index
    %c0_10 = arith.constant 0 : index
    %9 = vector.load %arg2[%c1_8, %c0_9, %c0_10] : memref<9x8x128xbf16, #tpu.memory_space<vmem>>, vector<1x8x128xbf16>
    %10 = vector.shape_cast %9 : vector<1x8x128xbf16> to vector<8x128xbf16>
    %cst_11 = arith.constant dense<0.000000e+00> : vector<80x128xf32>
    %11 = tpu.matmul %8, %10, %cst_11 {dimension_numbers = #tpu.dot_dimension_numbers<[1], [0], [0], [1], [0, 0, 1, 1], [], []>} : vector<80x8xbf16>, vector<8x128xbf16>, vector<80x128xf32> -> vector<80x128xf32>
    %12 = arith.addf %6, %11 : vector<80x128xf32>
    %c0_12 = arith.constant 0 : index
    %c2 = arith.constant 2 : index
    %c0_13 = arith.constant 0 : index
    %13 = vector.load %arg1[%c0_12, %c2, %c0_13] : memref<1x102x8xbf16, #tpu.memory_space<vmem>>, vector<1x80x8xbf16>
    %14 = vector.shape_cast %13 : vector<1x80x8xbf16> to vector<80x8xbf16>
    %c2_14 = arith.constant 2 : index
    %c0_15 = arith.constant 0 : index
    %c0_16 = arith.constant 0 : index
    %15 = vector.load %arg2[%c2_14, %c0_15, %c0_16] : memref<9x8x128xbf16, #tpu.memory_space<vmem>>, vector<1x8x128xbf16>
    %16 = vector.shape_cast %15 : vector<1x8x128xbf16> to vector<8x128xbf16>
    %cst_17 = arith.constant dense<0.000000e+00> : vector<80x128xf32>
    %17 = tpu.matmul %14, %16, %cst_17 {dimension_numbers = #tpu.dot_dimension_numbers<[1], [0], [0], [1], [0, 0, 1, 1], [], []>} : vector<80x8xbf16>, vector<8x128xbf16>, vector<80x128xf32> -> vector<80x128xf32>
    %18 = arith.addf %12, %17 : vector<80x128xf32>
    %c0_18 = arith.constant 0 : index
    %c10 = arith.constant 10 : index
    %c0_19 = arith.constant 0 : index
    %19 = vector.load %arg1[%c0_18, %c10, %c0_19] : memref<1x102x8xbf16, #tpu.memory_space<vmem>>, vector<1x80x8xbf16>
    %20 = vector.shape_cast %19 : vector<1x80x8xbf16> to vector<80x8xbf16>
    %c3 = arith.constant 3 : index
    %c0_20 = arith.constant 0 : index
    %c0_21 = arith.constant 0 : index
    %21 = vector.load %arg2[%c3, %c0_20, %c0_21] : memref<9x8x128xbf16, #tpu.memory_space<vmem>>, vector<1x8x128xbf16>
    %22 = vector.shape_cast %21 : vector<1x8x128xbf16> to vector<8x128xbf16>
    %cst_22 = arith.constant dense<0.000000e+00> : vector<80x128xf32>
    %23 = tpu.matmul %20, %22, %cst_22 {dimension_numbers = #tpu.dot_dimension_numbers<[1], [0], [0], [1], [0, 0, 1, 1], [], []>} : vector<80x8xbf16>, vector<8x128xbf16>, vector<80x128xf32> -> vector<80x128xf32>
    %24 = arith.addf %18, %23 : vector<80x128xf32>
    %c0_23 = arith.constant 0 : index
    %c11 = arith.constant 11 : index
    %c0_24 = arith.constant 0 : index
    %25 = vector.load %arg1[%c0_23, %c11, %c0_24] : memref<1x102x8xbf16, #tpu.memory_space<vmem>>, vector<1x80x8xbf16>
    %26 = vector.shape_cast %25 : vector<1x80x8xbf16> to vector<80x8xbf16>
    %c4 = arith.constant 4 : index
    %c0_25 = arith.constant 0 : index
    %c0_26 = arith.constant 0 : index
    %27 = vector.load %arg2[%c4, %c0_25, %c0_26] : memref<9x8x128xbf16, #tpu.memory_space<vmem>>, vector<1x8x128xbf16>
    %28 = vector.shape_cast %27 : vector<1x8x128xbf16> to vector<8x128xbf16>
    %cst_27 = arith.constant dense<0.000000e+00> : vector<80x128xf32>
    %29 = tpu.matmul %26, %28, %cst_27 {dimension_numbers = #tpu.dot_dimension_numbers<[1], [0], [0], [1], [0, 0, 1, 1], [], []>} : vector<80x8xbf16>, vector<8x128xbf16>, vector<80x128xf32> -> vector<80x128xf32>
    %30 = arith.addf %24, %29 : vector<80x128xf32>
    %c0_28 = arith.constant 0 : index
    %c12 = arith.constant 12 : index
    %c0_29 = arith.constant 0 : index
    %31 = vector.load %arg1[%c0_28, %c12, %c0_29] : memref<1x102x8xbf16, #tpu.memory_space<vmem>>, vector<1x80x8xbf16>
    %32 = vector.shape_cast %31 : vector<1x80x8xbf16> to vector<80x8xbf16>
    %c5 = arith.constant 5 : index
    %c0_30 = arith.constant 0 : index
    %c0_31 = arith.constant 0 : index
    %33 = vector.load %arg2[%c5, %c0_30, %c0_31] : memref<9x8x128xbf16, #tpu.memory_space<vmem>>, vector<1x8x128xbf16>
    %34 = vector.shape_cast %33 : vector<1x8x128xbf16> to vector<8x128xbf16>
    %cst_32 = arith.constant dense<0.000000e+00> : vector<80x128xf32>
    %35 = tpu.matmul %32, %34, %cst_32 {dimension_numbers = #tpu.dot_dimension_numbers<[1], [0], [0], [1], [0, 0, 1, 1], [], []>} : vector<80x8xbf16>, vector<8x128xbf16>, vector<80x128xf32> -> vector<80x128xf32>
    %36 = arith.addf %30, %35 : vector<80x128xf32>
    %c0_33 = arith.constant 0 : index
    %c20 = arith.constant 20 : index
    %c0_34 = arith.constant 0 : index
    %37 = vector.load %arg1[%c0_33, %c20, %c0_34] : memref<1x102x8xbf16, #tpu.memory_space<vmem>>, vector<1x80x8xbf16>
    %38 = vector.shape_cast %37 : vector<1x80x8xbf16> to vector<80x8xbf16>
    %c6 = arith.constant 6 : index
    %c0_35 = arith.constant 0 : index
    %c0_36 = arith.constant 0 : index
    %39 = vector.load %arg2[%c6, %c0_35, %c0_36] : memref<9x8x128xbf16, #tpu.memory_space<vmem>>, vector<1x8x128xbf16>
    %40 = vector.shape_cast %39 : vector<1x8x128xbf16> to vector<8x128xbf16>
    %cst_37 = arith.constant dense<0.000000e+00> : vector<80x128xf32>
    %41 = tpu.matmul %38, %40, %cst_37 {dimension_numbers = #tpu.dot_dimension_numbers<[1], [0], [0], [1], [0, 0, 1, 1], [], []>} : vector<80x8xbf16>, vector<8x128xbf16>, vector<80x128xf32> -> vector<80x128xf32>
    %42 = arith.addf %36, %41 : vector<80x128xf32>
    %c0_38 = arith.constant 0 : index
    %c21 = arith.constant 21 : index
    %c0_39 = arith.constant 0 : index
    %43 = vector.load %arg1[%c0_38, %c21, %c0_39] : memref<1x102x8xbf16, #tpu.memory_space<vmem>>, vector<1x80x8xbf16>
    %44 = vector.shape_cast %43 : vector<1x80x8xbf16> to vector<80x8xbf16>
    %c7 = arith.constant 7 : index
    %c0_40 = arith.constant 0 : index
    %c0_41 = arith.constant 0 : index
    %45 = vector.load %arg2[%c7, %c0_40, %c0_41] : memref<9x8x128xbf16, #tpu.memory_space<vmem>>, vector<1x8x128xbf16>
    %46 = vector.shape_cast %45 : vector<1x8x128xbf16> to vector<8x128xbf16>
    %cst_42 = arith.constant dense<0.000000e+00> : vector<80x128xf32>
    %47 = tpu.matmul %44, %46, %cst_42 {dimension_numbers = #tpu.dot_dimension_numbers<[1], [0], [0], [1], [0, 0, 1, 1], [], []>} : vector<80x8xbf16>, vector<8x128xbf16>, vector<80x128xf32> -> vector<80x128xf32>
    %48 = arith.addf %42, %47 : vector<80x128xf32>
    %c0_43 = arith.constant 0 : index
    %c22 = arith.constant 22 : index
    %c0_44 = arith.constant 0 : index
    %49 = vector.load %arg1[%c0_43, %c22, %c0_44] : memref<1x102x8xbf16, #tpu.memory_space<vmem>>, vector<1x80x8xbf16>
    %50 = vector.shape_cast %49 : vector<1x80x8xbf16> to vector<80x8xbf16>
    %c8 = arith.constant 8 : index
    %c0_45 = arith.constant 0 : index
    %c0_46 = arith.constant 0 : index
    %51 = vector.load %arg2[%c8, %c0_45, %c0_46] : memref<9x8x128xbf16, #tpu.memory_space<vmem>>, vector<1x8x128xbf16>
    %52 = vector.shape_cast %51 : vector<1x8x128xbf16> to vector<8x128xbf16>
    %cst_47 = arith.constant dense<0.000000e+00> : vector<80x128xf32>
    %53 = tpu.matmul %50, %52, %cst_47 {dimension_numbers = #tpu.dot_dimension_numbers<[1], [0], [0], [1], [0, 0, 1, 1], [], []>} : vector<80x8xbf16>, vector<8x128xbf16>, vector<80x128xf32> -> vector<80x128xf32>
    %54 = arith.addf %48, %53 : vector<80x128xf32>
    %55 = arith.truncf %54 : vector<80x128xf32> to vector<80x128xbf16>
    %c0_48 = arith.constant 0 : index
    %c0_49 = arith.constant 0 : index
    %c0_50 = arith.constant 0 : index
    %56 = vector.load %arg3[%c0_48, %c0_49, %c0_50] : memref<1x80x128xbf16, #tpu.memory_space<vmem>>, vector<1x80x128xbf16>
    %57 = vector.shape_cast %56 : vector<1x80x128xbf16> to vector<80x128xbf16>
    %58 = vector.shape_cast %55 : vector<80x128xbf16> to vector<1x80x128xbf16>
    tpu.vector_store %arg3[%c0_48, %c0_49, %c0_50], %58 {strides = array<i32>} : memref<1x80x128xbf16, #tpu.memory_space<vmem>>, vector<1x80x128xbf16>,
    %59 = tpu.iota {dimensions = array<i32: 0>} : vector<80x128xi32>
    %60 = arith.sitofp %59 : vector<80x128xi32> to vector<80x128xf32>
    %cst_51 = arith.constant 5.000000e-01 : f32
    %61 = vector.broadcast %cst_51 : f32 to vector<80x128xf32>
    %62 = arith.addf %60, %61 : vector<80x128xf32>
    %cst_52 = arith.constant 1.000000e-01 : f32
    %63 = vector.broadcast %cst_52 : f32 to vector<80x128xf32>
    %64 = arith.mulf %62, %63 : vector<80x128xf32>
    %65 = math.floor %64 : vector<80x128xf32>
    %cst_53 = arith.constant 1.000000e+01 : f32
    %66 = vector.broadcast %cst_53 : f32 to vector<80x128xf32>
    %67 = arith.mulf %65, %66 : vector<80x128xf32>
    %68 = arith.subf %60, %67 : vector<80x128xf32>
    %cst_54 = arith.constant 8.000000e+00 : f32
    %69 = vector.broadcast %cst_54 : f32 to vector<80x128xf32>
    %70 = arith.cmpf olt, %68, %69 : vector<80x128xf32>
    %cst_55 = arith.constant 0.000000e+00 : f32
    %71 = vector.broadcast %cst_55 : f32 to vector<80x128xf32>
    %72 = arith.select %70, %54, %71 : vector<80x128xi1>, vector<80x128xf32>
    %cst_56 = arith.constant dense<0.000000e+00> : vector<128xf32>
    %73 = vector.multi_reduction <add>, %72, %cst_56 [0] : vector<80x128xf32> to vector<128xf32>
    %74 = vector.shape_cast %73 : vector<128xf32> to vector<1x128xf32>
    %75 = arith.mulf %72, %54 : vector<80x128xf32>
    %cst_57 = arith.constant dense<0.000000e+00> : vector<128xf32>
    %76 = vector.multi_reduction <add>, %75, %cst_57 [0] : vector<80x128xf32> to vector<128xf32>
    %77 = vector.shape_cast %76 : vector<128xf32> to vector<1x128xf32>
    %78 = tpu.concatenate %74, %77 in 0 : vector<1x128xf32>, vector<1x128xf32> -> vector<2x128xf32>
    %c0_58 = arith.constant 0 : index
    %c0_59 = arith.constant 0 : index
    %c0_60 = arith.constant 0 : index
    %79 = vector.load %arg4[%c0_58, %c0_59, %c0_60] : memref<1x2x128xf32, #tpu.memory_space<vmem>>, vector<1x2x128xf32>
    %80 = vector.shape_cast %79 : vector<1x2x128xf32> to vector<2x128xf32>
    %81 = vector.shape_cast %78 : vector<2x128xf32> to vector<1x2x128xf32>
    tpu.vector_store %arg4[%c0_58, %c0_59, %c0_60], %81 {strides = array<i32>} : memref<1x2x128xf32, #tpu.memory_space<vmem>>, vector<1x2x128xf32>,
    return
  }
  func.func @transform_0(%arg0: i32) -> (i32, i32, i32) {
    %c0_i32 = arith.constant 0 : i32
    %c0_i32_0 = arith.constant 0 : i32
    %c0_i32_1 = arith.constant 0 : i32
    return %arg0, %c0_i32, %c0_i32_0 : i32, i32, i32
  }
  func.func @transform_1(%arg0: i32) -> (i32, i32, i32) {
    %c0_i32 = arith.constant 0 : i32
    %c0_i32_0 = arith.constant 0 : i32
    %c0_i32_1 = arith.constant 0 : i32
    %c0_i32_2 = arith.constant 0 : i32
    return %c0_i32, %c0_i32_0, %c0_i32_1 : i32, i32, i32
  }
  func.func @transform_2(%arg0: i32) -> (i32, i32, i32) {
    %c0_i32 = arith.constant 0 : i32
    %c0_i32_0 = arith.constant 0 : i32
    %c0_i32_1 = arith.constant 0 : i32
    return %arg0, %c0_i32, %c0_i32_0 : i32, i32, i32
  }
  func.func @transform_3(%arg0: i32) -> (i32, i32, i32) {
    %c0_i32 = arith.constant 0 : i32
    %c0_i32_0 = arith.constant 0 : i32
    %c0_i32_1 = arith.constant 0 : i32
    return %arg0, %c0_i32, %c0_i32_0 : i32, i32, i32
  }
}

module attributes {stable_mosaic.version = 11 : i64} {
  func.func @kernel(%arg0: i32, %arg1: memref<1x80x128xbf16, #tpu.memory_space<vmem>>, %arg2: memref<2x128xf32, #tpu.memory_space<vmem>>, %arg3: memref<2x128xf32, #tpu.memory_space<vmem>>, %arg4: memref<1x80x128xf32, #tpu.memory_space<vmem>>) attributes {dimension_semantics = [#tpu.dimension_semantics<parallel>], iteration_bounds = array<i64: 2>, scalar_prefetch = 0 : i64, scratch_operands = 0 : i64, tpu.core_type = #tpu.core_type<tc>, window_params = [{transform_indices = @transform_0, window_bounds = array<i64: 1, 80, 128>}, {pipeline_mode = #tpu.pipeline_mode<synchronous>, transform_indices = @transform_1, window_bounds = array<i64: 2, 128>}, {pipeline_mode = #tpu.pipeline_mode<synchronous>, transform_indices = @transform_2, window_bounds = array<i64: 2, 128>}, {transform_indices = @transform_3, window_bounds = array<i64: 1, 80, 128>}]} {
    %c0 = arith.constant 0 : index
    %c0_0 = arith.constant 0 : index
    %0 = vector.load %arg2[%c0, %c0_0] : memref<2x128xf32, #tpu.memory_space<vmem>>, vector<1x128xf32>
    %cst = arith.constant 7.812500e-03 : f32
    %1 = vector.broadcast %cst : f32 to vector<1x128xf32>
    %2 = arith.mulf %0, %1 : vector<1x128xf32>
    %c1 = arith.constant 1 : index
    %c0_1 = arith.constant 0 : index
    %3 = vector.load %arg2[%c1, %c0_1] : memref<2x128xf32, #tpu.memory_space<vmem>>, vector<1x128xf32>
    %cst_2 = arith.constant 7.812500e-03 : f32
    %4 = vector.broadcast %cst_2 : f32 to vector<1x128xf32>
    %5 = arith.mulf %3, %4 : vector<1x128xf32>
    %6 = arith.mulf %2, %2 : vector<1x128xf32>
    %7 = arith.subf %5, %6 : vector<1x128xf32>
    %cst_3 = arith.constant 0.000000e+00 : f32
    %8 = vector.broadcast %cst_3 : f32 to vector<1x128xf32>
    %9 = arith.maximumf %7, %8 : vector<1x128xf32>
    %c0_4 = arith.constant 0 : index
    %c0_5 = arith.constant 0 : index
    %10 = vector.load %arg3[%c0_4, %c0_5] : memref<2x128xf32, #tpu.memory_space<vmem>>, vector<1x128xf32>
    %cst_6 = arith.constant 9.99999974E-6 : f32
    %11 = vector.broadcast %cst_6 : f32 to vector<1x128xf32>
    %12 = arith.addf %9, %11 : vector<1x128xf32>
    %13 = math.rsqrt %12 : vector<1x128xf32>
    %14 = arith.mulf %10, %13 : vector<1x128xf32>
    %c1_7 = arith.constant 1 : index
    %c0_8 = arith.constant 0 : index
    %15 = vector.load %arg3[%c1_7, %c0_8] : memref<2x128xf32, #tpu.memory_space<vmem>>, vector<1x128xf32>
    %16 = arith.mulf %2, %14 : vector<1x128xf32>
    %17 = arith.subf %15, %16 : vector<1x128xf32>
    %c0_9 = arith.constant 0 : index
    %c0_10 = arith.constant 0 : index
    %c0_11 = arith.constant 0 : index
    %18 = vector.load %arg1[%c0_9, %c0_10, %c0_11] : memref<1x80x128xbf16, #tpu.memory_space<vmem>>, vector<1x80x128xbf16>
    %19 = vector.shape_cast %18 : vector<1x80x128xbf16> to vector<80x128xbf16>
    %20 = arith.extf %19 : vector<80x128xbf16> to vector<80x128xf32>
    %21 = vector.broadcast %14 : vector<1x128xf32> to vector<80x128xf32>
    %22 = arith.mulf %20, %21 : vector<80x128xf32>
    %23 = vector.broadcast %17 : vector<1x128xf32> to vector<80x128xf32>
    %24 = arith.addf %22, %23 : vector<80x128xf32>
    %cst_12 = arith.constant 0.000000e+00 : f32
    %25 = vector.broadcast %cst_12 : f32 to vector<80x128xf32>
    %26 = arith.cmpf ogt, %24, %25 : vector<80x128xf32>
    %cst_13 = arith.constant 2.000000e-01 : f32
    %27 = vector.broadcast %cst_13 : f32 to vector<80x128xf32>
    %28 = arith.mulf %27, %24 : vector<80x128xf32>
    %29 = arith.select %26, %24, %28 : vector<80x128xi1>, vector<80x128xf32>
    %c0_14 = arith.constant 0 : index
    %c0_15 = arith.constant 0 : index
    %c0_16 = arith.constant 0 : index
    %30 = vector.load %arg4[%c0_14, %c0_15, %c0_16] : memref<1x80x128xf32, #tpu.memory_space<vmem>>, vector<1x80x128xf32>
    %31 = vector.shape_cast %30 : vector<1x80x128xf32> to vector<80x128xf32>
    %32 = vector.shape_cast %29 : vector<80x128xf32> to vector<1x80x128xf32>
    tpu.vector_store %arg4[%c0_14, %c0_15, %c0_16], %32 {strides = array<i32>} : memref<1x80x128xf32, #tpu.memory_space<vmem>>, vector<1x80x128xf32>,
    return
  }
  func.func @transform_0(%arg0: i32) -> (i32, i32, i32) {
    %c0_i32 = arith.constant 0 : i32
    %c0_i32_0 = arith.constant 0 : i32
    %c0_i32_1 = arith.constant 0 : i32
    return %arg0, %c0_i32, %c0_i32_0 : i32, i32, i32
  }
  func.func @transform_1(%arg0: i32) -> (i32, i32) {
    %c0_i32 = arith.constant 0 : i32
    %c0_i32_0 = arith.constant 0 : i32
    %c0_i32_1 = arith.constant 0 : i32
    return %c0_i32, %c0_i32_0 : i32, i32
  }
  func.func @transform_2(%arg0: i32) -> (i32, i32) {
    %c0_i32 = arith.constant 0 : i32
    %c0_i32_0 = arith.constant 0 : i32
    %c0_i32_1 = arith.constant 0 : i32
    return %c0_i32, %c0_i32_0 : i32, i32
  }
  func.func @transform_3(%arg0: i32) -> (i32, i32, i32) {
    %c0_i32 = arith.constant 0 : i32
    %c0_i32_0 = arith.constant 0 : i32
    %c0_i32_1 = arith.constant 0 : i32
    return %arg0, %c0_i32, %c0_i32_0 : i32, i32, i32
  }
}

</mosaic_0001>

<llo_original>
// kernel: _lambda_.5
$region0: #{_lambda_.5}
  #allocation0 [shape = 'u32[]', space=smem, size = 0x4, offset = 0x4, fixed_abs, tag = 'smem constant byte address 0x4 - core index']
  #allocation1 [shape = 'u32[144,128]{1,0:T(1,128)}', space=vmem, size = 0x12000, scoped, tag = 'internal scratch']
  %s0 = inlined_call_operand.vmem [shape: bf16[2,80,128], index: 0, kind: input, shape index: {}]
  %s1 = inlined_call_operand.vmem [shape: f32[2,128], index: 1, kind: input, shape index: {}]
  %s2 = inlined_call_operand.vmem [shape: f32[2,128], index: 2, kind: input, shape index: {}]
  %s3 = inlined_call_operand.vmem [shape: f32[2,80,128], index: 3, kind: output, shape index: {}]
  %s4 = sld [smem:[#allocation0]]
  $region45: #{_lambda_.5} parent=0
    _
  %s6 = ssub.s32 1, %s4
  %s7 = scalar_select 0, %s6, %s4
  loop: start=0, step=1, limit=4
  $region2: #{_lambda_.5} parent=0 // loop_pre_header
    _
  $region3: #{_lambda_.5} parent=0 // loop_header
    %s9 = sphi 0, %s13
    %p10 = scmp.ge.s32.totalorder %s9, 4
    %s19 = sphi 0, %s21
    %s22 = sphi 0, %s19
    %s23 = sphi 0, %s22
    %s39 = sphi 0, %s23
    %s43 = sphi 0, %s43
    %s45 = sphi 0, %s43
    %s46 = sphi 0, %s45
    %s60 = sphi 0, %s46
    %s64 = sphi 0, %s64
    %s66 = sphi 0, %s64
    %s67 = sphi 0, %s66
    %s81 = sphi 0, %s67
    %s87 = sphi 0, %s89
    %s90 = sphi 0, %s87
    %s91 = sphi 0, %s90
    %s107 = sphi 0, %s91
  $region4: #{_lambda_.5} parent=0 // loop_header_branch
    %12 = sbr.rel (%p10) target = $region8
  $region5: #{_lambda_.5} parent=0 // loop_body
    %s14 = ssub.s32 %s9, 1
    %s15 = ssub.s32 %s9, 2
    %s16 = sadd.s32 %s9, 1
    %s17 = ssub.s32 %s9, %s16
    %p18 = scmp.eq.s32.totalorder %s17, 0
    %s20 = sadd.s32 %s19, 1
    %s21 = scalar_select %p18, %s19, %s20
    %p24 = pneg %p18
    %p25 = scmp.eq.s32.totalorder %s9, 1
    %p26 = por %p24, %p25
    %p27 = scmp.ne.s32.totalorder %s19, %s22
    %p28 = scmp.eq.s32.totalorder %s9, 0
    %p29 = por %p27, %p28
    %p30 = scmp.ne.s32.totalorder %s19, %s22
    %p31 = scmp.eq.s32.totalorder %s14, 1
    %p32 = por %p30, %p31
    %p33 = scmp.ne.s32.totalorder %s22, %s23
    %p34 = scmp.eq.s32.totalorder %s14, 0
    %p35 = por %p33, %p34
    %p36 = scmp.ne.s32.totalorder %s22, %s23
    %p37 = scmp.eq.s32.totalorder %s15, 1
    %p38 = por %p36, %p37
    %p40 = scmp.ne.s32.totalorder %s23, %s39
    %p41 = scmp.eq.s32.totalorder %s15, 0
    %p42 = por %p40, %p41
    %s44 = sadd.s32 %s43, 1
    %p47 = scmp.eq.s32.totalorder %s9, 1
    %p48 = scmp.ne.s32.totalorder %s43, %s45
    %p49 = scmp.eq.s32.totalorder %s9, 0
    %p50 = por %p48, %p49
    %p51 = scmp.ne.s32.totalorder %s43, %s45
    %p52 = scmp.eq.s32.totalorder %s14, 1
    %p53 = por %p51, %p52
    %p54 = scmp.ne.s32.totalorder %s45, %s46
    %p55 = scmp.eq.s32.totalorder %s14, 0
    %p56 = por %p54, %p55
    %p57 = scmp.ne.s32.totalorder %s45, %s46
    %p58 = scmp.eq.s32.totalorder %s15, 1
    %p59 = por %p57, %p58
    %p61 = scmp.ne.s32.totalorder %s46, %s60
    %p62 = scmp.eq.s32.totalorder %s15, 0
    %p63 = por %p61, %p62
    %s65 = sadd.s32 %s64, 1
    %p68 = scmp.eq.s32.totalorder %s9, 1
    %p69 = scmp.ne.s32.totalorder %s64, %s66
    %p70 = scmp.eq.s32.totalorder %s9, 0
    %p71 = por %p69, %p70
    %p72 = scmp.ne.s32.totalorder %s64, %s66
    %p73 = scmp.eq.s32.totalorder %s14, 1
    %p74 = por %p72, %p73
    %p75 = scmp.ne.s32.totalorder %s66, %s67
    %p76 = scmp.eq.s32.totalorder %s14, 0
    %p77 = por %p75, %p76
    %p78 = scmp.ne.s32.totalorder %s66, %s67
    %p79 = scmp.eq.s32.totalorder %s15, 1
    %p80 = por %p78, %p79
    %p82 = scmp.ne.s32.totalorder %s67, %s81
    %p83 = scmp.eq.s32.totalorder %s15, 0
    %p84 = por %p82, %p83
    %s85 = ssub.s32 %s9, %s16
    %p86 = scmp.eq.s32.totalorder %s85, 0
    %s88 = sadd.s32 %s87, 1
    %s89 = scalar_select %p86, %s87, %s88
    %p92 = pneg %p86
    %p93 = scmp.eq.s32.totalorder %s9, 1
    %p94 = por %p92, %p93
    %p95 = scmp.ne.s32.totalorder %s87, %s90
    %p96 = scmp.eq.s32.totalorder %s9, 0
    %p97 = por %p95, %p96
    %p98 = scmp.ne.s32.totalorder %s87, %s90
    %p99 = scmp.eq.s32.totalorder %s14, 1
    %p100 = por %p98, %p99
    %p101 = scmp.ne.s32.totalorder %s90, %s91
    %p102 = scmp.eq.s32.totalorder %s14, 0
    %p103 = por %p101, %p102
    %p104 = scmp.ne.s32.totalorder %s90, %s91
    %p105 = scmp.eq.s32.totalorder %s15, 1
    %p106 = por %p104, %p105
    %p108 = scmp.ne.s32.totalorder %s91, %s107
    %p109 = scmp.eq.s32.totalorder %s15, 0
    %p110 = por %p108, %p109
    %p111 = scmp.le.s32.totalorder 1, %s9
    %p112 = scmp.lt.s32.totalorder %s9, 3
    %p113 = pnand %p111, %p112
    %p114 = pneg %p113
    // Predicated region
    $region9: #{_lambda_.5} parent=5 // pred_check
      _
    $region10: #{_lambda_.5} parent=5 // pred_check_branch
      %116 = sbr.rel (%p113) target = $region12
    $region11: #{_lambda_.5} parent=5 // pred_region
      %s117 = ssub.s32 %s9, 1
      // Predicated region
      $region13: #{_lambda_.5} parent=11 // pred_check
        %p118 = pneg %p56
      $region14: #{_lambda_.5} parent=11 // pred_check_branch
        %120 = sbr.rel (%p118) target = $region16
      $region15: #{_lambda_.5} parent=11 // pred_region
        _
      $region16: #{_lambda_.5} parent=11 // pred_fallthru
        _
      // Predicated region
      $region17: #{_lambda_.5} parent=11 // pred_check
        %p121 = pneg %p77
      $region18: #{_lambda_.5} parent=11 // pred_check_branch
        %123 = sbr.rel (%p121) target = $region20
      $region19: #{_lambda_.5} parent=11 // pred_region
        _
      $region20: #{_lambda_.5} parent=11 // pred_fallthru
        _
    $region12: #{_lambda_.5} parent=5 // pred_fallthru
      _
    %p124 = scmp.lt.s32.totalorder %s9, 2
    // Predicated region
    $region21: #{_lambda_.5} parent=5 // pred_check
      %p125 = pneg %p124
    $region22: #{_lambda_.5} parent=5 // pred_check_branch
      %127 = sbr.rel (%p125) target = $region24
    $region23: #{_lambda_.5} parent=5 // pred_region
      // Predicated region
      $region25: #{_lambda_.5} parent=23 // pred_check
        %p128 = pneg %p29
      $region26: #{_lambda_.5} parent=23 // pred_check_branch
        %130 = sbr.rel (%p128) target = $region28
      $region27: #{_lambda_.5} parent=23 // pred_region
        %p131 = scmp.lt.s32.totalorder %s9, 1
        %s132 = scalar_select %p131, %s9, 1
        %s133 = smul.addr %s132, 10
        %s134 = smul.addr %s133, 4
        %s135 = scalar_lea.vmem %s0, %s134
      $region28: #{_lambda_.5} parent=23 // pred_fallthru
        _
    $region24: #{_lambda_.5} parent=5 // pred_fallthru
      _
    %p136 = scmp.le.s32.totalorder 1, %s9
    %p137 = scmp.lt.s32.totalorder %s9, 3
    %p138 = pnand %p136, %p137
    %p139 = pneg %p138
    // Predicated region
    $region29: #{_lambda_.5} parent=5 // pred_check
      _
    $region30: #{_lambda_.5} parent=5 // pred_check_branch
      %141 = sbr.rel (%p138) target = $region32
    $region31: #{_lambda_.5} parent=5 // pred_region
      %s142 = ssub.s32 %s9, 1
      %p143 = scmp.lt.s32.totalorder %s14, 1
      %s144 = scalar_select %p143, %s14, 1
      %s145 = smul.addr %s144, 10
      %s146 = smul.addr %s145, 4
      %s147 = scalar_lea.vmem %s0, %s146
      %p148 = pneg %p35
      %p149 = pneg %p32
      %p150 = pneg %p56
      %p151 = pneg %p53
      %p152 = pneg %p77
      %p153 = pneg %p74
      %p154 = pneg %p103
      %p155 = pneg %p100
      %p156 = scmp.lt.s32.totalorder %s14, 1
      %s157 = scalar_select %p156, %s14, 1
      %s158 = smul.addr %s157, 10
      %s159 = smul.addr %s158, 8
      %s160 = scalar_lea.vmem %s3, %s159
      %p161 = scmp.lt.s32.totalorder %s14, 1
      %s162 = scalar_select %p161, %s14, 1
      %s163 = smul.addr %s162, 10
      %s164 = smul.addr %s163, 4
      %s165 = scalar_lea.vmem %s0, %s164
      %p166 = scmp.lt.s32.totalorder %s14, 1
      %s167 = scalar_select %p166, %s14, 1
      %s168 = smul.addr %s167, 10
      %s169 = smul.addr %s168, 8
      %s170 = scalar_lea.vmem %s3, %s169
      %v171 = vld [vmem:[%s1] sm:$0x1]
      %v172 = vmul.f32 %v171, 0.0078125
      %v173 = vld [vmem:[%s1 + $0x1] sm:$0x1]
      %v174 = vmul.f32 %v173, 0.0078125
      %v175 = vmul.f32 %v172, %v172
      %v176 = vsub.f32 %v174, %v175
      %v177 = vmax.f32 %v176, 0.0
      %v178 = vld [vmem:[%s2] sm:$0x1]
      %v179 = vadd.f32 %v177, 1e-05
      %v180 = vrsqrt.pop %v179
      %v181 = vmul.f32 %v178, %v180
      %v182 = vld [vmem:[%s2 + $0x1] sm:$0x1]
      %v183 = vmul.f32 %v172, %v181
      %v184 = vsub.f32 %v182, %v183
      %v185 = vld [vmem:[%s165] sm:$0xf]
      %v186 = vld [vmem:[%s165 + $0x4] sm:$0xf]
      %v187 = vld [vmem:[%s165 + $0x8] sm:$0xf]
      %v188 = vld [vmem:[%s165 + $0xc] sm:$0xf]
      %v189 = vld [vmem:[%s165 + $0x10] sm:$0xf]
      %v190 = vld [vmem:[%s165 + $0x14] sm:$0xf]
      %v191 = vld [vmem:[%s165 + $0x18] sm:$0xf]
      %v192 = vld [vmem:[%s165 + $0x1c] sm:$0xf]
      %v193 = vld [vmem:[%s165 + $0x20] sm:$0xf]
      %v194 = vld [vmem:[%s165 + $0x24] sm:$0xf]
      %v195 = vunpack.c.l.bf16 %v185
      %v196 = vunpack.c.l.bf16 %v186
      %v197 = vunpack.c.l.bf16 %v187
      %v198 = vunpack.c.l.bf16 %v188
      %v199 = vunpack.c.l.bf16 %v189
      %v200 = vunpack.c.l.bf16 %v190
      %v201 = vunpack.c.l.bf16 %v191
      %v202 = vunpack.c.l.bf16 %v192
      %v203 = vunpack.c.l.bf16 %v193
      %v204 = vunpack.c.l.bf16 %v194
      %v205 = vlaneseq
      %v206 = vshrl.u32 %v205, 7
      %v207 = vsub.s32 0, %v206
      %v208 = vrot.slane %v181, %v207
      %v209 = vmul.f32 %v195, %v208
      %v210 = vmul.f32 %v196, %v208
      %v211 = vmul.f32 %v197, %v208
      %v212 = vmul.f32 %v198, %v208
      %v213 = vmul.f32 %v199, %v208
      %v214 = vmul.f32 %v200, %v208
      %v215 = vmul.f32 %v201, %v208
      %v216 = vmul.f32 %v202, %v208
      %v217 = vmul.f32 %v203, %v208
      %v218 = vmul.f32 %v204, %v208
      %v219 = vlaneseq
      %v220 = vshrl.u32 %v219, 7
      %v221 = vsub.s32 0, %v220
      %v222 = vrot.slane %v184, %v221
      %v223 = vadd.f32 %v209, %v222
      %v224 = vadd.f32 %v210, %v222
      %v225 = vadd.f32 %v211, %v222
      %v226 = vadd.f32 %v212, %v222
      %v227 = vadd.f32 %v213, %v222
      %v228 = vadd.f32 %v214, %v222
      %v229 = vadd.f32 %v215, %v222
      %v230 = vadd.f32 %v216, %v222
      %v231 = vadd.f32 %v217, %v222
      %v232 = vadd.f32 %v218, %v222
      %vm233 = vcmp.gt.f32.partialorder %v223, 0.0
      %vm234 = vcmp.gt.f32.partialorder %v224, 0.0
      %vm235 = vcmp.gt.f32.partialorder %v225, 0.0
      %vm236 = vcmp.gt.f32.partialorder %v226, 0.0
      %vm237 = vcmp.gt.f32.partialorder %v227, 0.0
      %vm238 = vcmp.gt.f32.partialorder %v228, 0.0
      %vm239 = vcmp.gt.f32.partialorder %v229, 0.0
      %vm240 = vcmp.gt.f32.partialorder %v230, 0.0
      %vm241 = vcmp.gt.f32.partialorder %v231, 0.0
      %vm242 = vcmp.gt.f32.partialorder %v232, 0.0
      %v243 = vmul.f32 %v223, 0.2
      %v244 = vmul.f32 %v224, 0.2
      %v245 = vmul.f32 %v225, 0.2
      %v246 = vmul.f32 %v226, 0.2
      %v247 = vmul.f32 %v227, 0.2
      %v248 = vmul.f32 %v228, 0.2
      %v249 = vmul.f32 %v229, 0.2
      %v250 = vmul.f32 %v230, 0.2
      %v251 = vmul.f32 %v231, 0.2
      %v252 = vmul.f32 %v232, 0.2
      %v253 = vsel %vm233, %v223, %v243
      %v254 = vsel %vm234, %v224, %v244
      %v255 = vsel %vm235, %v225, %v245
      %v256 = vsel %vm236, %v226, %v246
      %v257 = vsel %vm237, %v227, %v247
      %v258 = vsel %vm238, %v228, %v248
      %v259 = vsel %vm239, %v229, %v249
      %v260 = vsel %vm240, %v230, %v250
      %v261 = vsel %vm241, %v231, %v251
      %v262 = vsel %vm242, %v232, %v252
      %263 = vst [vmem:[%s170] sm:$0xff] %v253
      %264 = vst [vmem:[%s170 + $0x8] sm:$0xff] %v254
      %265 = vst [vmem:[%s170 + $0x10] sm:$0xff] %v255
      %266 = vst [vmem:[%s170 + $0x18] sm:$0xff] %v256
      %267 = vst [vmem:[%s170 + $0x20] sm:$0xff] %v257
      %268 = vst [vmem:[%s170 + $0x28] sm:$0xff] %v258
      %269 = vst [vmem:[%s170 + $0x30] sm:$0xff] %v259
      %270 = vst [vmem:[%s170 + $0x38] sm:$0xff] %v260
      %271 = vst [vmem:[%s170 + $0x40] sm:$0xff] %v261
      %272 = vst [vmem:[%s170 + $0x48] sm:$0xff] %v262
      %p273 = scmp.lt.s32.totalorder %s14, 1
      %s274 = scalar_select %p273, %s14, 1
      %s275 = smul.addr %s274, 10
      %s276 = smul.addr %s275, 8
      %s277 = scalar_lea.vmem %s3, %s276
      // Predicated region
      $region33: #{_lambda_.5} parent=31 // pred_check
        %p278 = pneg %p100
      $region34: #{_lambda_.5} parent=31 // pred_check_branch
        %280 = sbr.rel (%p278) target = $region36
      $region35: #{_lambda_.5} parent=31 // pred_region
        _
      $region36: #{_lambda_.5} parent=31 // pred_fallthru
        _
    $region32: #{_lambda_.5} parent=5 // pred_fallthru
      _
    %p281 = scmp.le.s32.totalorder 2, %s9
    // Predicated region
    $region37: #{_lambda_.5} parent=5 // pred_check
      %p282 = pneg %p281
    $region38: #{_lambda_.5} parent=5 // pred_check_branch
      %284 = sbr.rel (%p282) target = $region40
    $region39: #{_lambda_.5} parent=5 // pred_region
      %s285 = ssub.s32 %s9, 2
      // Predicated region
      $region41: #{_lambda_.5} parent=39 // pred_check
        %p286 = pneg %p106
      $region42: #{_lambda_.5} parent=39 // pred_check_branch
        %288 = sbr.rel (%p286) target = $region44
      $region43: #{_lambda_.5} parent=39 // pred_region
        %p289 = scmp.lt.s32.totalorder %s15, 1
        %s290 = scalar_select %p289, %s15, 1
        %s291 = smul.addr %s290, 10
        %s292 = smul.addr %s291, 8
        %s293 = scalar_lea.vmem %s3, %s292
      $region44: #{_lambda_.5} parent=39 // pred_fallthru
        _
    $region40: #{_lambda_.5} parent=5 // pred_fallthru
      _
  $region6: #{_lambda_.5} parent=0 // loop_footer
    %s13 = sadd.s32 1, %s9
  $region7: #{_lambda_.5} parent=0 // loop_footer_branch
    %8 = sbr.rel target = $region3
  $region8: #{_lambda_.5} parent=0 // loop_exit
    _

// kernel: _lambda_.3
$region0: #{_lambda_.3}
  #allocation0 [shape = 'u32[]', space=smem, size = 0x4, offset = 0x4, fixed_abs, tag = 'smem constant byte address 0x4 - core index']
  #allocation1 [shape = 'u32[144,128]{1,0:T(1,128)}', space=vmem, size = 0x12000, scoped, tag = 'internal scratch']
  %s0 = inlined_call_operand.vmem [shape: bf16[2,102,8], index: 0, kind: input, shape index: {}]
  %s1 = inlined_call_operand.vmem [shape: bf16[9,8,128], index: 1, kind: input, shape index: {}]
  %s2 = inlined_call_operand.vmem [shape: bf16[2,80,128], index: 2, kind: output, shape index: {0}]
  %s3 = inlined_call_operand.vmem [shape: f32[2,2,128], index: 3, kind: output, shape index: {1}]
  %4 = xla_tuple %s2, %s3
  %s5 = sld [smem:[#allocation0]]
  $region49: #{_lambda_.3} parent=0
    _
  %s7 = ssub.s32 1, %s5
  %s8 = scalar_select 0, %s7, %s5
  loop: start=0, step=1, limit=4
  $region2: #{_lambda_.3} parent=0 // loop_pre_header
    _
  $region3: #{_lambda_.3} parent=0 // loop_header
    %s10 = sphi 0, %s14
    %p11 = scmp.ge.s32.totalorder %s10, 4
    %s20 = sphi 0, %s22
    %s23 = sphi 0, %s20
    %s24 = sphi 0, %s23
    %s40 = sphi 0, %s24
    %s44 = sphi 0, %s44
    %s46 = sphi 0, %s44
    %s47 = sphi 0, %s46
    %s61 = sphi 0, %s47
    %s67 = sphi 0, %s69
    %s70 = sphi 0, %s67
    %s71 = sphi 0, %s70
    %s87 = sphi 0, %s71
    %s93 = sphi 0, %s95
    %s96 = sphi 0, %s93
    %s97 = sphi 0, %s96
    %s113 = sphi 0, %s97
  $region4: #{_lambda_.3} parent=0 // loop_header_branch
    %13 = sbr.rel (%p11) target = $region8
  $region5: #{_lambda_.3} parent=0 // loop_body
    %s15 = ssub.s32 %s10, 1
    %s16 = ssub.s32 %s10, 2
    %s17 = sadd.s32 %s10, 1
    %s18 = ssub.s32 %s10, %s17
    %p19 = scmp.eq.s32.totalorder %s18, 0
    %s21 = sadd.s32 %s20, 1
    %s22 = scalar_select %p19, %s20, %s21
    %p25 = pneg %p19
    %p26 = scmp.eq.s32.totalorder %s10, 1
    %p27 = por %p25, %p26
    %p28 = scmp.ne.s32.totalorder %s20, %s23
    %p29 = scmp.eq.s32.totalorder %s10, 0
    %p30 = por %p28, %p29
    %p31 = scmp.ne.s32.totalorder %s20, %s23
    %p32 = scmp.eq.s32.totalorder %s15, 1
    %p33 = por %p31, %p32
    %p34 = scmp.ne.s32.totalorder %s23, %s24
    %p35 = scmp.eq.s32.totalorder %s15, 0
    %p36 = por %p34, %p35
    %p37 = scmp.ne.s32.totalorder %s23, %s24
    %p38 = scmp.eq.s32.totalorder %s16, 1
    %p39 = por %p37, %p38
    %p41 = scmp.ne.s32.totalorder %s24, %s40
    %p42 = scmp.eq.s32.totalorder %s16, 0
    %p43 = por %p41, %p42
    %s45 = sadd.s32 %s44, 1
    %p48 = scmp.eq.s32.totalorder %s10, 1
    %p49 = scmp.ne.s32.totalorder %s44, %s46
    %p50 = scmp.eq.s32.totalorder %s10, 0
    %p51 = por %p49, %p50
    %p52 = scmp.ne.s32.totalorder %s44, %s46
    %p53 = scmp.eq.s32.totalorder %s15, 1
    %p54 = por %p52, %p53
    %p55 = scmp.ne.s32.totalorder %s46, %s47
    %p56 = scmp.eq.s32.totalorder %s15, 0
    %p57 = por %p55, %p56
    %p58 = scmp.ne.s32.totalorder %s46, %s47
    %p59 = scmp.eq.s32.totalorder %s16, 1
    %p60 = por %p58, %p59
    %p62 = scmp.ne.s32.totalorder %s47, %s61
    %p63 = scmp.eq.s32.totalorder %s16, 0
    %p64 = por %p62, %p63
    %s65 = ssub.s32 %s10, %s17
    %p66 = scmp.eq.s32.totalorder %s65, 0
    %s68 = sadd.s32 %s67, 1
    %s69 = scalar_select %p66, %s67, %s68
    %p72 = pneg %p66
    %p73 = scmp.eq.s32.totalorder %s10, 1
    %p74 = por %p72, %p73
    %p75 = scmp.ne.s32.totalorder %s67, %s70
    %p76 = scmp.eq.s32.totalorder %s10, 0
    %p77 = por %p75, %p76
    %p78 = scmp.ne.s32.totalorder %s67, %s70
    %p79 = scmp.eq.s32.totalorder %s15, 1
    %p80 = por %p78, %p79
    %p81 = scmp.ne.s32.totalorder %s70, %s71
    %p82 = scmp.eq.s32.totalorder %s15, 0
    %p83 = por %p81, %p82
    %p84 = scmp.ne.s32.totalorder %s70, %s71
    %p85 = scmp.eq.s32.totalorder %s16, 1
    %p86 = por %p84, %p85
    %p88 = scmp.ne.s32.totalorder %s71, %s87
    %p89 = scmp.eq.s32.totalorder %s16, 0
    %p90 = por %p88, %p89
    %s91 = ssub.s32 %s10, %s17
    %p92 = scmp.eq.s32.totalorder %s91, 0
    %s94 = sadd.s32 %s93, 1
    %s95 = scalar_select %p92, %s93, %s94
    %p98 = pneg %p92
    %p99 = scmp.eq.s32.totalorder %s10, 1
    %p100 = por %p98, %p99
    %p101 = scmp.ne.s32.totalorder %s93, %s96
    %p102 = scmp.eq.s32.totalorder %s10, 0
    %p103 = por %p101, %p102
    %p104 = scmp.ne.s32.totalorder %s93, %s96
    %p105 = scmp.eq.s32.totalorder %s15, 1
    %p106 = por %p104, %p105
    %p107 = scmp.ne.s32.totalorder %s96, %s97
    %p108 = scmp.eq.s32.totalorder %s15, 0
    %p109 = por %p107, %p108
    %p110 = scmp.ne.s32.totalorder %s96, %s97
    %p111 = scmp.eq.s32.totalorder %s16, 1
    %p112 = por %p110, %p111
    %p114 = scmp.ne.s32.totalorder %s97, %s113
    %p115 = scmp.eq.s32.totalorder %s16, 0
    %p116 = por %p114, %p115
    %p117 = scmp.le.s32.totalorder 1, %s10
    %p118 = scmp.lt.s32.totalorder %s10, 3
    %p119 = pnand %p117, %p118
    %p120 = pneg %p119
    // Predicated region
    $region9: #{_lambda_.3} parent=5 // pred_check
      _
    $region10: #{_lambda_.3} parent=5 // pred_check_branch
      %122 = sbr.rel (%p119) target = $region12
    $region11: #{_lambda_.3} parent=5 // pred_region
      %s123 = ssub.s32 %s10, 1
      // Predicated region
      $region13: #{_lambda_.3} parent=11 // pred_check
        %p124 = pneg %p57
      $region14: #{_lambda_.3} parent=11 // pred_check_branch
        %126 = sbr.rel (%p124) target = $region16
      $region15: #{_lambda_.3} parent=11 // pred_region
        _
      $region16: #{_lambda_.3} parent=11 // pred_fallthru
        _
    $region12: #{_lambda_.3} parent=5 // pred_fallthru
      _
    %p127 = scmp.lt.s32.totalorder %s10, 2
    // Predicated region
    $region17: #{_lambda_.3} parent=5 // pred_check
      %p128 = pneg %p127
    $region18: #{_lambda_.3} parent=5 // pred_check_branch
      %130 = sbr.rel (%p128) target = $region20
    $region19: #{_lambda_.3} parent=5 // pred_region
      // Predicated region
      $region21: #{_lambda_.3} parent=19 // pred_check
        %p131 = pneg %p30
      $region22: #{_lambda_.3} parent=19 // pred_check_branch
        %133 = sbr.rel (%p131) target = $region24
      $region23: #{_lambda_.3} parent=19 // pred_region
        %p134 = scmp.lt.s32.totalorder %s10, 1
        %s135 = scalar_select %p134, %s10, 1
        %s136 = smul.addr %s135, 13
        %s137 = smul.addr %s136, 4
        %s138 = scalar_lea.vmem %s0, %s137
      $region24: #{_lambda_.3} parent=19 // pred_fallthru
        _
    $region20: #{_lambda_.3} parent=5 // pred_fallthru
      _
    %p139 = scmp.le.s32.totalorder 1, %s10
    %p140 = scmp.lt.s32.totalorder %s10, 3
    %p141 = pnand %p139, %p140
    %p142 = pneg %p141
    // Predicated region
    $region25: #{_lambda_.3} parent=5 // pred_check
      _
    $region26: #{_lambda_.3} parent=5 // pred_check_branch
      %144 = sbr.rel (%p141) target = $region28
    $region27: #{_lambda_.3} parent=5 // pred_region
      %s145 = ssub.s32 %s10, 1
      %p146 = scmp.lt.s32.totalorder %s15, 1
      %s147 = scalar_select %p146, %s15, 1
      %s148 = smul.addr %s147, 13
      %s149 = smul.addr %s148, 4
      %s150 = scalar_lea.vmem %s0, %s149
      %p151 = pneg %p36
      %p152 = pneg %p33
      %p153 = pneg %p57
      %p154 = pneg %p54
      %p155 = pneg %p83
      %p156 = pneg %p80
      %p157 = scmp.lt.s32.totalorder %s15, 1
      %s158 = scalar_select %p157, %s15, 1
      %s159 = smul.addr %s158, 10
      %s160 = smul.addr %s159, 4
      %s161 = scalar_lea.vmem %s2, %s160
      %p162 = pneg %p109
      %p163 = pneg %p106
      %p164 = scmp.lt.s32.totalorder %s15, 1
      %s165 = scalar_select %p164, %s15, 1
      %s166 = smul.addr %s165, 2
      %s167 = scalar_lea.vmem %s3, %s166
      %p168 = scmp.lt.s32.totalorder %s15, 1
      %s169 = scalar_select %p168, %s15, 1
      %s170 = smul.addr %s169, 13
      %s171 = smul.addr %s170, 4
      %s172 = scalar_lea.vmem %s0, %s171
      %p173 = scmp.lt.s32.totalorder %s15, 1
      %s174 = scalar_select %p173, %s15, 1
      %s175 = smul.addr %s174, 10
      %s176 = smul.addr %s175, 4
      %s177 = scalar_lea.vmem %s2, %s176
      %p178 = scmp.lt.s32.totalorder %s15, 1
      %s179 = scalar_select %p178, %s15, 1
      %s180 = smul.addr %s179, 2
      %s181 = scalar_lea.vmem %s3, %s180
      %v183 = vld [vmem:[%s172] sm:$0xf]
      %v184 = vld [vmem:[%s172 + $0x4] sm:$0xf]
      %v185 = vld [vmem:[%s172 + $0x8] sm:$0xf]
      %v186 = vld [vmem:[%s172 + $0xc] sm:$0xf]
      %v187 = vld [vmem:[%s172 + $0x10] sm:$0xf]
      %v188 = vld [vmem:[%s172 + $0x14] sm:$0xf]
      %v189 = vld [vmem:[%s172 + $0x18] sm:$0xf]
      %v190 = vld [vmem:[%s172 + $0x1c] sm:$0xf]
      %v191 = vld [vmem:[%s172 + $0x20] sm:$0xf]
      %v192 = vld [vmem:[%s172 + $0x24] sm:$0xf]
      %v193 = vld [vmem:[%s1] sm:$0xf]
      %v194 = vld [vmem:[%s172 + $0x28] sm:$0x1]
      %s195 = scalar_lea.vmem %s1, 4
      %v196 = vld [vmem:[%s195] sm:$0xf]
      %v208 = vunpack.c.l.b16 %v183
      %v209 = vunpack.c.l.b16 %v184
      %v210 = vunpack.c.l.b16 %v185
      %v211 = vunpack.c.l.b16 %v186
      %v212 = vunpack.c.l.b16 %v187
      %v213 = vunpack.c.l.b16 %v188
      %v214 = vunpack.c.l.b16 %v189
      %v215 = vunpack.c.l.b16 %v190
      %v216 = vunpack.c.l.b16 %v191
      %v217 = vunpack.c.l.b16 %v192
      %v218 = vunpack.c.l.b16 %v194
      %v219 = vpack.c.b16 %v209, %v208
      %v220 = vpack.c.b16 %v211, %v210
      %v221 = vpack.c.b16 %v213, %v212
      %v222 = vpack.c.b16 %v215, %v214
      %v223 = vpack.c.b16 %v217, %v216
      %v224 = vpack.c.b16 %v218, %v218
      %vm225 = vsmask.f32 7424
      %v227 = vshrl.u32 %v219, 16
      %v229 = vshll.u32 %v219, 16
      %v231 = vrot.slane %v229, 1
      %v232 = vor.u32 %v227, %v231
      %v234 = vshll.u32 %v220, 16
      %v236 = vrot.slane %v234, 1
      %v237 = vsel %vm225, %v232, %v236
      %v238 = vshrl.u32 %v220, 16
      %v240 = vor.u32 %v238, %v236
      %v242 = vshll.u32 %v221, 16
      %v244 = vrot.slane %v242, 1
      %v245 = vsel %vm225, %v240, %v244
      %v246 = vshrl.u32 %v221, 16
      %v248 = vor.u32 %v246, %v244
      %v250 = vshll.u32 %v222, 16
      %v252 = vrot.slane %v250, 1
      %v253 = vsel %vm225, %v248, %v252
      %v254 = vshrl.u32 %v222, 16
      %v256 = vor.u32 %v254, %v252
      %v258 = vshll.u32 %v223, 16
      %v260 = vrot.slane %v258, 1
      %v261 = vsel %vm225, %v256, %v260
      %v262 = vshrl.u32 %v223, 16
      %v264 = vor.u32 %v262, %v260
      %v266 = vshll.u32 %v224, 16
      %v268 = vrot.slane %v266, 1
      %v269 = vsel %vm225, %v264, %v268
      %vm270 = vcmask 64512
      %v272 = vsel %vm270, %v237, 0
      %v275 = vsel %vm270, %v245, 0
      %v278 = vsel %vm270, %v253, 0
      %v281 = vsel %vm270, %v261, 0
      %v284 = vsel %vm270, %v269, 0
      %vm286 = vcmask 1043456
      %v288 = vsel %vm286, %v196, 0
      %290 = vmatprep.subr.bf16.mxu0 0
      %291 = vmatpush1.bf16.msra.mxu0 %v288
      %292 = vmatprep.subr.bf16.mxu0 0
      %293 = vmatpush1.bf16.msra.mxu0 0
      %294 = vmatprep.subr.bf16.mxu0 0
      %295 = vmatpush1.bf16.msra.mxu0 0
      %296 = vmatprep.subr.bf16.mxu0 0
      %297 = vmatpush1.bf16.msra.mxu0 0
      %298 = vmatprep.subr.bf16.mxu0 0
      %299 = vmatpush1.bf16.msra.mxu0 0
      %300 = vmatprep.subr.bf16.mxu0 0
      %301 = vmatpush1.bf16.msra.mxu0 0
      %302 = vmatprep.subr.bf16.mxu0 0
      %303 = vmatpush1.bf16.msra.mxu0 0
      %304 = vmatprep.subr.bf16.mxu0 0
      %305 = vmatpush1.bf16.msra.mxu0 0
      %306 = vmatprep.subr.bf16.mxu0 0
      %307 = vmatpush1.bf16.msra.mxu0 0
      %308 = vmatprep.subr.bf16.mxu0 0
      %309 = vmatpush1.bf16.msra.mxu0 0
      %310 = vmatprep.subr.bf16.mxu0 0
      %311 = vmatpush1.bf16.msra.mxu0 0
      %312 = vmatprep.subr.bf16.mxu0 0
      %313 = vmatpush1.bf16.msra.mxu0 0
      %314 = vmatprep.subr.bf16.mxu0 0
      %315 = vmatpush1.bf16.msra.mxu0 0
      %316 = vmatprep.subr.bf16.mxu0 0
      %317 = vmatpush1.bf16.msra.mxu0 0
      %318 = vmatprep.subr.bf16.mxu0 0
      %319 = vmatpush1.bf16.msra.mxu0 0
      %320 = vmatprep.subr.bf16.mxu0 0
      %321 = vmatpush1.bf16.msra.mxu0 0
      %322 = vmatprep.mubr.bf16.mxu0 0
      %323 = vmatmul.mubr.bf16.gmra.mrb[0].mxu0 %v272
      %v324 = vpop.f32.mrb[0].mxu0
      %v325 = vadd.f32 0.0, %v324
      %v326 = vpop.f32.mrb[0].mxu0
      %v327 = vpop.f32.mrb[0].mxu0
      %v328 = vadd.f32 0.0, %v327
      %v329 = vpop.f32.mrb[0].mxu0
      %330 = vmatprep.mubr.bf16.mxu0 0
      %331 = vmatmul.mubr.bf16.gmra.mrb[0].mxu0 %v275
      %v332 = vpop.f32.mrb[0].mxu0
      %v333 = vadd.f32 0.0, %v332
      %v334 = vpop.f32.mrb[0].mxu0
      %v335 = vpop.f32.mrb[0].mxu0
      %v336 = vadd.f32 0.0, %v335
      %v337 = vpop.f32.mrb[0].mxu0
      %338 = vmatprep.mubr.bf16.mxu0 0
      %339 = vmatmul.mubr.bf16.gmra.mrb[0].mxu0 %v278
      %v340 = vpop.f32.mrb[0].mxu0
      %v341 = vadd.f32 0.0, %v340
      %v342 = vpop.f32.mrb[0].mxu0
      %v343 = vpop.f32.mrb[0].mxu0
      %v344 = vadd.f32 0.0, %v343
      %v345 = vpop.f32.mrb[0].mxu0
      %346 = vmatprep.mubr.bf16.mxu0 0
      %347 = vmatmul.mubr.bf16.gmra.mrb[0].mxu0 %v281
      %v348 = vpop.f32.mrb[0].mxu0
      %v349 = vadd.f32 0.0, %v348
      %v350 = vpop.f32.mrb[0].mxu0
      %v351 = vpop.f32.mrb[0].mxu0
      %v352 = vadd.f32 0.0, %v351
      %v353 = vpop.f32.mrb[0].mxu0
      %354 = vmatprep.mubr.bf16.mxu0 0
      %355 = vmatmul.mubr.bf16.gmra.mrb[0].mxu0 %v284
      %v356 = vpop.f32.mrb[0].mxu0
      %v357 = vadd.f32 0.0, %v356
      %v358 = vpop.f32.mrb[0].mxu0
      %v359 = vpop.f32.mrb[0].mxu0
      %v360 = vadd.f32 0.0, %v359
      %v361 = vpop.f32.mrb[0].mxu0
      %362 = vdwg.mxu0
      %v363 = vsel %vm270, %v219, 0
      %v365 = vsel %vm270, %v220, 0
      %v367 = vsel %vm270, %v221, 0
      %v369 = vsel %vm270, %v222, 0
      %v371 = vsel %vm270, %v223, 0
      %v374 = vsel %vm286, %v193, 0
      %376 = vmatprep.subr.bf16.mxu0 0
      %377 = vmatpush1.bf16.msra.mxu0 %v374
      %378 = vmatprep.subr.bf16.mxu0 0
      %379 = vmatpush1.bf16.msra.mxu0 0
      %380 = vmatprep.subr.bf16.mxu0 0
      %381 = vmatpush1.bf16.msra.mxu0 0
      %382 = vmatprep.subr.bf16.mxu0 0
      %383 = vmatpush1.bf16.msra.mxu0 0
      %384 = vmatprep.subr.bf16.mxu0 0
      %385 = vmatpush1.bf16.msra.mxu0 0
      %386 = vmatprep.subr.bf16.mxu0 0
      %387 = vmatpush1.bf16.msra.mxu0 0
      %388 = vmatprep.subr.bf16.mxu0 0
      %389 = vmatpush1.bf16.msra.mxu0 0
      %390 = vmatprep.subr.bf16.mxu0 0
      %391 = vmatpush1.bf16.msra.mxu0 0
      %392 = vmatprep.subr.bf16.mxu0 0
      %393 = vmatpush1.bf16.msra.mxu0 0
      %394 = vmatprep.subr.bf16.mxu0 0
      %395 = vmatpush1.bf16.msra.mxu0 0
      %396 = vmatprep.subr.bf16.mxu0 0
      %397 = vmatpush1.bf16.msra.mxu0 0
      %398 = vmatprep.subr.bf16.mxu0 0
      %399 = vmatpush1.bf16.msra.mxu0 0
      %400 = vmatprep.subr.bf16.mxu0 0
      %401 = vmatpush1.bf16.msra.mxu0 0
      %402 = vmatprep.subr.bf16.mxu0 0
      %403 = vmatpush1.bf16.msra.mxu0 0
      %404 = vmatprep.subr.bf16.mxu0 0
      %405 = vmatpush1.bf16.msra.mxu0 0
      %406 = vmatprep.subr.bf16.mxu0 0
      %407 = vmatpush1.bf16.msra.mxu0 0
      %408 = vmatprep.mubr.bf16.mxu0 0
      %409 = vmatmul.mubr.bf16.gmra.mrb[0].mxu0 %v363
      %v410 = vpop.f32.mrb[0].mxu0
      %v411 = vadd.f32 %v325, %v410
      %v412 = vpop.f32.mrb[0].mxu0
      %v413 = vpop.f32.mrb[0].mxu0
      %v414 = vadd.f32 %v328, %v413
      %v415 = vpop.f32.mrb[0].mxu0
      %416 = vmatprep.mubr.bf16.mxu0 0
      %417 = vmatmul.mubr.bf16.gmra.mrb[0].mxu0 %v365
      %v418 = vpop.f32.mrb[0].mxu0
      %v419 = vadd.f32 %v333, %v418
      %v420 = vpop.f32.mrb[0].mxu0
      %v421 = vpop.f32.mrb[0].mxu0
      %v422 = vadd.f32 %v336, %v421
      %v423 = vpop.f32.mrb[0].mxu0
      %424 = vmatprep.mubr.bf16.mxu0 0
      %425 = vmatmul.mubr.bf16.gmra.mrb[0].mxu0 %v367
      %v426 = vpop.f32.mrb[0].mxu0
      %v427 = vadd.f32 %v341, %v426
      %v428 = vpop.f32.mrb[0].mxu0
      %v429 = vpop.f32.mrb[0].mxu0
      %v430 = vadd.f32 %v344, %v429
      %v431 = vpop.f32.mrb[0].mxu0
      %432 = vmatprep.mubr.bf16.mxu0 0
      %433 = vmatmul.mubr.bf16.gmra.mrb[0].mxu0 %v369
      %v434 = vpop.f32.mrb[0].mxu0
      %v435 = vadd.f32 %v349, %v434
      %v436 = vpop.f32.mrb[0].mxu0
      %v437 = vpop.f32.mrb[0].mxu0
      %v438 = vadd.f32 %v352, %v437
      %v439 = vpop.f32.mrb[0].mxu0
      %440 = vmatprep.mubr.bf16.mxu0 0
      %441 = vmatmul.mubr.bf16.gmra.mrb[0].mxu0 %v371
      %v442 = vpop.f32.mrb[0].mxu0
      %v443 = vadd.f32 %v357, %v442
      %v444 = vpop.f32.mrb[0].mxu0
      %v445 = vpop.f32.mrb[0].mxu0
      %v446 = vadd.f32 %v360, %v445
      %v447 = vpop.f32.mrb[0].mxu0
      %448 = vdwg.mxu0
      %v449 = vld [vmem:[%s172] sm:$0xe]
      %s450 = scalar_lea.vmem %s1, 8
      %v451 = vld [vmem:[%s450] sm:$0xf]
      %v453 = vunpack.c.l.b16 %v449
      %v454 = vpack.c.b16 %v209, %v453
      %vm455 = vcmask 1046528
      %v456 = vrot.slane %v454, 1
      %v457 = vrot.slane %v220, 1
      %v458 = vsel %vm455, %v456, %v457
      %v459 = vrot.slane %v221, 1
      %v460 = vsel %vm455, %v457, %v459
      %v461 = vrot.slane %v222, 1
      %v462 = vsel %vm455, %v459, %v461
      %v463 = vrot.slane %v223, 1
      %v464 = vsel %vm455, %v461, %v463
      %v465 = vrot.slane %v224, 1
      %v466 = vsel %vm455, %v463, %v465
      %v468 = vsel %vm270, %v458, 0
      %v471 = vsel %vm270, %v460, 0
      %v474 = vsel %vm270, %v462, 0
      %v477 = vsel %vm270, %v464, 0
      %v480 = vsel %vm270, %v466, 0
      %v483 = vsel %vm286, %v451, 0
      %485 = vmatprep.subr.bf16.mxu0 0
      %486 = vmatpush1.bf16.msra.mxu0 %v483
      %487 = vmatprep.subr.bf16.mxu0 0
      %488 = vmatpush1.bf16.msra.mxu0 0
      %489 = vmatprep.subr.bf16.mxu0 0
      %490 = vmatpush1.bf16.msra.mxu0 0
      %491 = vmatprep.subr.bf16.mxu0 0
      %492 = vmatpush1.bf16.msra.mxu0 0
      %493 = vmatprep.subr.bf16.mxu0 0
      %494 = vmatpush1.bf16.msra.mxu0 0
      %495 = vmatprep.subr.bf16.mxu0 0
      %496 = vmatpush1.bf16.msra.mxu0 0
      %497 = vmatprep.subr.bf16.mxu0 0
      %498 = vmatpush1.bf16.msra.mxu0 0
      %499 = vmatprep.subr.bf16.mxu0 0
      %500 = vmatpush1.bf16.msra.mxu0 0
      %501 = vmatprep.subr.bf16.mxu0 0
      %502 = vmatpush1.bf16.msra.mxu0 0
      %503 = vmatprep.subr.bf16.mxu0 0
      %504 = vmatpush1.bf16.msra.mxu0 0
      %505 = vmatprep.subr.bf16.mxu0 0
      %506 = vmatpush1.bf16.msra.mxu0 0
      %507 = vmatprep.subr.bf16.mxu0 0
      %508 = vmatpush1.bf16.msra.mxu0 0
      %509 = vmatprep.subr.bf16.mxu0 0
      %510 = vmatpush1.bf16.msra.mxu0 0
      %511 = vmatprep.subr.bf16.mxu0 0
      %512 = vmatpush1.bf16.msra.mxu0 0
      %513 = vmatprep.subr.bf16.mxu0 0
      %514 = vmatpush1.bf16.msra.mxu0 0
      %515 = vmatprep.subr.bf16.mxu0 0
      %516 = vmatpush1.bf16.msra.mxu0 0
      %517 = vmatprep.mubr.bf16.mxu0 0
      %518 = vmatmul.mubr.bf16.gmra.mrb[0].mxu0 %v468
      %v519 = vpop.f32.mrb[0].mxu0
      %v520 = vadd.f32 0.0, %v519
      %v521 = vpop.f32.mrb[0].mxu0
      %v522 = vpop.f32.mrb[0].mxu0
      %v523 = vadd.f32 0.0, %v522
      %v524 = vpop.f32.mrb[0].mxu0
      %525 = vmatprep.mubr.bf16.mxu0 0
      %526 = vmatmul.mubr.bf16.gmra.mrb[0].mxu0 %v471
      %v527 = vpop.f32.mrb[0].mxu0
      %v528 = vadd.f32 0.0, %v527
      %v529 = vpop.f32.mrb[0].mxu0
      %v530 = vpop.f32.mrb[0].mxu0
      %v531 = vadd.f32 0.0, %v530
      %v532 = vpop.f32.mrb[0].mxu0
      %533 = vmatprep.mubr.bf16.mxu0 0
      %534 = vmatmul.mubr.bf16.gmra.mrb[0].mxu0 %v474
      %v535 = vpop.f32.mrb[0].mxu0
      %v536 = vadd.f32 0.0, %v535
      %v537 = vpop.f32.mrb[0].mxu0
      %v538 = vpop.f32.mrb[0].mxu0
      %v539 = vadd.f32 0.0, %v538
      %v540 = vpop.f32.mrb[0].mxu0
      %541 = vmatprep.mubr.bf16.mxu0 0
      %542 = vmatmul.mubr.bf16.gmra.mrb[0].mxu0 %v477
      %v543 = vpop.f32.mrb[0].mxu0
      %v544 = vadd.f32 0.0, %v543
      %v545 = vpop.f32.mrb[0].mxu0
      %v546 = vpop.f32.mrb[0].mxu0
      %v547 = vadd.f32 0.0, %v546
      %v548 = vpop.f32.mrb[0].mxu0
      %549 = vmatprep.mubr.bf16.mxu0 0
      %550 = vmatmul.mubr.bf16.gmra.mrb[0].mxu0 %v480
      %v551 = vpop.f32.mrb[0].mxu0
      %v552 = vadd.f32 0.0, %v551
      %v553 = vpop.f32.mrb[0].mxu0
      %v554 = vpop.f32.mrb[0].mxu0
      %v555 = vadd.f32 0.0, %v554
      %v556 = vpop.f32.mrb[0].mxu0
      %557 = vdwg.mxu0
      %v558 = vadd.f32 %v411, %v520
      %v559 = vadd.f32 %v414, %v523
      %v560 = vadd.f32 %v419, %v528
      %v561 = vadd.f32 %v422, %v531
      %v562 = vadd.f32 %v427, %v536
      %v563 = vadd.f32 %v430, %v539
      %v564 = vadd.f32 %v435, %v544
      %v565 = vadd.f32 %v438, %v547
      %v566 = vadd.f32 %v443, %v552
      %v567 = vadd.f32 %v446, %v555
      %v568 = vld [vmem:[%s172 + $0x4] sm:$0xe]
      %v569 = vld [vmem:[%s172 + $0x8] sm:$0xf]
      %v570 = vld [vmem:[%s172 + $0xc] sm:$0xf]
      %v571 = vld [vmem:[%s172 + $0x10] sm:$0xf]
      %v572 = vld [vmem:[%s172 + $0x14] sm:$0xf]
      %v573 = vld [vmem:[%s172 + $0x18] sm:$0xf]
      %v574 = vld [vmem:[%s172 + $0x1c] sm:$0xf]
      %v575 = vld [vmem:[%s172 + $0x20] sm:$0xf]
      %v576 = vld [vmem:[%s172 + $0x24] sm:$0xf]
      %v577 = vld [vmem:[%s172 + $0x28] sm:$0xf]
      %v578 = vld [vmem:[%s172 + $0x2c] sm:$0x1]
      %s579 = scalar_lea.vmem %s1, 12
      %v580 = vld [vmem:[%s579] sm:$0xf]
      %v592 = vunpack.c.l.b16 %v568
      %v593 = vunpack.c.l.b16 %v569
      %v594 = vunpack.c.l.b16 %v570
      %v595 = vunpack.c.l.b16 %v571
      %v596 = vunpack.c.l.b16 %v572
      %v597 = vunpack.c.l.b16 %v573
      %v598 = vunpack.c.l.b16 %v574
      %v599 = vunpack.c.l.b16 %v575
      %v600 = vunpack.c.l.b16 %v576
      %v601 = vunpack.c.l.b16 %v577
      %v602 = vunpack.c.l.b16 %v578
      %v603 = vpack.c.b16 %v593, %v592
      %v604 = vpack.c.b16 %v595, %v594
      %v605 = vpack.c.b16 %v597, %v596
      %v606 = vpack.c.b16 %v599, %v598
      %v607 = vpack.c.b16 %v601, %v600
      %v608 = vpack.c.b16 %v602, %v602
      %v609 = vrot.slane %v603, 1
      %v610 = vrot.slane %v604, 1
      %v611 = vsel %vm455, %v609, %v610
      %v612 = vrot.slane %v605, 1
      %v613 = vsel %vm455, %v610, %v612
      %v614 = vrot.slane %v606, 1
      %v615 = vsel %vm455, %v612, %v614
      %v616 = vrot.slane %v607, 1
      %v617 = vsel %vm455, %v614, %v616
      %v618 = vrot.slane %v608, 1
      %v619 = vsel %vm455, %v616, %v618
      %v621 = vsel %vm270, %v611, 0
      %v624 = vsel %vm270, %v613, 0
      %v627 = vsel %vm270, %v615, 0
      %v630 = vsel %vm270, %v617, 0
      %v633 = vsel %vm270, %v619, 0
      %v636 = vsel %vm286, %v580, 0
      %638 = vmatprep.subr.bf16.mxu0 0
      %639 = vmatpush1.bf16.msra.mxu0 %v636
      %640 = vmatprep.subr.bf16.mxu0 0
      %641 = vmatpush1.bf16.msra.mxu0 0
      %642 = vmatprep.subr.bf16.mxu0 0
      %643 = vmatpush1.bf16.msra.mxu0 0
      %644 = vmatprep.subr.bf16.mxu0 0
      %645 = vmatpush1.bf16.msra.mxu0 0
      %646 = vmatprep.subr.bf16.mxu0 0
      %647 = vmatpush1.bf16.msra.mxu0 0
      %648 = vmatprep.subr.bf16.mxu0 0
      %649 = vmatpush1.bf16.msra.mxu0 0
      %650 = vmatprep.subr.bf16.mxu0 0
      %651 = vmatpush1.bf16.msra.mxu0 0
      %652 = vmatprep.subr.bf16.mxu0 0
      %653 = vmatpush1.bf16.msra.mxu0 0
      %654 = vmatprep.subr.bf16.mxu0 0
      %655 = vmatpush1.bf16.msra.mxu0 0
      %656 = vmatprep.subr.bf16.mxu0 0
      %657 = vmatpush1.bf16.msra.mxu0 0
      %658 = vmatprep.subr.bf16.mxu0 0
      %659 = vmatpush1.bf16.msra.mxu0 0
      %660 = vmatprep.subr.bf16.mxu0 0
      %661 = vmatpush1.bf16.msra.mxu0 0
      %662 = vmatprep.subr.bf16.mxu0 0
      %663 = vmatpush1.bf16.msra.mxu0 0
      %664 = vmatprep.subr.bf16.mxu0 0
      %665 = vmatpush1.bf16.msra.mxu0 0
      %666 = vmatprep.subr.bf16.mxu0 0
      %667 = vmatpush1.bf16.msra.mxu0 0
      %668 = vmatprep.subr.bf16.mxu0 0
      %669 = vmatpush1.bf16.msra.mxu0 0
      %670 = vmatprep.mubr.bf16.mxu0 0
      %671 = vmatmul.mubr.bf16.gmra.mrb[0].mxu0 %v621
      %v672 = vpop.f32.mrb[0].mxu0
      %v673 = vadd.f32 0.0, %v672
      %v674 = vpop.f32.mrb[0].mxu0
      %v675 = vpop.f32.mrb[0].mxu0
      %v676 = vadd.f32 0.0, %v675
      %v677 = vpop.f32.mrb[0].mxu0
      %678 = vmatprep.mubr.bf16.mxu0 0
      %679 = vmatmul.mubr.bf16.gmra.mrb[0].mxu0 %v624
      %v680 = vpop.f32.mrb[0].mxu0
      %v681 = vadd.f32 0.0, %v680
      %v682 = vpop.f32.mrb[0].mxu0
      %v683 = vpop.f32.mrb[0].mxu0
      %v684 = vadd.f32 0.0, %v683
      %v685 = vpop.f32.mrb[0].mxu0
      %686 = vmatprep.mubr.bf16.mxu0 0
      %687 = vmatmul.mubr.bf16.gmra.mrb[0].mxu0 %v627
      %v688 = vpop.f32.mrb[0].mxu0
      %v689 = vadd.f32 0.0, %v688
      %v690 = vpop.f32.mrb[0].mxu0
      %v691 = vpop.f32.mrb[0].mxu0
      %v692 = vadd.f32 0.0, %v691
      %v693 = vpop.f32.mrb[0].mxu0
      %694 = vmatprep.mubr.bf16.mxu0 0
      %695 = vmatmul.mubr.bf16.gmra.mrb[0].mxu0 %v630
      %v696 = vpop.f32.mrb[0].mxu0
      %v697 = vadd.f32 0.0, %v696
      %v698 = vpop.f32.mrb[0].mxu0
      %v699 = vpop.f32.mrb[0].mxu0
      %v700 = vadd.f32 0.0, %v699
      %v701 = vpop.f32.mrb[0].mxu0
      %702 = vmatprep.mubr.bf16.mxu0 0
      %703 = vmatmul.mubr.bf16.gmra.mrb[0].mxu0 %v633
      %v704 = vpop.f32.mrb[0].mxu0
      %v705 = vadd.f32 0.0, %v704
      %v706 = vpop.f32.mrb[0].mxu0
      %v707 = vpop.f32.mrb[0].mxu0
      %v708 = vadd.f32 0.0, %v707
      %v709 = vpop.f32.mrb[0].mxu0
      %710 = vdwg.mxu0
      %v711 = vadd.f32 %v558, %v673
      %v712 = vadd.f32 %v559, %v676
      %v713 = vadd.f32 %v560, %v681
      %v714 = vadd.f32 %v561, %v684
      %v715 = vadd.f32 %v562, %v689
      %v716 = vadd.f32 %v563, %v692
      %v717 = vadd.f32 %v564, %v697
      %v718 = vadd.f32 %v565, %v700
      %v719 = vadd.f32 %v566, %v705
      %v720 = vadd.f32 %v567, %v708
      %v721 = vld [vmem:[%s172 + $0x2c] sm:$0x3]
      %s722 = scalar_lea.vmem %s1, 16
      %v723 = vld [vmem:[%s722] sm:$0xf]
      %v725 = vunpack.c.l.b16 %v721
      %v726 = vpack.c.b16 %v725, %v725
      %vm727 = vsmask.f32 6400
      %v729 = vshrl.u32 %v603, 16
      %v731 = vrot.slane %v729, 1
      %v732 = vshll.u32 %v603, 16
      %v734 = vrot.slane %v732, 2
      %v735 = vor.u32 %v731, %v734
      %v737 = vshrl.u32 %v604, 16
      %v739 = vrot.slane %v737, 1
      %v740 = vshll.u32 %v604, 16
      %v742 = vrot.slane %v740, 2
      %v743 = vor.u32 %v739, %v742
      %v744 = vsel %vm727, %v735, %v743
      %v746 = vshrl.u32 %v605, 16
      %v748 = vrot.slane %v746, 1
      %v749 = vshll.u32 %v605, 16
      %v751 = vrot.slane %v749, 2
      %v752 = vor.u32 %v748, %v751
      %v753 = vsel %vm727, %v743, %v752
      %v755 = vshrl.u32 %v606, 16
      %v757 = vrot.slane %v755, 1
      %v758 = vshll.u32 %v606, 16
      %v760 = vrot.slane %v758, 2
      %v761 = vor.u32 %v757, %v760
      %v762 = vsel %vm727, %v752, %v761
      %v764 = vshrl.u32 %v607, 16
      %v766 = vrot.slane %v764, 1
      %v767 = vshll.u32 %v607, 16
      %v769 = vrot.slane %v767, 2
      %v770 = vor.u32 %v766, %v769
      %v771 = vsel %vm727, %v761, %v770
      %v773 = vshrl.u32 %v726, 16
      %v775 = vrot.slane %v773, 1
      %v776 = vshll.u32 %v726, 16
      %v778 = vrot.slane %v776, 2
      %v779 = vor.u32 %v775, %v778
      %v780 = vsel %vm727, %v770, %v779
      %v782 = vsel %vm270, %v744, 0
      %v785 = vsel %vm270, %v753, 0
      %v788 = vsel %vm270, %v762, 0
      %v791 = vsel %vm270, %v771, 0
      %v794 = vsel %vm270, %v780, 0
      %v797 = vsel %vm286, %v723, 0
      %799 = vmatprep.subr.bf16.mxu0 0
      %800 = vmatpush1.bf16.msra.mxu0 %v797
      %801 = vmatprep.subr.bf16.mxu0 0
      %802 = vmatpush1.bf16.msra.mxu0 0
      %803 = vmatprep.subr.bf16.mxu0 0
      %804 = vmatpush1.bf16.msra.mxu0 0
      %805 = vmatprep.subr.bf16.mxu0 0
      %806 = vmatpush1.bf16.msra.mxu0 0
      %807 = vmatprep.subr.bf16.mxu0 0
      %808 = vmatpush1.bf16.msra.mxu0 0
      %809 = vmatprep.subr.bf16.mxu0 0
      %810 = vmatpush1.bf16.msra.mxu0 0
      %811 = vmatprep.subr.bf16.mxu0 0
      %812 = vmatpush1.bf16.msra.mxu0 0
      %813 = vmatprep.subr.bf16.mxu0 0
      %814 = vmatpush1.bf16.msra.mxu0 0
      %815 = vmatprep.subr.bf16.mxu0 0
      %816 = vmatpush1.bf16.msra.mxu0 0
      %817 = vmatprep.subr.bf16.mxu0 0
      %818 = vmatpush1.bf16.msra.mxu0 0
      %819 = vmatprep.subr.bf16.mxu0 0
      %820 = vmatpush1.bf16.msra.mxu0 0
      %821 = vmatprep.subr.bf16.mxu0 0
      %822 = vmatpush1.bf16.msra.mxu0 0
      %823 = vmatprep.subr.bf16.mxu0 0
      %824 = vmatpush1.bf16.msra.mxu0 0
      %825 = vmatprep.subr.bf16.mxu0 0
      %826 = vmatpush1.bf16.msra.mxu0 0
      %827 = vmatprep.subr.bf16.mxu0 0
      %828 = vmatpush1.bf16.msra.mxu0 0
      %829 = vmatprep.subr.bf16.mxu0 0
      %830 = vmatpush1.bf16.msra.mxu0 0
      %831 = vmatprep.mubr.bf16.mxu0 0
      %832 = vmatmul.mubr.bf16.gmra.mrb[0].mxu0 %v782
      %v833 = vpop.f32.mrb[0].mxu0
      %v834 = vadd.f32 0.0, %v833
      %v835 = vpop.f32.mrb[0].mxu0
      %v836 = vpop.f32.mrb[0].mxu0
      %v837 = vadd.f32 0.0, %v836
      %v838 = vpop.f32.mrb[0].mxu0
      %839 = vmatprep.mubr.bf16.mxu0 0
      %840 = vmatmul.mubr.bf16.gmra.mrb[0].mxu0 %v785
      %v841 = vpop.f32.mrb[0].mxu0
      %v842 = vadd.f32 0.0, %v841
      %v843 = vpop.f32.mrb[0].mxu0
      %v844 = vpop.f32.mrb[0].mxu0
      %v845 = vadd.f32 0.0, %v844
      %v846 = vpop.f32.mrb[0].mxu0
      %847 = vmatprep.mubr.bf16.mxu0 0
      %848 = vmatmul.mubr.bf16.gmra.mrb[0].mxu0 %v788
      %v849 = vpop.f32.mrb[0].mxu0
      %v850 = vadd.f32 0.0, %v849
      %v851 = vpop.f32.mrb[0].mxu0
      %v852 = vpop.f32.mrb[0].mxu0
      %v853 = vadd.f32 0.0, %v852
      %v854 = vpop.f32.mrb[0].mxu0
      %855 = vmatprep.mubr.bf16.mxu0 0
      %856 = vmatmul.mubr.bf16.gmra.mrb[0].mxu0 %v791
      %v857 = vpop.f32.mrb[0].mxu0
      %v858 = vadd.f32 0.0, %v857
      %v859 = vpop.f32.mrb[0].mxu0
      %v860 = vpop.f32.mrb[0].mxu0
      %v861 = vadd.f32 0.0, %v860
      %v862 = vpop.f32.mrb[0].mxu0
      %863 = vmatprep.mubr.bf16.mxu0 0
      %864 = vmatmul.mubr.bf16.gmra.mrb[0].mxu0 %v794
      %v865 = vpop.f32.mrb[0].mxu0
      %v866 = vadd.f32 0.0, %v865
      %v867 = vpop.f32.mrb[0].mxu0
      %v868 = vpop.f32.mrb[0].mxu0
      %v869 = vadd.f32 0.0, %v868
      %v870 = vpop.f32.mrb[0].mxu0
      %871 = vdwg.mxu0
      %v872 = vadd.f32 %v711, %v834
      %v873 = vadd.f32 %v712, %v837
      %v874 = vadd.f32 %v713, %v842
      %v875 = vadd.f32 %v714, %v845
      %v876 = vadd.f32 %v715, %v850
      %v877 = vadd.f32 %v716, %v853
      %v878 = vadd.f32 %v717, %v858
      %v879 = vadd.f32 %v718, %v861
      %v880 = vadd.f32 %v719, %v866
      %v881 = vadd.f32 %v720, %v869
      %v882 = vld [vmem:[%s172 + $0x4] sm:$0xc]
      %s883 = scalar_lea.vmem %s1, 20
      %v884 = vld [vmem:[%s883] sm:$0xf]
      %v886 = vunpack.c.l.b16 %v882
      %v887 = vpack.c.b16 %v593, %v886
      %vm888 = vcmask 1045504
      %v889 = vrot.slane %v887, 2
      %v890 = vrot.slane %v604, 2
      %v891 = vsel %vm888, %v889, %v890
      %v892 = vrot.slane %v605, 2
      %v893 = vsel %vm888, %v890, %v892
      %v894 = vrot.slane %v606, 2
      %v895 = vsel %vm888, %v892, %v894
      %v896 = vrot.slane %v607, 2
      %v897 = vsel %vm888, %v894, %v896
      %v898 = vrot.slane %v726, 2
      %v899 = vsel %vm888, %v896, %v898
      %v901 = vsel %vm270, %v891, 0
      %v904 = vsel %vm270, %v893, 0
      %v907 = vsel %vm270, %v895, 0
      %v910 = vsel %vm270, %v897, 0
      %v913 = vsel %vm270, %v899, 0
      %v916 = vsel %vm286, %v884, 0
      %918 = vmatprep.subr.bf16.mxu0 0
      %919 = vmatpush1.bf16.msra.mxu0 %v916
      %920 = vmatprep.subr.bf16.mxu0 0
      %921 = vmatpush1.bf16.msra.mxu0 0
      %922 = vmatprep.subr.bf16.mxu0 0
      %923 = vmatpush1.bf16.msra.mxu0 0
      %924 = vmatprep.subr.bf16.mxu0 0
      %925 = vmatpush1.bf16.msra.mxu0 0
      %926 = vmatprep.subr.bf16.mxu0 0
      %927 = vmatpush1.bf16.msra.mxu0 0
      %928 = vmatprep.subr.bf16.mxu0 0
      %929 = vmatpush1.bf16.msra.mxu0 0
      %930 = vmatprep.subr.bf16.mxu0 0
      %931 = vmatpush1.bf16.msra.mxu0 0
      %932 = vmatprep.subr.bf16.mxu0 0
      %933 = vmatpush1.bf16.msra.mxu0 0
      %934 = vmatprep.subr.bf16.mxu0 0
      %935 = vmatpush1.bf16.msra.mxu0 0
      %936 = vmatprep.subr.bf16.mxu0 0
      %937 = vmatpush1.bf16.msra.mxu0 0
      %938 = vmatprep.subr.bf16.mxu0 0
      %939 = vmatpush1.bf16.msra.mxu0 0
      %940 = vmatprep.subr.bf16.mxu0 0
      %941 = vmatpush1.bf16.msra.mxu0 0
      %942 = vmatprep.subr.bf16.mxu0 0
      %943 = vmatpush1.bf16.msra.mxu0 0
      %944 = vmatprep.subr.bf16.mxu0 0
      %945 = vmatpush1.bf16.msra.mxu0 0
      %946 = vmatprep.subr.bf16.mxu0 0
      %947 = vmatpush1.bf16.msra.mxu0 0
      %948 = vmatprep.subr.bf16.mxu0 0
      %949 = vmatpush1.bf16.msra.mxu0 0
      %950 = vmatprep.mubr.bf16.mxu0 0
      %951 = vmatmul.mubr.bf16.gmra.mrb[0].mxu0 %v901
      %v952 = vpop.f32.mrb[0].mxu0
      %v953 = vadd.f32 0.0, %v952
      %v954 = vpop.f32.mrb[0].mxu0
      %v955 = vpop.f32.mrb[0].mxu0
      %v956 = vadd.f32 0.0, %v955
      %v957 = vpop.f32.mrb[0].mxu0
      %958 = vmatprep.mubr.bf16.mxu0 0
      %959 = vmatmul.mubr.bf16.gmra.mrb[0].mxu0 %v904
      %v960 = vpop.f32.mrb[0].mxu0
      %v961 = vadd.f32 0.0, %v960
      %v962 = vpop.f32.mrb[0].mxu0
      %v963 = vpop.f32.mrb[0].mxu0
      %v964 = vadd.f32 0.0, %v963
      %v965 = vpop.f32.mrb[0].mxu0
      %966 = vmatprep.mubr.bf16.mxu0 0
      %967 = vmatmul.mubr.bf16.gmra.mrb[0].mxu0 %v907
      %v968 = vpop.f32.mrb[0].mxu0
      %v969 = vadd.f32 0.0, %v968
      %v970 = vpop.f32.mrb[0].mxu0
      %v971 = vpop.f32.mrb[0].mxu0
      %v972 = vadd.f32 0.0, %v971
      %v973 = vpop.f32.mrb[0].mxu0
      %974 = vmatprep.mubr.bf16.mxu0 0
      %975 = vmatmul.mubr.bf16.gmra.mrb[0].mxu0 %v910
      %v976 = vpop.f32.mrb[0].mxu0
      %v977 = vadd.f32 0.0, %v976
      %v978 = vpop.f32.mrb[0].mxu0
      %v979 = vpop.f32.mrb[0].mxu0
      %v980 = vadd.f32 0.0, %v979
      %v981 = vpop.f32.mrb[0].mxu0
      %982 = vmatprep.mubr.bf16.mxu0 0
      %983 = vmatmul.mubr.bf16.gmra.mrb[0].mxu0 %v913
      %v984 = vpop.f32.mrb[0].mxu0
      %v985 = vadd.f32 0.0, %v984
      %v986 = vpop.f32.mrb[0].mxu0
      %v987 = vpop.f32.mrb[0].mxu0
      %v988 = vadd.f32 0.0, %v987
      %v989 = vpop.f32.mrb[0].mxu0
      %990 = vdwg.mxu0
      %v991 = vadd.f32 %v872, %v953
      %v992 = vadd.f32 %v873, %v956
      %v993 = vadd.f32 %v874, %v961
      %v994 = vadd.f32 %v875, %v964
      %v995 = vadd.f32 %v876, %v969
      %v996 = vadd.f32 %v877, %v972
      %v997 = vadd.f32 %v878, %v977
      %v998 = vadd.f32 %v879, %v980
      %v999 = vadd.f32 %v880, %v985
      %v1000 = vadd.f32 %v881, %v988
      %v1001 = vld [vmem:[%s172 + $0x8] sm:$0xc]
      %v1002 = vld [vmem:[%s172 + $0xc] sm:$0xf]
      %v1003 = vld [vmem:[%s172 + $0x10] sm:$0xf]
      %v1004 = vld [vmem:[%s172 + $0x14] sm:$0xf]
      %v1005 = vld [vmem:[%s172 + $0x18] sm:$0xf]
      %v1006 = vld [vmem:[%s172 + $0x1c] sm:$0xf]
      %v1007 = vld [vmem:[%s172 + $0x20] sm:$0xf]
      %v1008 = vld [vmem:[%s172 + $0x24] sm:$0xf]
      %v1009 = vld [vmem:[%s172 + $0x28] sm:$0xf]
      %v1010 = vld [vmem:[%s172 + $0x2c] sm:$0xf]
      %v1011 = vld [vmem:[%s172 + $0x30] sm:$0x3]
      %s1012 = scalar_lea.vmem %s1, 24
      %v1013 = vld [vmem:[%s1012] sm:$0xf]
      %v1025 = vunpack.c.l.b16 %v1001
      %v1026 = vunpack.c.l.b16 %v1002
      %v1027 = vunpack.c.l.b16 %v1003
      %v1028 = vunpack.c.l.b16 %v1004
      %v1029 = vunpack.c.l.b16 %v1005
      %v1030 = vunpack.c.l.b16 %v1006
      %v1031 = vunpack.c.l.b16 %v1007
      %v1032 = vunpack.c.l.b16 %v1008
      %v1033 = vunpack.c.l.b16 %v1009
      %v1034 = vunpack.c.l.b16 %v1010
      %v1035 = vunpack.c.l.b16 %v1011
      %v1036 = vpack.c.b16 %v1026, %v1025
      %v1037 = vpack.c.b16 %v1028, %v1027
      %v1038 = vpack.c.b16 %v1030, %v1029
      %v1039 = vpack.c.b16 %v1032, %v1031
      %v1040 = vpack.c.b16 %v1034, %v1033
      %v1041 = vpack.c.b16 %v1035, %v1035
      %v1042 = vrot.slane %v1036, 2
      %v1043 = vrot.slane %v1037, 2
      %v1044 = vsel %vm888, %v1042, %v1043
      %v1045 = vrot.slane %v1038, 2
      %v1046 = vsel %vm888, %v1043, %v1045
      %v1047 = vrot.slane %v1039, 2
      %v1048 = vsel %vm888, %v1045, %v1047
      %v1049 = vrot.slane %v1040, 2
      %v1050 = vsel %vm888, %v1047, %v1049
      %v1051 = vrot.slane %v1041, 2
      %v1052 = vsel %vm888, %v1049, %v1051
      %v1054 = vsel %vm270, %v1044, 0
      %v1057 = vsel %vm270, %v1046, 0
      %v1060 = vsel %vm270, %v1048, 0
      %v1063 = vsel %vm270, %v1050, 0
      %v1066 = vsel %vm270, %v1052, 0
      %v1069 = vsel %vm286, %v1013, 0
      %1071 = vmatprep.subr.bf16.mxu0 0
      %1072 = vmatpush1.bf16.msra.mxu0 %v1069
      %1073 = vmatprep.subr.bf16.mxu0 0
      %1074 = vmatpush1.bf16.msra.mxu0 0
      %1075 = vmatprep.subr.bf16.mxu0 0
      %1076 = vmatpush1.bf16.msra.mxu0 0
      %1077 = vmatprep.subr.bf16.mxu0 0
      %1078 = vmatpush1.bf16.msra.mxu0 0
      %1079 = vmatprep.subr.bf16.mxu0 0
      %1080 = vmatpush1.bf16.msra.mxu0 0
      %1081 = vmatprep.subr.bf16.mxu0 0
      %1082 = vmatpush1.bf16.msra.mxu0 0
      %1083 = vmatprep.subr.bf16.mxu0 0
      %1084 = vmatpush1.bf16.msra.mxu0 0
      %1085 = vmatprep.subr.bf16.mxu0 0
      %1086 = vmatpush1.bf16.msra.mxu0 0
      %1087 = vmatprep.subr.bf16.mxu0 0
      %1088 = vmatpush1.bf16.msra.mxu0 0
      %1089 = vmatprep.subr.bf16.mxu0 0
      %1090 = vmatpush1.bf16.msra.mxu0 0
      %1091 = vmatprep.subr.bf16.mxu0 0
      %1092 = vmatpush1.bf16.msra.mxu0 0
      %1093 = vmatprep.subr.bf16.mxu0 0
      %1094 = vmatpush1.bf16.msra.mxu0 0
      %1095 = vmatprep.subr.bf16.mxu0 0
      %1096 = vmatpush1.bf16.msra.mxu0 0
      %1097 = vmatprep.subr.bf16.mxu0 0
      %1098 = vmatpush1.bf16.msra.mxu0 0
      %1099 = vmatprep.subr.bf16.mxu0 0
      %1100 = vmatpush1.bf16.msra.mxu0 0
      %1101 = vmatprep.subr.bf16.mxu0 0
      %1102 = vmatpush1.bf16.msra.mxu0 0
      %1103 = vmatprep.mubr.bf16.mxu0 0
      %1104 = vmatmul.mubr.bf16.gmra.mrb[0].mxu0 %v1054
      %v1105 = vpop.f32.mrb[0].mxu0
      %v1106 = vadd.f32 0.0, %v1105
      %v1107 = vpop.f32.mrb[0].mxu0
      %v1108 = vpop.f32.mrb[0].mxu0
      %v1109 = vadd.f32 0.0, %v1108
      %v1110 = vpop.f32.mrb[0].mxu0
      %1111 = vmatprep.mubr.bf16.mxu0 0
      %1112 = vmatmul.mubr.bf16.gmra.mrb[0].mxu0 %v1057
      %v1113 = vpop.f32.mrb[0].mxu0
      %v1114 = vadd.f32 0.0, %v1113
      %v1115 = vpop.f32.mrb[0].mxu0
      %v1116 = vpop.f32.mrb[0].mxu0
      %v1117 = vadd.f32 0.0, %v1116
      %v1118 = vpop.f32.mrb[0].mxu0
      %1119 = vmatprep.mubr.bf16.mxu0 0
      %1120 = vmatmul.mubr.bf16.gmra.mrb[0].mxu0 %v1060
      %v1121 = vpop.f32.mrb[0].mxu0
      %v1122 = vadd.f32 0.0, %v1121
      %v1123 = vpop.f32.mrb[0].mxu0
      %v1124 = vpop.f32.mrb[0].mxu0
      %v1125 = vadd.f32 0.0, %v1124
      %v1126 = vpop.f32.mrb[0].mxu0
      %1127 = vmatprep.mubr.bf16.mxu0 0
      %1128 = vmatmul.mubr.bf16.gmra.mrb[0].mxu0 %v1063
      %v1129 = vpop.f32.mrb[0].mxu0
      %v1130 = vadd.f32 0.0, %v1129
      %v1131 = vpop.f32.mrb[0].mxu0
      %v1132 = vpop.f32.mrb[0].mxu0
      %v1133 = vadd.f32 0.0, %v1132
      %v1134 = vpop.f32.mrb[0].mxu0
      %1135 = vmatprep.mubr.bf16.mxu0 0
      %1136 = vmatmul.mubr.bf16.gmra.mrb[0].mxu0 %v1066
      %v1137 = vpop.f32.mrb[0].mxu0
      %v1138 = vadd.f32 0.0, %v1137
      %v1139 = vpop.f32.mrb[0].mxu0
      %v1140 = vpop.f32.mrb[0].mxu0
      %v1141 = vadd.f32 0.0, %v1140
      %v1142 = vpop.f32.mrb[0].mxu0
      %1143 = vdwg.mxu0
      %v1144 = vadd.f32 %v991, %v1106
      %v1145 = vadd.f32 %v992, %v1109
      %v1146 = vadd.f32 %v993, %v1114
      %v1147 = vadd.f32 %v994, %v1117
      %v1148 = vadd.f32 %v995, %v1122
      %v1149 = vadd.f32 %v996, %v1125
      %v1150 = vadd.f32 %v997, %v1130
      %v1151 = vadd.f32 %v998, %v1133
      %v1152 = vadd.f32 %v999, %v1138
      %v1153 = vadd.f32 %v1000, %v1141
      %v1154 = vld [vmem:[%s172 + $0x30] sm:$0x7]
      %s1155 = scalar_lea.vmem %s1, 28
      %v1156 = vld [vmem:[%s1155] sm:$0xf]
      %v1158 = vunpack.c.l.b16 %v1154
      %v1159 = vpack.c.b16 %v1158, %v1158
      %vm1160 = vsmask.f32 5376
      %v1162 = vshrl.u32 %v1036, 16
      %v1164 = vrot.slane %v1162, 2
      %v1165 = vshll.u32 %v1036, 16
      %v1167 = vrot.slane %v1165, 3
      %v1168 = vor.u32 %v1164, %v1167
      %v1170 = vshrl.u32 %v1037, 16
      %v1172 = vrot.slane %v1170, 2
      %v1173 = vshll.u32 %v1037, 16
      %v1175 = vrot.slane %v1173, 3
      %v1176 = vor.u32 %v1172, %v1175
      %v1177 = vsel %vm1160, %v1168, %v1176
      %v1179 = vshrl.u32 %v1038, 16
      %v1181 = vrot.slane %v1179, 2
      %v1182 = vshll.u32 %v1038, 16
      %v1184 = vrot.slane %v1182, 3
      %v1185 = vor.u32 %v1181, %v1184
      %v1186 = vsel %vm1160, %v1176, %v1185
      %v1188 = vshrl.u32 %v1039, 16
      %v1190 = vrot.slane %v1188, 2
      %v1191 = vshll.u32 %v1039, 16
      %v1193 = vrot.slane %v1191, 3
      %v1194 = vor.u32 %v1190, %v1193
      %v1195 = vsel %vm1160, %v1185, %v1194
      %v1197 = vshrl.u32 %v1040, 16
      %v1199 = vrot.slane %v1197, 2
      %v1200 = vshll.u32 %v1040, 16
      %v1202 = vrot.slane %v1200, 3
      %v1203 = vor.u32 %v1199, %v1202
      %v1204 = vsel %vm1160, %v1194, %v1203
      %v1206 = vshrl.u32 %v1159, 16
      %v1208 = vrot.slane %v1206, 2
      %v1209 = vshll.u32 %v1159, 16
      %v1211 = vrot.slane %v1209, 3
      %v1212 = vor.u32 %v1208, %v1211
      %v1213 = vsel %vm1160, %v1203, %v1212
      %v1215 = vsel %vm270, %v1177, 0
      %v1218 = vsel %vm270, %v1186, 0
      %v1221 = vsel %vm270, %v1195, 0
      %v1224 = vsel %vm270, %v1204, 0
      %v1227 = vsel %vm270, %v1213, 0
      %v1230 = vsel %vm286, %v1156, 0
      %1232 = vmatprep.subr.bf16.mxu0 0
      %1233 = vmatpush1.bf16.msra.mxu0 %v1230
      %1234 = vmatprep.subr.bf16.mxu0 0
      %1235 = vmatpush1.bf16.msra.mxu0 0
      %1236 = vmatprep.subr.bf16.mxu0 0
      %1237 = vmatpush1.bf16.msra.mxu0 0
      %1238 = vmatprep.subr.bf16.mxu0 0
      %1239 = vmatpush1.bf16.msra.mxu0 0
      %1240 = vmatprep.subr.bf16.mxu0 0
      %1241 = vmatpush1.bf16.msra.mxu0 0
      %1242 = vmatprep.subr.bf16.mxu0 0
      %1243 = vmatpush1.bf16.msra.mxu0 0
      %1244 = vmatprep.subr.bf16.mxu0 0
      %1245 = vmatpush1.bf16.msra.mxu0 0
      %1246 = vmatprep.subr.bf16.mxu0 0
      %1247 = vmatpush1.bf16.msra.mxu0 0
      %1248 = vmatprep.subr.bf16.mxu0 0
      %1249 = vmatpush1.bf16.msra.mxu0 0
      %1250 = vmatprep.subr.bf16.mxu0 0
      %1251 = vmatpush1.bf16.msra.mxu0 0
      %1252 = vmatprep.subr.bf16.mxu0 0
      %1253 = vmatpush1.bf16.msra.mxu0 0
      %1254 = vmatprep.subr.bf16.mxu0 0
      %1255 = vmatpush1.bf16.msra.mxu0 0
      %1256 = vmatprep.subr.bf16.mxu0 0
      %1257 = vmatpush1.bf16.msra.mxu0 0
      %1258 = vmatprep.subr.bf16.mxu0 0
      %1259 = vmatpush1.bf16.msra.mxu0 0
      %1260 = vmatprep.subr.bf16.mxu0 0
      %1261 = vmatpush1.bf16.msra.mxu0 0
      %1262 = vmatprep.subr.bf16.mxu0 0
      %1263 = vmatpush1.bf16.msra.mxu0 0
      %1264 = vmatprep.mubr.bf16.mxu0 0
      %1265 = vmatmul.mubr.bf16.gmra.mrb[0].mxu0 %v1215
      %v1266 = vpop.f32.mrb[0].mxu0
      %v1267 = vadd.f32 0.0, %v1266
      %v1268 = vpop.f32.mrb[0].mxu0
      %v1269 = vpop.f32.mrb[0].mxu0
      %v1270 = vadd.f32 0.0, %v1269
      %v1271 = vpop.f32.mrb[0].mxu0
      %1272 = vmatprep.mubr.bf16.mxu0 0
      %1273 = vmatmul.mubr.bf16.gmra.mrb[0].mxu0 %v1218
      %v1274 = vpop.f32.mrb[0].mxu0
      %v1275 = vadd.f32 0.0, %v1274
      %v1276 = vpop.f32.mrb[0].mxu0
      %v1277 = vpop.f32.mrb[0].mxu0
      %v1278 = vadd.f32 0.0, %v1277
      %v1279 = vpop.f32.mrb[0].mxu0
      %1280 = vmatprep.mubr.bf16.mxu0 0
      %1281 = vmatmul.mubr.bf16.gmra.mrb[0].mxu0 %v1221
      %v1282 = vpop.f32.mrb[0].mxu0
      %v1283 = vadd.f32 0.0, %v1282
      %v1284 = vpop.f32.mrb[0].mxu0
      %v1285 = vpop.f32.mrb[0].mxu0
      %v1286 = vadd.f32 0.0, %v1285
      %v1287 = vpop.f32.mrb[0].mxu0
      %1288 = vmatprep.mubr.bf16.mxu0 0
      %1289 = vmatmul.mubr.bf16.gmra.mrb[0].mxu0 %v1224
      %v1290 = vpop.f32.mrb[0].mxu0
      %v1291 = vadd.f32 0.0, %v1290
      %v1292 = vpop.f32.mrb[0].mxu0
      %v1293 = vpop.f32.mrb[0].mxu0
      %v1294 = vadd.f32 0.0, %v1293
      %v1295 = vpop.f32.mrb[0].mxu0
      %1296 = vmatprep.mubr.bf16.mxu0 0
      %1297 = vmatmul.mubr.bf16.gmra.mrb[0].mxu0 %v1227
      %v1298 = vpop.f32.mrb[0].mxu0
      %v1299 = vadd.f32 0.0, %v1298
      %v1300 = vpop.f32.mrb[0].mxu0
      %v1301 = vpop.f32.mrb[0].mxu0
      %v1302 = vadd.f32 0.0, %v1301
      %v1303 = vpop.f32.mrb[0].mxu0
      %1304 = vdwg.mxu0
      %v1305 = vadd.f32 %v1144, %v1267
      %v1306 = vadd.f32 %v1145, %v1270
      %v1307 = vadd.f32 %v1146, %v1275
      %v1308 = vadd.f32 %v1147, %v1278
      %v1309 = vadd.f32 %v1148, %v1283
      %v1310 = vadd.f32 %v1149, %v1286
      %v1311 = vadd.f32 %v1150, %v1291
      %v1312 = vadd.f32 %v1151, %v1294
      %v1313 = vadd.f32 %v1152, %v1299
      %v1314 = vadd.f32 %v1153, %v1302
      %v1315 = vld [vmem:[%s172 + $0x8] sm:$0x8]
      %s1316 = scalar_lea.vmem %s1, 32
      %v1317 = vld [vmem:[%s1316] sm:$0xf]
      %v1319 = vunpack.c.l.b16 %v1315
      %v1320 = vpack.c.b16 %v1026, %v1319
      %vm1321 = vcmask 1044480
      %v1322 = vrot.slane %v1320, 3
      %v1323 = vrot.slane %v1037, 3
      %v1324 = vsel %vm1321, %v1322, %v1323
      %v1325 = vrot.slane %v1038, 3
      %v1326 = vsel %vm1321, %v1323, %v1325
      %v1327 = vrot.slane %v1039, 3
      %v1328 = vsel %vm1321, %v1325, %v1327
      %v1329 = vrot.slane %v1040, 3
      %v1330 = vsel %vm1321, %v1327, %v1329
      %v1331 = vrot.slane %v1159, 3
      %v1332 = vsel %vm1321, %v1329, %v1331
      %v1334 = vsel %vm270, %v1324, 0
      %v1337 = vsel %vm270, %v1326, 0
      %v1340 = vsel %vm270, %v1328, 0
      %v1343 = vsel %vm270, %v1330, 0
      %v1346 = vsel %vm270, %v1332, 0
      %v1349 = vsel %vm286, %v1317, 0
      %1351 = vmatprep.subr.bf16.mxu0 0
      %1352 = vmatpush1.bf16.msra.mxu0 %v1349
      %1353 = vmatprep.subr.bf16.mxu0 0
      %1354 = vmatpush1.bf16.msra.mxu0 0
      %1355 = vmatprep.subr.bf16.mxu0 0
      %1356 = vmatpush1.bf16.msra.mxu0 0
      %1357 = vmatprep.subr.bf16.mxu0 0
      %1358 = vmatpush1.bf16.msra.mxu0 0
      %1359 = vmatprep.subr.bf16.mxu0 0
      %1360 = vmatpush1.bf16.msra.mxu0 0
      %1361 = vmatprep.subr.bf16.mxu0 0
      %1362 = vmatpush1.bf16.msra.mxu0 0
      %1363 = vmatprep.subr.bf16.mxu0 0
      %1364 = vmatpush1.bf16.msra.mxu0 0
      %1365 = vmatprep.subr.bf16.mxu0 0
      %1366 = vmatpush1.bf16.msra.mxu0 0
      %1367 = vmatprep.subr.bf16.mxu0 0
      %1368 = vmatpush1.bf16.msra.mxu0 0
      %1369 = vmatprep.subr.bf16.mxu0 0
      %1370 = vmatpush1.bf16.msra.mxu0 0
      %1371 = vmatprep.subr.bf16.mxu0 0
      %1372 = vmatpush1.bf16.msra.mxu0 0
      %1373 = vmatprep.subr.bf16.mxu0 0
      %1374 = vmatpush1.bf16.msra.mxu0 0
      %1375 = vmatprep.subr.bf16.mxu0 0
      %1376 = vmatpush1.bf16.msra.mxu0 0
      %1377 = vmatprep.subr.bf16.mxu0 0
      %1378 = vmatpush1.bf16.msra.mxu0 0
      %1379 = vmatprep.subr.bf16.mxu0 0
      %1380 = vmatpush1.bf16.msra.mxu0 0
      %1381 = vmatprep.subr.bf16.mxu0 0
      %1382 = vmatpush1.bf16.msra.mxu0 0
      %1383 = vmatprep.mubr.bf16.mxu0 0
      %1384 = vmatmul.mubr.bf16.gmra.mrb[0].mxu0 %v1334
      %v1385 = vpop.f32.mrb[0].mxu0
      %v1386 = vadd.f32 0.0, %v1385
      %v1387 = vpop.f32.mrb[0].mxu0
      %v1388 = vpop.f32.mrb[0].mxu0
      %v1389 = vadd.f32 0.0, %v1388
      %v1390 = vpop.f32.mrb[0].mxu0
      %1391 = vmatprep.mubr.bf16.mxu0 0
      %1392 = vmatmul.mubr.bf16.gmra.mrb[0].mxu0 %v1337
      %v1393 = vpop.f32.mrb[0].mxu0
      %v1394 = vadd.f32 0.0, %v1393
      %v1395 = vpop.f32.mrb[0].mxu0
      %v1396 = vpop.f32.mrb[0].mxu0
      %v1397 = vadd.f32 0.0, %v1396
      %v1398 = vpop.f32.mrb[0].mxu0
      %1399 = vmatprep.mubr.bf16.mxu0 0
      %1400 = vmatmul.mubr.bf16.gmra.mrb[0].mxu0 %v1340
      %v1401 = vpop.f32.mrb[0].mxu0
      %v1402 = vadd.f32 0.0, %v1401
      %v1403 = vpop.f32.mrb[0].mxu0
      %v1404 = vpop.f32.mrb[0].mxu0
      %v1405 = vadd.f32 0.0, %v1404
      %v1406 = vpop.f32.mrb[0].mxu0
      %1407 = vmatprep.mubr.bf16.mxu0 0
      %1408 = vmatmul.mubr.bf16.gmra.mrb[0].mxu0 %v1343
      %v1409 = vpop.f32.mrb[0].mxu0
      %v1410 = vadd.f32 0.0, %v1409
      %v1411 = vpop.f32.mrb[0].mxu0
      %v1412 = vpop.f32.mrb[0].mxu0
      %v1413 = vadd.f32 0.0, %v1412
      %v1414 = vpop.f32.mrb[0].mxu0
      %1415 = vmatprep.mubr.bf16.mxu0 0
      %1416 = vmatmul.mubr.bf16.gmra.mrb[0].mxu0 %v1346
      %v1417 = vpop.f32.mrb[0].mxu0
      %v1418 = vadd.f32 0.0, %v1417
      %v1419 = vpop.f32.mrb[0].mxu0
      %v1420 = vpop.f32.mrb[0].mxu0
      %v1421 = vadd.f32 0.0, %v1420
      %v1422 = vpop.f32.mrb[0].mxu0
      %1423 = vdwg.mxu0
      %v1424 = vadd.f32 %v1305, %v1386
      %v1425 = vadd.f32 %v1306, %v1389
      %v1426 = vadd.f32 %v1307, %v1394
      %v1427 = vadd.f32 %v1308, %v1397
      %v1428 = vadd.f32 %v1309, %v1402
      %v1429 = vadd.f32 %v1310, %v1405
      %v1430 = vadd.f32 %v1311, %v1410
      %v1431 = vadd.f32 %v1312, %v1413
      %v1432 = vadd.f32 %v1313, %v1418
      %v1433 = vadd.f32 %v1314, %v1421
      %v1434 = vpack.c.bf16 %v1425, %v1424
      %v1435 = vpack.c.bf16 %v1427, %v1426
      %v1436 = vpack.c.bf16 %v1429, %v1428
      %v1437 = vpack.c.bf16 %v1431, %v1430
      %v1438 = vpack.c.bf16 %v1433, %v1432
      %v1444 = vunpack.c.l.b16 %v1434
      %v1445 = vunpack.c.h.b16 %v1434
      %v1446 = vunpack.c.l.b16 %v1435
      %v1447 = vunpack.c.h.b16 %v1435
      %v1448 = vunpack.c.l.b16 %v1436
      %v1449 = vunpack.c.h.b16 %v1436
      %v1450 = vunpack.c.l.b16 %v1437
      %v1451 = vunpack.c.h.b16 %v1437
      %v1452 = vunpack.c.l.b16 %v1438
      %v1453 = vunpack.c.h.b16 %v1438
      %v1454 = vpack.c.b16 %v1444, %v1444
      %v1455 = vpack.c.b16 %v1445, %v1445
      %v1456 = vpack.c.b16 %v1446, %v1446
      %v1457 = vpack.c.b16 %v1447, %v1447
      %v1458 = vpack.c.b16 %v1448, %v1448
      %v1459 = vpack.c.b16 %v1449, %v1449
      %v1460 = vpack.c.b16 %v1450, %v1450
      %v1461 = vpack.c.b16 %v1451, %v1451
      %v1462 = vpack.c.b16 %v1452, %v1452
      %v1463 = vpack.c.b16 %v1453, %v1453
      %1474 = vst [vmem:[%s177] sm:$0xf] %v1454
      %1475 = vst [vmem:[%s177 + $0x4] sm:$0xf] %v1455
      %1476 = vst [vmem:[%s177 + $0x8] sm:$0xf] %v1456
      %1477 = vst [vmem:[%s177 + $0xc] sm:$0xf] %v1457
      %1478 = vst [vmem:[%s177 + $0x10] sm:$0xf] %v1458
      %1479 = vst [vmem:[%s177 + $0x14] sm:$0xf] %v1459
      %1480 = vst [vmem:[%s177 + $0x18] sm:$0xf] %v1460
      %1481 = vst [vmem:[%s177 + $0x1c] sm:$0xf] %v1461
      %1482 = vst [vmem:[%s177 + $0x20] sm:$0xf] %v1462
      %1483 = vst [vmem:[%s177 + $0x24] sm:$0xf] %v1463
      %v1484 = vlaneseq
      %v1485 = vshrl.u32 %v1484, 7
      %v1486 = vadd.s32 %v1485, 8
      %v1487 = vadd.s32 %v1485, 16
      %v1488 = vadd.s32 %v1485, 24
      %v1489 = vadd.s32 %v1485, 32
      %v1490 = vadd.s32 %v1485, 40
      %v1491 = vadd.s32 %v1485, 48
      %v1492 = vadd.s32 %v1485, 56
      %v1493 = vadd.s32 %v1485, 64
      %v1494 = vadd.s32 %v1485, 72
      %v1495 = vcvt.s32.f32 %v1485
      %v1496 = vcvt.s32.f32 %v1486
      %v1497 = vcvt.s32.f32 %v1487
      %v1498 = vcvt.s32.f32 %v1488
      %v1499 = vcvt.s32.f32 %v1489
      %v1500 = vcvt.s32.f32 %v1490
      %v1501 = vcvt.s32.f32 %v1491
      %v1502 = vcvt.s32.f32 %v1492
      %v1503 = vcvt.s32.f32 %v1493
      %v1504 = vcvt.s32.f32 %v1494
      %v1505 = vadd.f32 %v1495, 0.5
      %v1506 = vadd.f32 %v1496, 0.5
      %v1507 = vadd.f32 %v1497, 0.5
      %v1508 = vadd.f32 %v1498, 0.5
      %v1509 = vadd.f32 %v1499, 0.5
      %v1510 = vadd.f32 %v1500, 0.5
      %v1511 = vadd.f32 %v1501, 0.5
      %v1512 = vadd.f32 %v1502, 0.5
      %v1513 = vadd.f32 %v1503, 0.5
      %v1514 = vadd.f32 %v1504, 0.5
      %v1515 = vmul.f32 %v1505, 0.1
      %v1516 = vmul.f32 %v1506, 0.1
      %v1517 = vmul.f32 %v1507, 0.1
      %v1518 = vmul.f32 %v1508, 0.1
      %v1519 = vmul.f32 %v1509, 0.1
      %v1520 = vmul.f32 %v1510, 0.1
      %v1521 = vmul.f32 %v1511, 0.1
      %v1522 = vmul.f32 %v1512, 0.1
      %v1523 = vmul.f32 %v1513, 0.1
      %v1524 = vmul.f32 %v1514, 0.1
      %v1525 = vfloor.f32 %v1515
      %v1526 = vfloor.f32 %v1516
      %v1527 = vfloor.f32 %v1517
      %v1528 = vfloor.f32 %v1518
      %v1529 = vfloor.f32 %v1519
      %v1530 = vfloor.f32 %v1520
      %v1531 = vfloor.f32 %v1521
      %v1532 = vfloor.f32 %v1522
      %v1533 = vfloor.f32 %v1523
      %v1534 = vfloor.f32 %v1524
      %v1535 = vmul.f32 %v1525, 10.0
      %v1536 = vmul.f32 %v1526, 10.0
      %v1537 = vmul.f32 %v1527, 10.0
      %v1538 = vmul.f32 %v1528, 10.0
      %v1539 = vmul.f32 %v1529, 10.0
      %v1540 = vmul.f32 %v1530, 10.0
      %v1541 = vmul.f32 %v1531, 10.0
      %v1542 = vmul.f32 %v1532, 10.0
      %v1543 = vmul.f32 %v1533, 10.0
      %v1544 = vmul.f32 %v1534, 10.0
      %v1545 = vsub.f32 %v1495, %v1535
      %v1546 = vsub.f32 %v1496, %v1536
      %v1547 = vsub.f32 %v1497, %v1537
      %v1548 = vsub.f32 %v1498, %v1538
      %v1549 = vsub.f32 %v1499, %v1539
      %v1550 = vsub.f32 %v1500, %v1540
      %v1551 = vsub.f32 %v1501, %v1541
      %v1552 = vsub.f32 %v1502, %v1542
      %v1553 = vsub.f32 %v1503, %v1543
      %v1554 = vsub.f32 %v1504, %v1544
      %vm1555 = vcmp.lt.f32.partialorder %v1545, 8.0
      %vm1556 = vcmp.lt.f32.partialorder %v1546, 8.0
      %vm1557 = vcmp.lt.f32.partialorder %v1547, 8.0
      %vm1558 = vcmp.lt.f32.partialorder %v1548, 8.0
      %vm1559 = vcmp.lt.f32.partialorder %v1549, 8.0
      %vm1560 = vcmp.lt.f32.partialorder %v1550, 8.0
      %vm1561 = vcmp.lt.f32.partialorder %v1551, 8.0
      %vm1562 = vcmp.lt.f32.partialorder %v1552, 8.0
      %vm1563 = vcmp.lt.f32.partialorder %v1553, 8.0
      %vm1564 = vcmp.lt.f32.partialorder %v1554, 8.0
      %v1565 = vsel %vm1555, %v1424, 0.0
      %v1566 = vsel %vm1556, %v1425, 0.0
      %v1567 = vsel %vm1557, %v1426, 0.0
      %v1568 = vsel %vm1558, %v1427, 0.0
      %v1569 = vsel %vm1559, %v1428, 0.0
      %v1570 = vsel %vm1560, %v1429, 0.0
      %v1571 = vsel %vm1561, %v1430, 0.0
      %v1572 = vsel %vm1562, %v1431, 0.0
      %v1573 = vsel %vm1563, %v1432, 0.0
      %v1574 = vsel %vm1564, %v1433, 0.0
      %v1575 = vadd.f32 %v1565, %v1566
      %v1576 = vadd.f32 %v1575, %v1567
      %v1577 = vadd.f32 %v1576, %v1568
      %v1578 = vadd.f32 %v1577, %v1569
      %v1579 = vadd.f32 %v1578, %v1570
      %v1580 = vadd.f32 %v1579, %v1571
      %v1581 = vadd.f32 %v1580, %v1572
      %v1582 = vadd.f32 %v1581, %v1573
      %v1583 = vadd.f32 %v1582, %v1574
      %v1584 = vrot.slane %v1583, 4
      %v1585 = vadd.f32 %v1583, %v1584
      %v1586 = vrot.slane %v1585, 2
      %v1587 = vadd.f32 %v1585, %v1586
      %v1588 = vrot.slane %v1587, 1
      %v1589 = vadd.f32 %v1587, %v1588
      %v1590 = vmul.f32 %v1565, %v1424
      %v1591 = vmul.f32 %v1566, %v1425
      %v1592 = vmul.f32 %v1567, %v1426
      %v1593 = vmul.f32 %v1568, %v1427
      %v1594 = vmul.f32 %v1569, %v1428
      %v1595 = vmul.f32 %v1570, %v1429
      %v1596 = vmul.f32 %v1571, %v1430
      %v1597 = vmul.f32 %v1572, %v1431
      %v1598 = vmul.f32 %v1573, %v1432
      %v1599 = vmul.f32 %v1574, %v1433
      %v1600 = vadd.f32 %v1590, %v1591
      %v1601 = vadd.f32 %v1600, %v1592
      %v1602 = vadd.f32 %v1601, %v1593
      %v1603 = vadd.f32 %v1602, %v1594
      %v1604 = vadd.f32 %v1603, %v1595
      %v1605 = vadd.f32 %v1604, %v1596
      %v1606 = vadd.f32 %v1605, %v1597
      %v1607 = vadd.f32 %v1606, %v1598
      %v1608 = vadd.f32 %v1607, %v1599
      %v1609 = vrot.slane %v1608, 4
      %v1610 = vadd.f32 %v1608, %v1609
      %v1611 = vrot.slane %v1610, 2
      %v1612 = vadd.f32 %v1610, %v1611
      %v1613 = vrot.slane %v1612, 1
      %v1614 = vadd.f32 %v1612, %v1613
      %vm1615 = vcmask 1040384
      %v1616 = vsel %vm1615, %v1589, %v1614
      %1617 = vst [vmem:[%s181] sm:$0x3] %v1616
      %p1618 = scmp.lt.s32.totalorder %s15, 1
      %s1619 = scalar_select %p1618, %s15, 1
      %s1620 = smul.addr %s1619, 10
      %s1621 = smul.addr %s1620, 4
      %s1622 = scalar_lea.vmem %s2, %s1621
      %p1623 = scmp.lt.s32.totalorder %s15, 1
      %s1624 = scalar_select %p1623, %s15, 1
      %s1625 = smul.addr %s1624, 2
      %s1626 = scalar_lea.vmem %s3, %s1625
      // Predicated region
      $region29: #{_lambda_.3} parent=27 // pred_check
        %p1627 = pneg %p80
      $region30: #{_lambda_.3} parent=27 // pred_check_branch
        %1629 = sbr.rel (%p1627) target = $region32
      $region31: #{_lambda_.3} parent=27 // pred_region
        _
      $region32: #{_lambda_.3} parent=27 // pred_fallthru
        _
      // Predicated region
      $region33: #{_lambda_.3} parent=27 // pred_check
        %p1630 = pneg %p106
      $region34: #{_lambda_.3} parent=27 // pred_check_branch
        %1632 = sbr.rel (%p1630) target = $region36
      $region35: #{_lambda_.3} parent=27 // pred_region
        _
      $region36: #{_lambda_.3} parent=27 // pred_fallthru
        _
    $region28: #{_lambda_.3} parent=5 // pred_fallthru
      _
    %p1633 = scmp.le.s32.totalorder 2, %s10
    // Predicated region
    $region37: #{_lambda_.3} parent=5 // pred_check
      %p1634 = pneg %p1633
    $region38: #{_lambda_.3} parent=5 // pred_check_branch
      %1636 = sbr.rel (%p1634) target = $region40
    $region39: #{_lambda_.3} parent=5 // pred_region
      %s1637 = ssub.s32 %s10, 2
      // Predicated region
      $region41: #{_lambda_.3} parent=39 // pred_check
        %p1638 = pneg %p86
      $region42: #{_lambda_.3} parent=39 // pred_check_branch
        %1640 = sbr.rel (%p1638) target = $region44
      $region43: #{_lambda_.3} parent=39 // pred_region
        %p1641 = scmp.lt.s32.totalorder %s16, 1
        %s1642 = scalar_select %p1641, %s16, 1
        %s1643 = smul.addr %s1642, 10
        %s1644 = smul.addr %s1643, 4
        %s1645 = scalar_lea.vmem %s2, %s1644
      $region44: #{_lambda_.3} parent=39 // pred_fallthru
        _
      // Predicated region
      $region45: #{_lambda_.3} parent=39 // pred_check
        %p1646 = pneg %p112
      $region46: #{_lambda_.3} parent=39 // pred_check_branch
        %1648 = sbr.rel (%p1646) target = $region48
      $region47: #{_lambda_.3} parent=39 // pred_region
        %p1649 = scmp.lt.s32.totalorder %s16, 1
        %s1650 = scalar_select %p1649, %s16, 1
        %s1651 = smul.addr %s1650, 2
        %s1652 = scalar_lea.vmem %s3, %s1651
      $region48: #{_lambda_.3} parent=39 // pred_fallthru
        _
    $region40: #{_lambda_.3} parent=5 // pred_fallthru
      _
  $region6: #{_lambda_.3} parent=0 // loop_footer
    %s14 = sadd.s32 1, %s10
  $region7: #{_lambda_.3} parent=0 // loop_footer_branch
    %9 = sbr.rel target = $region3
  $region8: #{_lambda_.3} parent=0 // loop_exit
    _

// kernel: _lambda_.4
$region0: #{_lambda_.4}
  #allocation0 [shape = 'u32[]', space=smem, size = 0x4, offset = 0x4, fixed_abs, tag = 'smem constant byte address 0x4 - core index']
  #allocation1 [shape = 'u32[144,128]{1,0:T(1,128)}', space=vmem, size = 0x12000, scoped, tag = 'internal scratch']
  #allocation2 [shape = 'bf16[102,128]{1,0:T(8,128)(2,1)}', space=vmem, size = 0x6800, scoped, tag = 'scratch operand']
  %s0 = inlined_call_operand.vmem [shape: bf16[2,80,128], index: 0, kind: input, shape index: {}]
  %s1 = inlined_call_operand.vmem [shape: f32[2,128], index: 1, kind: input, shape index: {}]
  %s2 = inlined_call_operand.vmem [shape: f32[2,128], index: 2, kind: input, shape index: {}]
  %s3 = inlined_call_operand.vmem [shape: bf16[5,256,128], index: 3, kind: input, shape index: {}]
  %s4 = inlined_call_operand.vmem [shape: bf16[2,80,128], index: 4, kind: output, shape index: {0}]
  %s5 = inlined_call_operand.vmem [shape: f32[2,2,128], index: 5, kind: output, shape index: {1}]
  %6 = xla_tuple %s4, %s5
  %s7 = sld [smem:[#allocation0]]
  $region57: #{_lambda_.4} parent=0
    _
  %s9 = ssub.s32 1, %s7
  %s10 = scalar_select 0, %s9, %s7
  loop: start=0, step=1, limit=4
  $region2: #{_lambda_.4} parent=0 // loop_pre_header
    _
  $region3: #{_lambda_.4} parent=0 // loop_header
    %s12 = sphi 0, %s16
    %p13 = scmp.ge.s32.totalorder %s12, 4
    %s22 = sphi 0, %s24
    %s25 = sphi 0, %s22
    %s26 = sphi 0, %s25
    %s42 = sphi 0, %s26
    %s46 = sphi 0, %s46
    %s48 = sphi 0, %s46
    %s49 = sphi 0, %s48
    %s63 = sphi 0, %s49
    %s67 = sphi 0, %s67
    %s69 = sphi 0, %s67
    %s70 = sphi 0, %s69
    %s84 = sphi 0, %s70
    %s88 = sphi 0, %s88
    %s90 = sphi 0, %s88
    %s91 = sphi 0, %s90
    %s105 = sphi 0, %s91
    %s111 = sphi 0, %s113
    %s114 = sphi 0, %s111
    %s115 = sphi 0, %s114
    %s131 = sphi 0, %s115
    %s137 = sphi 0, %s139
    %s140 = sphi 0, %s137
    %s141 = sphi 0, %s140
    %s157 = sphi 0, %s141
  $region4: #{_lambda_.4} parent=0 // loop_header_branch
    %15 = sbr.rel (%p13) target = $region8
  $region5: #{_lambda_.4} parent=0 // loop_body
    %s17 = ssub.s32 %s12, 1
    %s18 = ssub.s32 %s12, 2
    %s19 = sadd.s32 %s12, 1
    %s20 = ssub.s32 %s12, %s19
    %p21 = scmp.eq.s32.totalorder %s20, 0
    %s23 = sadd.s32 %s22, 1
    %s24 = scalar_select %p21, %s22, %s23
    %p27 = pneg %p21
    %p28 = scmp.eq.s32.totalorder %s12, 1
    %p29 = por %p27, %p28
    %p30 = scmp.ne.s32.totalorder %s22, %s25
    %p31 = scmp.eq.s32.totalorder %s12, 0
    %p32 = por %p30, %p31
    %p33 = scmp.ne.s32.totalorder %s22, %s25
    %p34 = scmp.eq.s32.totalorder %s17, 1
    %p35 = por %p33, %p34
    %p36 = scmp.ne.s32.totalorder %s25, %s26
    %p37 = scmp.eq.s32.totalorder %s17, 0
    %p38 = por %p36, %p37
    %p39 = scmp.ne.s32.totalorder %s25, %s26
    %p40 = scmp.eq.s32.totalorder %s18, 1
    %p41 = por %p39, %p40
    %p43 = scmp.ne.s32.totalorder %s26, %s42
    %p44 = scmp.eq.s32.totalorder %s18, 0
    %p45 = por %p43, %p44
    %s47 = sadd.s32 %s46, 1
    %p50 = scmp.eq.s32.totalorder %s12, 1
    %p51 = scmp.ne.s32.totalorder %s46, %s48
    %p52 = scmp.eq.s32.totalorder %s12, 0
    %p53 = por %p51, %p52
    %p54 = scmp.ne.s32.totalorder %s46, %s48
    %p55 = scmp.eq.s32.totalorder %s17, 1
    %p56 = por %p54, %p55
    %p57 = scmp.ne.s32.totalorder %s48, %s49
    %p58 = scmp.eq.s32.totalorder %s17, 0
    %p59 = por %p57, %p58
    %p60 = scmp.ne.s32.totalorder %s48, %s49
    %p61 = scmp.eq.s32.totalorder %s18, 1
    %p62 = por %p60, %p61
    %p64 = scmp.ne.s32.totalorder %s49, %s63
    %p65 = scmp.eq.s32.totalorder %s18, 0
    %p66 = por %p64, %p65
    %s68 = sadd.s32 %s67, 1
    %p71 = scmp.eq.s32.totalorder %s12, 1
    %p72 = scmp.ne.s32.totalorder %s67, %s69
    %p73 = scmp.eq.s32.totalorder %s12, 0
    %p74 = por %p72, %p73
    %p75 = scmp.ne.s32.totalorder %s67, %s69
    %p76 = scmp.eq.s32.totalorder %s17, 1
    %p77 = por %p75, %p76
    %p78 = scmp.ne.s32.totalorder %s69, %s70
    %p79 = scmp.eq.s32.totalorder %s17, 0
    %p80 = por %p78, %p79
    %p81 = scmp.ne.s32.totalorder %s69, %s70
    %p82 = scmp.eq.s32.totalorder %s18, 1
    %p83 = por %p81, %p82
    %p85 = scmp.ne.s32.totalorder %s70, %s84
    %p86 = scmp.eq.s32.totalorder %s18, 0
    %p87 = por %p85, %p86
    %s89 = sadd.s32 %s88, 1
    %p92 = scmp.eq.s32.totalorder %s12, 1
    %p93 = scmp.ne.s32.totalorder %s88, %s90
    %p94 = scmp.eq.s32.totalorder %s12, 0
    %p95 = por %p93, %p94
    %p96 = scmp.ne.s32.totalorder %s88, %s90
    %p97 = scmp.eq.s32.totalorder %s17, 1
    %p98 = por %p96, %p97
    %p99 = scmp.ne.s32.totalorder %s90, %s91
    %p100 = scmp.eq.s32.totalorder %s17, 0
    %p101 = por %p99, %p100
    %p102 = scmp.ne.s32.totalorder %s90, %s91
    %p103 = scmp.eq.s32.totalorder %s18, 1
    %p104 = por %p102, %p103
    %p106 = scmp.ne.s32.totalorder %s91, %s105
    %p107 = scmp.eq.s32.totalorder %s18, 0
    %p108 = por %p106, %p107
    %s109 = ssub.s32 %s12, %s19
    %p110 = scmp.eq.s32.totalorder %s109, 0
    %s112 = sadd.s32 %s111, 1
    %s113 = scalar_select %p110, %s111, %s112
    %p116 = pneg %p110
    %p117 = scmp.eq.s32.totalorder %s12, 1
    %p118 = por %p116, %p117
    %p119 = scmp.ne.s32.totalorder %s111, %s114
    %p120 = scmp.eq.s32.totalorder %s12, 0
    %p121 = por %p119, %p120
    %p122 = scmp.ne.s32.totalorder %s111, %s114
    %p123 = scmp.eq.s32.totalorder %s17, 1
    %p124 = por %p122, %p123
    %p125 = scmp.ne.s32.totalorder %s114, %s115
    %p126 = scmp.eq.s32.totalorder %s17, 0
    %p127 = por %p125, %p126
    %p128 = scmp.ne.s32.totalorder %s114, %s115
    %p129 = scmp.eq.s32.totalorder %s18, 1
    %p130 = por %p128, %p129
    %p132 = scmp.ne.s32.totalorder %s115, %s131
    %p133 = scmp.eq.s32.totalorder %s18, 0
    %p134 = por %p132, %p133
    %s135 = ssub.s32 %s12, %s19
    %p136 = scmp.eq.s32.totalorder %s135, 0
    %s138 = sadd.s32 %s137, 1
    %s139 = scalar_select %p136, %s137, %s138
    %p142 = pneg %p136
    %p143 = scmp.eq.s32.totalorder %s12, 1
    %p144 = por %p142, %p143
    %p145 = scmp.ne.s32.totalorder %s137, %s140
    %p146 = scmp.eq.s32.totalorder %s12, 0
    %p147 = por %p145, %p146
    %p148 = scmp.ne.s32.totalorder %s137, %s140
    %p149 = scmp.eq.s32.totalorder %s17, 1
    %p150 = por %p148, %p149
    %p151 = scmp.ne.s32.totalorder %s140, %s141
    %p152 = scmp.eq.s32.totalorder %s17, 0
    %p153 = por %p151, %p152
    %p154 = scmp.ne.s32.totalorder %s140, %s141
    %p155 = scmp.eq.s32.totalorder %s18, 1
    %p156 = por %p154, %p155
    %p158 = scmp.ne.s32.totalorder %s141, %s157
    %p159 = scmp.eq.s32.totalorder %s18, 0
    %p160 = por %p158, %p159
    %p161 = scmp.le.s32.totalorder 1, %s12
    %p162 = scmp.lt.s32.totalorder %s12, 3
    %p163 = pnand %p161, %p162
    %p164 = pneg %p163
    // Predicated region
    $region9: #{_lambda_.4} parent=5 // pred_check
      _
    $region10: #{_lambda_.4} parent=5 // pred_check_branch
      %166 = sbr.rel (%p163) target = $region12
    $region11: #{_lambda_.4} parent=5 // pred_region
      %s167 = ssub.s32 %s12, 1
      // Predicated region
      $region13: #{_lambda_.4} parent=11 // pred_check
        %p168 = pneg %p59
      $region14: #{_lambda_.4} parent=11 // pred_check_branch
        %170 = sbr.rel (%p168) target = $region16
      $region15: #{_lambda_.4} parent=11 // pred_region
        _
      $region16: #{_lambda_.4} parent=11 // pred_fallthru
        _
      // Predicated region
      $region17: #{_lambda_.4} parent=11 // pred_check
        %p171 = pneg %p80
      $region18: #{_lambda_.4} parent=11 // pred_check_branch
        %173 = sbr.rel (%p171) target = $region20
      $region19: #{_lambda_.4} parent=11 // pred_region
        _
      $region20: #{_lambda_.4} parent=11 // pred_fallthru
        _
      // Predicated region
      $region21: #{_lambda_.4} parent=11 // pred_check
        %p174 = pneg %p101
      $region22: #{_lambda_.4} parent=11 // pred_check_branch
        %176 = sbr.rel (%p174) target = $region24
      $region23: #{_lambda_.4} parent=11 // pred_region
        _
      $region24: #{_lambda_.4} parent=11 // pred_fallthru
        _
    $region12: #{_lambda_.4} parent=5 // pred_fallthru
      _
    %p177 = scmp.lt.s32.totalorder %s12, 2
    // Predicated region
    $region25: #{_lambda_.4} parent=5 // pred_check
      %p178 = pneg %p177
    $region26: #{_lambda_.4} parent=5 // pred_check_branch
      %180 = sbr.rel (%p178) target = $region28
    $region27: #{_lambda_.4} parent=5 // pred_region
      // Predicated region
      $region29: #{_lambda_.4} parent=27 // pred_check
        %p181 = pneg %p32
      $region30: #{_lambda_.4} parent=27 // pred_check_branch
        %183 = sbr.rel (%p181) target = $region32
      $region31: #{_lambda_.4} parent=27 // pred_region
        %p184 = scmp.lt.s32.totalorder %s12, 1
        %s185 = scalar_select %p184, %s12, 1
        %s186 = smul.addr %s185, 10
        %s187 = smul.addr %s186, 4
        %s188 = scalar_lea.vmem %s0, %s187
      $region32: #{_lambda_.4} parent=27 // pred_fallthru
        _
    $region28: #{_lambda_.4} parent=5 // pred_fallthru
      _
    %p189 = scmp.le.s32.totalorder 1, %s12
    %p190 = scmp.lt.s32.totalorder %s12, 3
    %p191 = pnand %p189, %p190
    %p192 = pneg %p191
    // Predicated region
    $region33: #{_lambda_.4} parent=5 // pred_check
      _
    $region34: #{_lambda_.4} parent=5 // pred_check_branch
      %194 = sbr.rel (%p191) target = $region36
    $region35: #{_lambda_.4} parent=5 // pred_region
      %s195 = ssub.s32 %s12, 1
      %p196 = scmp.lt.s32.totalorder %s17, 1
      %s197 = scalar_select %p196, %s17, 1
      %s198 = smul.addr %s197, 10
      %s199 = smul.addr %s198, 4
      %s200 = scalar_lea.vmem %s0, %s199
      %p201 = pneg %p38
      %p202 = pneg %p35
      %p203 = pneg %p59
      %p204 = pneg %p56
      %p205 = pneg %p80
      %p206 = pneg %p77
      %p207 = pneg %p101
      %p208 = pneg %p98
      %p209 = pneg %p127
      %p210 = pneg %p124
      %p211 = scmp.lt.s32.totalorder %s17, 1
      %s212 = scalar_select %p211, %s17, 1
      %s213 = smul.addr %s212, 10
      %s214 = smul.addr %s213, 4
      %s215 = scalar_lea.vmem %s4, %s214
      %p216 = pneg %p153
      %p217 = pneg %p150
      %p218 = scmp.lt.s32.totalorder %s17, 1
      %s219 = scalar_select %p218, %s17, 1
      %s220 = smul.addr %s219, 2
      %s221 = scalar_lea.vmem %s5, %s220
      %p222 = scmp.lt.s32.totalorder %s17, 1
      %s223 = scalar_select %p222, %s17, 1
      %s224 = smul.addr %s223, 10
      %s225 = smul.addr %s224, 4
      %s226 = scalar_lea.vmem %s0, %s225
      %p227 = scmp.lt.s32.totalorder %s17, 1
      %s228 = scalar_select %p227, %s17, 1
      %s229 = smul.addr %s228, 10
      %s230 = smul.addr %s229, 4
      %s231 = scalar_lea.vmem %s4, %s230
      %p232 = scmp.lt.s32.totalorder %s17, 1
      %s233 = scalar_select %p232, %s17, 1
      %s234 = smul.addr %s233, 2
      %s235 = scalar_lea.vmem %s5, %s234
      %v237 = vld [vmem:[%s1] sm:$0x1]
      %v238 = vmul.f32 %v237, 0.0078125
      %v239 = vld [vmem:[%s1 + $0x1] sm:$0x1]
      %v240 = vmul.f32 %v239, 0.0078125
      %v241 = vmul.f32 %v238, %v238
      %v242 = vsub.f32 %v240, %v241
      %v243 = vmax.f32 %v242, 0.0
      %v244 = vld [vmem:[%s2] sm:$0x1]
      %v245 = vadd.f32 %v243, 1e-05
      %v246 = vrsqrt.pop %v245
      %v247 = vmul.f32 %v244, %v246
      %v248 = vld [vmem:[%s2 + $0x1] sm:$0x1]
      %v249 = vmul.f32 %v238, %v247
      %v250 = vsub.f32 %v248, %v249
      %v251 = vld [vmem:[%s226] sm:$0xf]
      %v252 = vld [vmem:[%s226 + $0x4] sm:$0xf]
      %v253 = vld [vmem:[%s226 + $0x8] sm:$0xf]
      %v254 = vld [vmem:[%s226 + $0xc] sm:$0xf]
      %v255 = vld [vmem:[%s226 + $0x10] sm:$0xf]
      %v256 = vld [vmem:[%s226 + $0x14] sm:$0xf]
      %v257 = vld [vmem:[%s226 + $0x18] sm:$0xf]
      %v258 = vld [vmem:[%s226 + $0x1c] sm:$0xf]
      %v259 = vld [vmem:[%s226 + $0x20] sm:$0xf]
      %v260 = vld [vmem:[%s226 + $0x24] sm:$0xf]
      %v261 = vunpack.c.l.bf16 %v251
      %v262 = vunpack.c.l.bf16 %v252
      %v263 = vunpack.c.l.bf16 %v253
      %v264 = vunpack.c.l.bf16 %v254
      %v265 = vunpack.c.l.bf16 %v255
      %v266 = vunpack.c.l.bf16 %v256
      %v267 = vunpack.c.l.bf16 %v257
      %v268 = vunpack.c.l.bf16 %v258
      %v269 = vunpack.c.l.bf16 %v259
      %v270 = vunpack.c.l.bf16 %v260
      %v271 = vlaneseq
      %v272 = vshrl.u32 %v271, 7
      %v273 = vsub.s32 0, %v272
      %v274 = vrot.slane %v247, %v273
      %v275 = vmul.f32 %v261, %v274
      %v276 = vmul.f32 %v262, %v274
      %v277 = vmul.f32 %v263, %v274
      %v278 = vmul.f32 %v264, %v274
      %v279 = vmul.f32 %v265, %v274
      %v280 = vmul.f32 %v266, %v274
      %v281 = vmul.f32 %v267, %v274
      %v282 = vmul.f32 %v268, %v274
      %v283 = vmul.f32 %v269, %v274
      %v284 = vmul.f32 %v270, %v274
      %v285 = vlaneseq
      %v286 = vshrl.u32 %v285, 7
      %v287 = vsub.s32 0, %v286
      %v288 = vrot.slane %v250, %v287
      %v289 = vadd.f32 %v275, %v288
      %v290 = vadd.f32 %v276, %v288
      %v291 = vadd.f32 %v277, %v288
      %v292 = vadd.f32 %v278, %v288
      %v293 = vadd.f32 %v279, %v288
      %v294 = vadd.f32 %v280, %v288
      %v295 = vadd.f32 %v281, %v288
      %v296 = vadd.f32 %v282, %v288
      %v297 = vadd.f32 %v283, %v288
      %v298 = vadd.f32 %v284, %v288
      %vm299 = vcmp.gt.f32.partialorder %v289, 0.0
      %vm300 = vcmp.gt.f32.partialorder %v290, 0.0
      %vm301 = vcmp.gt.f32.partialorder %v291, 0.0
      %vm302 = vcmp.gt.f32.partialorder %v292, 0.0
      %vm303 = vcmp.gt.f32.partialorder %v293, 0.0
      %vm304 = vcmp.gt.f32.partialorder %v294, 0.0
      %vm305 = vcmp.gt.f32.partialorder %v295, 0.0
      %vm306 = vcmp.gt.f32.partialorder %v296, 0.0
      %vm307 = vcmp.gt.f32.partialorder %v297, 0.0
      %vm308 = vcmp.gt.f32.partialorder %v298, 0.0
      %v309 = vmul.f32 %v289, 0.2
      %v310 = vmul.f32 %v290, 0.2
      %v311 = vmul.f32 %v291, 0.2
      %v312 = vmul.f32 %v292, 0.2
      %v313 = vmul.f32 %v293, 0.2
      %v314 = vmul.f32 %v294, 0.2
      %v315 = vmul.f32 %v295, 0.2
      %v316 = vmul.f32 %v296, 0.2
      %v317 = vmul.f32 %v297, 0.2
      %v318 = vmul.f32 %v298, 0.2
      %v319 = vsel %vm299, %v289, %v309
      %v320 = vsel %vm300, %v290, %v310
      %v321 = vsel %vm301, %v291, %v311
      %v322 = vsel %vm302, %v292, %v312
      %v323 = vsel %vm303, %v293, %v313
      %v324 = vsel %vm304, %v294, %v314
      %v325 = vsel %vm305, %v295, %v315
      %v326 = vsel %vm306, %v296, %v316
      %v327 = vsel %vm307, %v297, %v317
      %v328 = vsel %vm308, %v298, %v318
      %v329 = vlaneseq
      %v330 = vshrl.u32 %v329, 7
      %v331 = vadd.s32 %v330, 8
      %v332 = vadd.s32 %v330, 16
      %v333 = vadd.s32 %v330, 24
      %v334 = vadd.s32 %v330, 32
      %v335 = vadd.s32 %v330, 40
      %v336 = vadd.s32 %v330, 48
      %v337 = vadd.s32 %v330, 56
      %v338 = vadd.s32 %v330, 64
      %v339 = vadd.s32 %v330, 72
      %v340 = vcvt.s32.f32 %v330
      %v341 = vcvt.s32.f32 %v331
      %v342 = vcvt.s32.f32 %v332
      %v343 = vcvt.s32.f32 %v333
      %v344 = vcvt.s32.f32 %v334
      %v345 = vcvt.s32.f32 %v335
      %v346 = vcvt.s32.f32 %v336
      %v347 = vcvt.s32.f32 %v337
      %v348 = vcvt.s32.f32 %v338
      %v349 = vcvt.s32.f32 %v339
      %v350 = vadd.f32 %v340, 0.5
      %v351 = vadd.f32 %v341, 0.5
      %v352 = vadd.f32 %v342, 0.5
      %v353 = vadd.f32 %v343, 0.5
      %v354 = vadd.f32 %v344, 0.5
      %v355 = vadd.f32 %v345, 0.5
      %v356 = vadd.f32 %v346, 0.5
      %v357 = vadd.f32 %v347, 0.5
      %v358 = vadd.f32 %v348, 0.5
      %v359 = vadd.f32 %v349, 0.5
      %v360 = vmul.f32 %v350, 0.1
      %v361 = vmul.f32 %v351, 0.1
      %v362 = vmul.f32 %v352, 0.1
      %v363 = vmul.f32 %v353, 0.1
      %v364 = vmul.f32 %v354, 0.1
      %v365 = vmul.f32 %v355, 0.1
      %v366 = vmul.f32 %v356, 0.1
      %v367 = vmul.f32 %v357, 0.1
      %v368 = vmul.f32 %v358, 0.1
      %v369 = vmul.f32 %v359, 0.1
      %v370 = vfloor.f32 %v360
      %v371 = vfloor.f32 %v361
      %v372 = vfloor.f32 %v362
      %v373 = vfloor.f32 %v363
      %v374 = vfloor.f32 %v364
      %v375 = vfloor.f32 %v365
      %v376 = vfloor.f32 %v366
      %v377 = vfloor.f32 %v367
      %v378 = vfloor.f32 %v368
      %v379 = vfloor.f32 %v369
      %v380 = vmul.f32 %v370, 10.0
      %v381 = vmul.f32 %v371, 10.0
      %v382 = vmul.f32 %v372, 10.0
      %v383 = vmul.f32 %v373, 10.0
      %v384 = vmul.f32 %v374, 10.0
      %v385 = vmul.f32 %v375, 10.0
      %v386 = vmul.f32 %v376, 10.0
      %v387 = vmul.f32 %v377, 10.0
      %v388 = vmul.f32 %v378, 10.0
      %v389 = vmul.f32 %v379, 10.0
      %v390 = vsub.f32 %v340, %v380
      %v391 = vsub.f32 %v341, %v381
      %v392 = vsub.f32 %v342, %v382
      %v393 = vsub.f32 %v343, %v383
      %v394 = vsub.f32 %v344, %v384
      %v395 = vsub.f32 %v345, %v385
      %v396 = vsub.f32 %v346, %v386
      %v397 = vsub.f32 %v347, %v387
      %v398 = vsub.f32 %v348, %v388
      %v399 = vsub.f32 %v349, %v389
      %vm400 = vcmp.lt.f32.partialorder %v390, 8.0
      %vm401 = vcmp.lt.f32.partialorder %v391, 8.0
      %vm402 = vcmp.lt.f32.partialorder %v392, 8.0
      %vm403 = vcmp.lt.f32.partialorder %v393, 8.0
      %vm404 = vcmp.lt.f32.partialorder %v394, 8.0
      %vm405 = vcmp.lt.f32.partialorder %v395, 8.0
      %vm406 = vcmp.lt.f32.partialorder %v396, 8.0
      %vm407 = vcmp.lt.f32.partialorder %v397, 8.0
      %vm408 = vcmp.lt.f32.partialorder %v398, 8.0
      %vm409 = vcmp.lt.f32.partialorder %v399, 8.0
      %v410 = vsel %vm400, %v319, 0.0
      %v411 = vsel %vm401, %v320, 0.0
      %v412 = vsel %vm402, %v321, 0.0
      %v413 = vsel %vm403, %v322, 0.0
      %v414 = vsel %vm404, %v323, 0.0
      %v415 = vsel %vm405, %v324, 0.0
      %v416 = vsel %vm406, %v325, 0.0
      %v417 = vsel %vm407, %v326, 0.0
      %v418 = vsel %vm408, %v327, 0.0
      %v419 = vsel %vm409, %v328, 0.0
      %420 = vst [vmem:[#allocation2] sm:$0xf] 0
      %vm421 = vcmask 1041408
      %vm422 = vsmask.f32 1280
      %vm423 = vmand %vm421, %vm422
      %v424 = vld [vmem:[#allocation2 + $0x4] sm:$0x3]
      %v425 = vsel %vm423, 0, %v424
      %426 = vst [vmem:[#allocation2 + $0x4] sm:$0x3] %v425
      %vm427 = vcmask 1043457
      %vm428 = vsmask.f32 7942
      %vm429 = vmand %vm427, %vm428
      %v430 = vld [vmem:[#allocation2 + $0x2c] sm:$0xe]
      %v431 = vsel %vm429, 0, %v430
      %432 = vst [vmem:[#allocation2 + $0x2c] sm:$0xe] %v431
      %433 = vst [vmem:[#allocation2 + $0x30] sm:$0x7] 0
      %v434 = vpack.c.bf16 %v411, %v410
      %v435 = vpack.c.bf16 %v413, %v412
      %v436 = vpack.c.bf16 %v415, %v414
      %v437 = vpack.c.bf16 %v417, %v416
      %v438 = vpack.c.bf16 %v419, %v418
      %v444 = vunpack.c.l.b16 %v434
      %v445 = vunpack.c.h.b16 %v434
      %v446 = vunpack.c.l.b16 %v435
      %v447 = vunpack.c.h.b16 %v435
      %v448 = vunpack.c.l.b16 %v436
      %v449 = vunpack.c.h.b16 %v436
      %v450 = vunpack.c.l.b16 %v437
      %v451 = vunpack.c.h.b16 %v437
      %v452 = vunpack.c.l.b16 %v438
      %v453 = vunpack.c.h.b16 %v438
      %v454 = vpack.c.b16 %v444, %v444
      %v455 = vpack.c.b16 %v445, %v445
      %v456 = vpack.c.b16 %v446, %v446
      %v457 = vpack.c.b16 %v447, %v447
      %v458 = vpack.c.b16 %v448, %v448
      %v459 = vpack.c.b16 %v449, %v449
      %v460 = vpack.c.b16 %v450, %v450
      %v461 = vpack.c.b16 %v451, %v451
      %v462 = vpack.c.b16 %v452, %v452
      %v463 = vpack.c.b16 %v453, %v453
      %vm464 = vsmask.f32 5392
      %vm465 = vmor %vm422, %vm464
      %v467 = vshrl.u32 %v454, 16
      %v469 = vrot.slane %v467, 6
      %v470 = vshll.u32 %v454, 16
      %v472 = vrot.slane %v470, 7
      %v473 = vor.u32 %v469, %v472
      %v474 = vrot.slane %v473, 4
      %v476 = vshrl.u32 %v455, 16
      %v478 = vrot.slane %v476, 6
      %v479 = vshll.u32 %v455, 16
      %v481 = vrot.slane %v479, 7
      %v482 = vor.u32 %v478, %v481
      %v483 = vsel %vm465, %v474, %v482
      %v484 = vrot.slane %v482, 4
      %v486 = vshrl.u32 %v456, 16
      %v488 = vrot.slane %v486, 6
      %v489 = vshll.u32 %v456, 16
      %v491 = vrot.slane %v489, 7
      %v492 = vor.u32 %v488, %v491
      %v493 = vsel %vm465, %v484, %v492
      %v494 = vrot.slane %v492, 4
      %v496 = vshrl.u32 %v457, 16
      %v498 = vrot.slane %v496, 6
      %v499 = vshll.u32 %v457, 16
      %v501 = vrot.slane %v499, 7
      %v502 = vor.u32 %v498, %v501
      %v503 = vsel %vm465, %v494, %v502
      %v504 = vrot.slane %v502, 4
      %v506 = vshrl.u32 %v458, 16
      %v508 = vrot.slane %v506, 6
      %v509 = vshll.u32 %v458, 16
      %v511 = vrot.slane %v509, 7
      %v512 = vor.u32 %v508, %v511
      %v513 = vsel %vm465, %v504, %v512
      %v514 = vrot.slane %v512, 4
      %v516 = vshrl.u32 %v459, 16
      %v518 = vrot.slane %v516, 6
      %v519 = vshll.u32 %v459, 16
      %v521 = vrot.slane %v519, 7
      %v522 = vor.u32 %v518, %v521
      %v523 = vsel %vm465, %v514, %v522
      %v524 = vrot.slane %v522, 4
      %v526 = vshrl.u32 %v460, 16
      %v528 = vrot.slane %v526, 6
      %v529 = vshll.u32 %v460, 16
      %v531 = vrot.slane %v529, 7
      %v532 = vor.u32 %v528, %v531
      %v533 = vsel %vm465, %v524, %v532
      %v534 = vrot.slane %v532, 4
      %v536 = vshrl.u32 %v461, 16
      %v538 = vrot.slane %v536, 6
      %v539 = vshll.u32 %v461, 16
      %v541 = vrot.slane %v539, 7
      %v542 = vor.u32 %v538, %v541
      %v543 = vsel %vm465, %v534, %v542
      %v544 = vrot.slane %v542, 4
      %v546 = vshrl.u32 %v462, 16
      %v548 = vrot.slane %v546, 6
      %v549 = vshll.u32 %v462, 16
      %v551 = vrot.slane %v549, 7
      %v552 = vor.u32 %v548, %v551
      %v553 = vsel %vm465, %v544, %v552
      %v554 = vrot.slane %v552, 4
      %v556 = vshrl.u32 %v463, 16
      %v558 = vrot.slane %v556, 6
      %v559 = vshll.u32 %v463, 16
      %v561 = vrot.slane %v559, 7
      %v562 = vor.u32 %v558, %v561
      %v563 = vsel %vm465, %v554, %v562
      %v564 = vrot.slane %v562, 4
      %v576 = vld [vmem:[#allocation2 + $0x4] sm:$0xe]
      %v577 = vsel %vm429, %v473, %v576
      %578 = vst [vmem:[#allocation2 + $0x4] sm:$0xe] %v577
      %579 = vst [vmem:[#allocation2 + $0x8] sm:$0xf] %v483
      %580 = vst [vmem:[#allocation2 + $0xc] sm:$0xf] %v493
      %581 = vst [vmem:[#allocation2 + $0x10] sm:$0xf] %v503
      %582 = vst [vmem:[#allocation2 + $0x14] sm:$0xf] %v513
      %583 = vst [vmem:[#allocation2 + $0x18] sm:$0xf] %v523
      %584 = vst [vmem:[#allocation2 + $0x1c] sm:$0xf] %v533
      %585 = vst [vmem:[#allocation2 + $0x20] sm:$0xf] %v543
      %586 = vst [vmem:[#allocation2 + $0x24] sm:$0xf] %v553
      %587 = vst [vmem:[#allocation2 + $0x28] sm:$0xf] %v563
      %v588 = vld [vmem:[#allocation2 + $0x2c] sm:$0x3]
      %v589 = vsel %vm423, %v564, %v588
      %590 = vst [vmem:[#allocation2 + $0x2c] sm:$0x3] %v589
      %v591 = vld [vmem:[#allocation2] sm:$0xf]
      %v592 = vld [vmem:[#allocation2 + $0x4] sm:$0xf]
      %v593 = vld [vmem:[#allocation2 + $0x8] sm:$0xf]
      %v594 = vld [vmem:[#allocation2 + $0xc] sm:$0xf]
      %v595 = vld [vmem:[#allocation2 + $0x10] sm:$0xf]
      %v596 = vld [vmem:[#allocation2 + $0x14] sm:$0xf]
      %v597 = vld [vmem:[#allocation2 + $0x18] sm:$0xf]
      %v598 = vld [vmem:[#allocation2 + $0x1c] sm:$0xf]
      %v599 = vld [vmem:[#allocation2 + $0x20] sm:$0xf]
      %v600 = vld [vmem:[#allocation2 + $0x24] sm:$0xf]
      %v601 = vld [vmem:[#allocation2 + $0x28] sm:$0x1]
      %v612 = vunpack.c.l.b16 %v591
      %v613 = vunpack.c.l.b16 %v592
      %v614 = vunpack.c.l.b16 %v593
      %v615 = vunpack.c.l.b16 %v594
      %v616 = vunpack.c.l.b16 %v595
      %v617 = vunpack.c.l.b16 %v596
      %v618 = vunpack.c.l.b16 %v597
      %v619 = vunpack.c.l.b16 %v598
      %v620 = vunpack.c.l.b16 %v599
      %v621 = vunpack.c.l.b16 %v600
      %v622 = vpack.c.b16 %v613, %v612
      %v623 = vpack.c.b16 %v615, %v614
      %v624 = vpack.c.b16 %v617, %v616
      %v625 = vpack.c.b16 %v619, %v618
      %v626 = vpack.c.b16 %v621, %v620
      %v633 = vunpack.c.l.b16 %v601
      %v634 = vpack.c.b16 %v633, %v633
      %vm635 = vsmask.f32 7424
      %v637 = vshrl.u32 %v622, 16
      %v639 = vshll.u32 %v622, 16
      %v641 = vrot.slane %v639, 1
      %v642 = vor.u32 %v637, %v641
      %v644 = vshll.u32 %v623, 16
      %v646 = vrot.slane %v644, 1
      %v647 = vsel %vm635, %v642, %v646
      %v648 = vshrl.u32 %v623, 16
      %v650 = vor.u32 %v648, %v646
      %v652 = vshll.u32 %v624, 16
      %v654 = vrot.slane %v652, 1
      %v655 = vsel %vm635, %v650, %v654
      %v656 = vshrl.u32 %v624, 16
      %v658 = vor.u32 %v656, %v654
      %v660 = vshll.u32 %v625, 16
      %v662 = vrot.slane %v660, 1
      %v663 = vsel %vm635, %v658, %v662
      %v664 = vshrl.u32 %v625, 16
      %v666 = vor.u32 %v664, %v662
      %v668 = vshll.u32 %v626, 16
      %v670 = vrot.slane %v668, 1
      %v671 = vsel %vm635, %v666, %v670
      %v672 = vshrl.u32 %v626, 16
      %v674 = vor.u32 %v672, %v670
      %v676 = vshll.u32 %v634, 16
      %v678 = vrot.slane %v676, 1
      %v679 = vsel %vm635, %v674, %v678
      %v685 = vld [vmem:[%s3] sm:$0xf]
      %v686 = vld [vmem:[%s3 + $0x4] sm:$0xf]
      %v687 = vld [vmem:[%s3 + $0x8] sm:$0xf]
      %v688 = vld [vmem:[%s3 + $0xc] sm:$0xf]
      %v689 = vld [vmem:[%s3 + $0x10] sm:$0xf]
      %v690 = vld [vmem:[%s3 + $0x14] sm:$0xf]
      %v691 = vld [vmem:[%s3 + $0x18] sm:$0xf]
      %v692 = vld [vmem:[%s3 + $0x1c] sm:$0xf]
      %v693 = vld [vmem:[%s3 + $0x20] sm:$0xf]
      %v694 = vld [vmem:[%s3 + $0x24] sm:$0xf]
      %v695 = vld [vmem:[%s3 + $0x28] sm:$0xf]
      %v696 = vld [vmem:[%s3 + $0x2c] sm:$0xf]
      %v697 = vld [vmem:[%s3 + $0x30] sm:$0xf]
      %v698 = vld [vmem:[%s3 + $0x34] sm:$0xf]
      %v699 = vld [vmem:[%s3 + $0x38] sm:$0xf]
      %v700 = vld [vmem:[%s3 + $0x3c] sm:$0xf]
      %v701 = vld [vmem:[%s3 + $0x40] sm:$0xf]
      %v702 = vld [vmem:[%s3 + $0x44] sm:$0xf]
      %v703 = vld [vmem:[%s3 + $0x48] sm:$0xf]
      %v704 = vld [vmem:[%s3 + $0x4c] sm:$0xf]
      %v705 = vld [vmem:[%s3 + $0x50] sm:$0xf]
      %v706 = vld [vmem:[%s3 + $0x54] sm:$0xf]
      %v707 = vld [vmem:[%s3 + $0x58] sm:$0xf]
      %v708 = vld [vmem:[%s3 + $0x5c] sm:$0xf]
      %v709 = vld [vmem:[%s3 + $0x60] sm:$0xf]
      %v710 = vld [vmem:[%s3 + $0x64] sm:$0xf]
      %v711 = vld [vmem:[%s3 + $0x68] sm:$0xf]
      %v712 = vld [vmem:[%s3 + $0x6c] sm:$0xf]
      %v713 = vld [vmem:[%s3 + $0x70] sm:$0xf]
      %v714 = vld [vmem:[%s3 + $0x74] sm:$0xf]
      %v715 = vld [vmem:[%s3 + $0x78] sm:$0xf]
      %v716 = vld [vmem:[%s3 + $0x7c] sm:$0xf]
      %v717 = vld [vmem:[#allocation2] sm:$0xe]
      %v718 = vld [vmem:[#allocation2 + $0x4] sm:$0xe]
      %v719 = vld [vmem:[#allocation2 + $0x28] sm:$0xf]
      %v720 = vld [vmem:[#allocation2 + $0x2c] sm:$0x1]
      %v722 = vunpack.c.l.b16 %v717
      %v723 = vpack.c.b16 %v613, %v722
      %v727 = vunpack.c.l.b16 %v718
      %v728 = vunpack.c.l.b16 %v719
      %v729 = vunpack.c.l.b16 %v720
      %v730 = vpack.c.b16 %v614, %v727
      %v731 = vpack.c.b16 %v616, %v615
      %v732 = vpack.c.b16 %v618, %v617
      %v733 = vpack.c.b16 %v620, %v619
      %v734 = vpack.c.b16 %v728, %v621
      %v735 = vpack.c.b16 %v729, %v729
      %s736 = scalar_lea.vmem %s3, 128
      %v737 = vld [vmem:[%s736] sm:$0xf]
      %v738 = vld [vmem:[%s736 + $0x4] sm:$0xf]
      %v739 = vld [vmem:[%s736 + $0x8] sm:$0xf]
      %v740 = vld [vmem:[%s736 + $0xc] sm:$0xf]
      %v741 = vld [vmem:[%s736 + $0x10] sm:$0xf]
      %v742 = vld [vmem:[%s736 + $0x14] sm:$0xf]
      %v743 = vld [vmem:[%s736 + $0x18] sm:$0xf]
      %v744 = vld [vmem:[%s736 + $0x1c] sm:$0xf]
      %v745 = vld [vmem:[%s736 + $0x20] sm:$0xf]
      %v746 = vld [vmem:[%s736 + $0x24] sm:$0xf]
      %v747 = vld [vmem:[%s736 + $0x28] sm:$0xf]
      %v748 = vld [vmem:[%s736 + $0x2c] sm:$0xf]
      %v749 = vld [vmem:[%s736 + $0x30] sm:$0xf]
      %v750 = vld [vmem:[%s736 + $0x34] sm:$0xf]
      %v751 = vld [vmem:[%s736 + $0x38] sm:$0xf]
      %v752 = vld [vmem:[%s736 + $0x3c] sm:$0xf]
      %v753 = vld [vmem:[%s736 + $0x40] sm:$0xf]
      %v754 = vld [vmem:[%s736 + $0x44] sm:$0xf]
      %v755 = vld [vmem:[%s736 + $0x48] sm:$0xf]
      %v756 = vld [vmem:[%s736 + $0x4c] sm:$0xf]
      %v757 = vld [vmem:[%s736 + $0x50] sm:$0xf]
      %v758 = vld [vmem:[%s736 + $0x54] sm:$0xf]
      %v759 = vld [vmem:[%s736 + $0x58] sm:$0xf]
      %v760 = vld [vmem:[%s736 + $0x5c] sm:$0xf]
      %v761 = vld [vmem:[%s736 + $0x60] sm:$0xf]
      %v762 = vld [vmem:[%s736 + $0x64] sm:$0xf]
      %v763 = vld [vmem:[%s736 + $0x68] sm:$0xf]
      %v764 = vld [vmem:[%s736 + $0x6c] sm:$0xf]
      %v765 = vld [vmem:[%s736 + $0x70] sm:$0xf]
      %v766 = vld [vmem:[%s736 + $0x74] sm:$0xf]
      %v767 = vld [vmem:[%s736 + $0x78] sm:$0xf]
      %v768 = vld [vmem:[%s736 + $0x7c] sm:$0xf]
      %vm769 = vcmask 1046528
      %v770 = vrot.slane %v723, 1
      %v771 = vrot.slane %v623, 1
      %v772 = vsel %vm769, %v770, %v771
      %v773 = vrot.slane %v730, 1
      %v774 = vrot.slane %v731, 1
      %v775 = vsel %vm769, %v773, %v774
      %v776 = vrot.slane %v624, 1
      %v777 = vsel %vm769, %v771, %v776
      %v778 = vrot.slane %v732, 1
      %v779 = vsel %vm769, %v774, %v778
      %v780 = vrot.slane %v625, 1
      %v781 = vsel %vm769, %v776, %v780
      %v782 = vrot.slane %v733, 1
      %v783 = vsel %vm769, %v778, %v782
      %v784 = vrot.slane %v626, 1
      %v785 = vsel %vm769, %v780, %v784
      %v786 = vrot.slane %v734, 1
      %v787 = vsel %vm769, %v782, %v786
      %v788 = vrot.slane %v634, 1
      %v789 = vsel %vm769, %v784, %v788
      %v790 = vrot.slane %v735, 1
      %v791 = vsel %vm769, %v786, %v790
      %v834 = vunpack.c.l.b16 %v737
      %v835 = vunpack.c.l.b16 %v738
      %v836 = vunpack.c.l.b16 %v739
      %v837 = vunpack.c.l.b16 %v740
      %v838 = vunpack.c.l.b16 %v741
      %v839 = vunpack.c.l.b16 %v742
      %v840 = vunpack.c.l.b16 %v743
      %v841 = vunpack.c.l.b16 %v744
      %v842 = vunpack.c.l.b16 %v745
      %v843 = vunpack.c.l.b16 %v746
      %v844 = vunpack.c.l.b16 %v747
      %v845 = vunpack.c.l.b16 %v748
      %v846 = vunpack.c.l.b16 %v749
      %v847 = vunpack.c.l.b16 %v750
      %v848 = vunpack.c.l.b16 %v751
      %v849 = vunpack.c.l.b16 %v752
      %v850 = vunpack.c.l.b16 %v753
      %v851 = vunpack.c.l.b16 %v754
      %v852 = vunpack.c.l.b16 %v755
      %v853 = vunpack.c.l.b16 %v756
      %v854 = vunpack.c.l.b16 %v757
      %v855 = vunpack.c.l.b16 %v758
      %v856 = vunpack.c.l.b16 %v759
      %v857 = vunpack.c.l.b16 %v760
      %v858 = vunpack.c.l.b16 %v761
      %v859 = vunpack.c.l.b16 %v762
      %v860 = vunpack.c.l.b16 %v763
      %v861 = vunpack.c.l.b16 %v764
      %v862 = vunpack.c.l.b16 %v765
      %v863 = vunpack.c.l.b16 %v766
      %v864 = vunpack.c.l.b16 %v767
      %v865 = vunpack.c.l.b16 %v768
      %v866 = vpack.c.b16 %v835, %v834
      %v867 = vpack.c.b16 %v837, %v836
      %v868 = vpack.c.b16 %v839, %v838
      %v869 = vpack.c.b16 %v841, %v840
      %v870 = vpack.c.b16 %v843, %v842
      %v871 = vpack.c.b16 %v845, %v844
      %v872 = vpack.c.b16 %v847, %v846
      %v873 = vpack.c.b16 %v849, %v848
      %v874 = vpack.c.b16 %v851, %v850
      %v875 = vpack.c.b16 %v853, %v852
      %v876 = vpack.c.b16 %v855, %v854
      %v877 = vpack.c.b16 %v857, %v856
      %v878 = vpack.c.b16 %v859, %v858
      %v879 = vpack.c.b16 %v861, %v860
      %v880 = vpack.c.b16 %v863, %v862
      %v881 = vpack.c.b16 %v865, %v864
      %898 = vmatprep.subr.bf16.mxu0 0
      %899 = vmatpush1.bf16.msra.mxu0 %v866
      %900 = vmatprep.subr.bf16.mxu0 0
      %901 = vmatpush1.bf16.msra.mxu0 %v867
      %902 = vmatprep.subr.bf16.mxu0 0
      %903 = vmatpush1.bf16.msra.mxu0 %v868
      %904 = vmatprep.subr.bf16.mxu0 0
      %905 = vmatpush1.bf16.msra.mxu0 %v869
      %906 = vmatprep.subr.bf16.mxu0 0
      %907 = vmatpush1.bf16.msra.mxu0 %v870
      %908 = vmatprep.subr.bf16.mxu0 0
      %909 = vmatpush1.bf16.msra.mxu0 %v871
      %910 = vmatprep.subr.bf16.mxu0 0
      %911 = vmatpush1.bf16.msra.mxu0 %v872
      %912 = vmatprep.subr.bf16.mxu0 0
      %913 = vmatpush1.bf16.msra.mxu0 %v873
      %914 = vmatprep.subr.bf16.mxu0 0
      %915 = vmatpush1.bf16.msra.mxu0 %v874
      %916 = vmatprep.subr.bf16.mxu0 0
      %917 = vmatpush1.bf16.msra.mxu0 %v875
      %918 = vmatprep.subr.bf16.mxu0 0
      %919 = vmatpush1.bf16.msra.mxu0 %v876
      %920 = vmatprep.subr.bf16.mxu0 0
      %921 = vmatpush1.bf16.msra.mxu0 %v877
      %922 = vmatprep.subr.bf16.mxu0 0
      %923 = vmatpush1.bf16.msra.mxu0 %v878
      %924 = vmatprep.subr.bf16.mxu0 0
      %925 = vmatpush1.bf16.msra.mxu0 %v879
      %926 = vmatprep.subr.bf16.mxu0 0
      %927 = vmatpush1.bf16.msra.mxu0 %v880
      %928 = vmatprep.subr.bf16.mxu0 0
      %929 = vmatpush1.bf16.msra.mxu0 %v881
      %930 = vmatprep.mubr.bf16.mxu0 %v775
      %931 = vmatmul.mubr.bf16.gmra.mrb[0].mxu0 %v772
      %v932 = vpop.f32.mrb[0].mxu0
      %v933 = vadd.f32 0.0, %v932
      %v934 = vpop.f32.mrb[0].mxu0
      %v935 = vpop.f32.mrb[0].mxu0
      %v936 = vadd.f32 0.0, %v935
      %v937 = vpop.f32.mrb[0].mxu0
      %938 = vmatprep.mubr.bf16.mxu0 %v779
      %939 = vmatmul.mubr.bf16.gmra.mrb[0].mxu0 %v777
      %v940 = vpop.f32.mrb[0].mxu0
      %v941 = vadd.f32 0.0, %v940
      %v942 = vpop.f32.mrb[0].mxu0
      %v943 = vpop.f32.mrb[0].mxu0
      %v944 = vadd.f32 0.0, %v943
      %v945 = vpop.f32.mrb[0].mxu0
      %946 = vmatprep.mubr.bf16.mxu0 %v783
      %947 = vmatmul.mubr.bf16.gmra.mrb[0].mxu0 %v781
      %v948 = vpop.f32.mrb[0].mxu0
      %v949 = vadd.f32 0.0, %v948
      %v950 = vpop.f32.mrb[0].mxu0
      %v951 = vpop.f32.mrb[0].mxu0
      %v952 = vadd.f32 0.0, %v951
      %v953 = vpop.f32.mrb[0].mxu0
      %954 = vmatprep.mubr.bf16.mxu0 %v787
      %955 = vmatmul.mubr.bf16.gmra.mrb[0].mxu0 %v785
      %v956 = vpop.f32.mrb[0].mxu0
      %v957 = vadd.f32 0.0, %v956
      %v958 = vpop.f32.mrb[0].mxu0
      %v959 = vpop.f32.mrb[0].mxu0
      %v960 = vadd.f32 0.0, %v959
      %v961 = vpop.f32.mrb[0].mxu0
      %962 = vmatprep.mubr.bf16.mxu0 %v791
      %963 = vmatmul.mubr.bf16.gmra.mrb[0].mxu0 %v789
      %v964 = vpop.f32.mrb[0].mxu0
      %v965 = vadd.f32 0.0, %v964
      %v966 = vpop.f32.mrb[0].mxu0
      %v967 = vpop.f32.mrb[0].mxu0
      %v968 = vadd.f32 0.0, %v967
      %v969 = vpop.f32.mrb[0].mxu0
      %970 = vdwg.mxu0
      %v1003 = vunpack.c.l.b16 %v685
      %v1004 = vunpack.c.l.b16 %v686
      %v1005 = vunpack.c.l.b16 %v687
      %v1006 = vunpack.c.l.b16 %v688
      %v1007 = vunpack.c.l.b16 %v689
      %v1008 = vunpack.c.l.b16 %v690
      %v1009 = vunpack.c.l.b16 %v691
      %v1010 = vunpack.c.l.b16 %v692
      %v1011 = vunpack.c.l.b16 %v693
      %v1012 = vunpack.c.l.b16 %v694
      %v1013 = vunpack.c.l.b16 %v695
      %v1014 = vunpack.c.l.b16 %v696
      %v1015 = vunpack.c.l.b16 %v697
      %v1016 = vunpack.c.l.b16 %v698
      %v1017 = vunpack.c.l.b16 %v699
      %v1018 = vunpack.c.l.b16 %v700
      %v1019 = vunpack.c.l.b16 %v701
      %v1020 = vunpack.c.l.b16 %v702
      %v1021 = vunpack.c.l.b16 %v703
      %v1022 = vunpack.c.l.b16 %v704
      %v1023 = vunpack.c.l.b16 %v705
      %v1024 = vunpack.c.l.b16 %v706
      %v1025 = vunpack.c.l.b16 %v707
      %v1026 = vunpack.c.l.b16 %v708
      %v1027 = vunpack.c.l.b16 %v709
      %v1028 = vunpack.c.l.b16 %v710
      %v1029 = vunpack.c.l.b16 %v711
      %v1030 = vunpack.c.l.b16 %v712
      %v1031 = vunpack.c.l.b16 %v713
      %v1032 = vunpack.c.l.b16 %v714
      %v1033 = vunpack.c.l.b16 %v715
      %v1034 = vunpack.c.l.b16 %v716
      %v1035 = vpack.c.b16 %v1004, %v1003
      %v1036 = vpack.c.b16 %v1006, %v1005
      %v1037 = vpack.c.b16 %v1008, %v1007
      %v1038 = vpack.c.b16 %v1010, %v1009
      %v1039 = vpack.c.b16 %v1012, %v1011
      %v1040 = vpack.c.b16 %v1014, %v1013
      %v1041 = vpack.c.b16 %v1016, %v1015
      %v1042 = vpack.c.b16 %v1018, %v1017
      %v1043 = vpack.c.b16 %v1020, %v1019
      %v1044 = vpack.c.b16 %v1022, %v1021
      %v1045 = vpack.c.b16 %v1024, %v1023
      %v1046 = vpack.c.b16 %v1026, %v1025
      %v1047 = vpack.c.b16 %v1028, %v1027
      %v1048 = vpack.c.b16 %v1030, %v1029
      %v1049 = vpack.c.b16 %v1032, %v1031
      %v1050 = vpack.c.b16 %v1034, %v1033
      %1067 = vmatprep.subr.bf16.mxu0 0
      %1068 = vmatpush1.bf16.msra.mxu0 %v1035
      %1069 = vmatprep.subr.bf16.mxu0 0
      %1070 = vmatpush1.bf16.msra.mxu0 %v1036
      %1071 = vmatprep.subr.bf16.mxu0 0
      %1072 = vmatpush1.bf16.msra.mxu0 %v1037
      %1073 = vmatprep.subr.bf16.mxu0 0
      %1074 = vmatpush1.bf16.msra.mxu0 %v1038
      %1075 = vmatprep.subr.bf16.mxu0 0
      %1076 = vmatpush1.bf16.msra.mxu0 %v1039
      %1077 = vmatprep.subr.bf16.mxu0 0
      %1078 = vmatpush1.bf16.msra.mxu0 %v1040
      %1079 = vmatprep.subr.bf16.mxu0 0
      %1080 = vmatpush1.bf16.msra.mxu0 %v1041
      %1081 = vmatprep.subr.bf16.mxu0 0
      %1082 = vmatpush1.bf16.msra.mxu0 %v1042
      %1083 = vmatprep.subr.bf16.mxu0 0
      %1084 = vmatpush1.bf16.msra.mxu0 %v1043
      %1085 = vmatprep.subr.bf16.mxu0 0
      %1086 = vmatpush1.bf16.msra.mxu0 %v1044
      %1087 = vmatprep.subr.bf16.mxu0 0
      %1088 = vmatpush1.bf16.msra.mxu0 %v1045
      %1089 = vmatprep.subr.bf16.mxu0 0
      %1090 = vmatpush1.bf16.msra.mxu0 %v1046
      %1091 = vmatprep.subr.bf16.mxu0 0
      %1092 = vmatpush1.bf16.msra.mxu0 %v1047
      %1093 = vmatprep.subr.bf16.mxu0 0
      %1094 = vmatpush1.bf16.msra.mxu0 %v1048
      %1095 = vmatprep.subr.bf16.mxu0 0
      %1096 = vmatpush1.bf16.msra.mxu0 %v1049
      %1097 = vmatprep.subr.bf16.mxu0 0
      %1098 = vmatpush1.bf16.msra.mxu0 %v1050
      %1099 = vmatprep.mubr.bf16.mxu0 %v647
      %1100 = vmatmul.mubr.bf16.gmra.mrb[0].mxu0 %v622
      %v1101 = vpop.f32.mrb[0].mxu0
      %v1102 = vadd.f32 %v933, %v1101
      %v1103 = vpop.f32.mrb[0].mxu0
      %v1104 = vpop.f32.mrb[0].mxu0
      %v1105 = vadd.f32 %v936, %v1104
      %v1106 = vpop.f32.mrb[0].mxu0
      %1107 = vmatprep.mubr.bf16.mxu0 %v655
      %1108 = vmatmul.mubr.bf16.gmra.mrb[0].mxu0 %v623
      %v1109 = vpop.f32.mrb[0].mxu0
      %v1110 = vadd.f32 %v941, %v1109
      %v1111 = vpop.f32.mrb[0].mxu0
      %v1112 = vpop.f32.mrb[0].mxu0
      %v1113 = vadd.f32 %v944, %v1112
      %v1114 = vpop.f32.mrb[0].mxu0
      %1115 = vmatprep.mubr.bf16.mxu0 %v663
      %1116 = vmatmul.mubr.bf16.gmra.mrb[0].mxu0 %v624
      %v1117 = vpop.f32.mrb[0].mxu0
      %v1118 = vadd.f32 %v949, %v1117
      %v1119 = vpop.f32.mrb[0].mxu0
      %v1120 = vpop.f32.mrb[0].mxu0
      %v1121 = vadd.f32 %v952, %v1120
      %v1122 = vpop.f32.mrb[0].mxu0
      %1123 = vmatprep.mubr.bf16.mxu0 %v671
      %1124 = vmatmul.mubr.bf16.gmra.mrb[0].mxu0 %v625
      %v1125 = vpop.f32.mrb[0].mxu0
      %v1126 = vadd.f32 %v957, %v1125
      %v1127 = vpop.f32.mrb[0].mxu0
      %v1128 = vpop.f32.mrb[0].mxu0
      %v1129 = vadd.f32 %v960, %v1128
      %v1130 = vpop.f32.mrb[0].mxu0
      %1131 = vmatprep.mubr.bf16.mxu0 %v679
      %1132 = vmatmul.mubr.bf16.gmra.mrb[0].mxu0 %v626
      %v1133 = vpop.f32.mrb[0].mxu0
      %v1134 = vadd.f32 %v965, %v1133
      %v1135 = vpop.f32.mrb[0].mxu0
      %v1136 = vpop.f32.mrb[0].mxu0
      %v1137 = vadd.f32 %v968, %v1136
      %v1138 = vpop.f32.mrb[0].mxu0
      %1139 = vdwg.mxu0
      %v1140 = vld [vmem:[#allocation2 + $0x2c] sm:$0x3]
      %v1141 = vld [vmem:[#allocation2 + $0x4] sm:$0xc]
      %v1143 = vunpack.c.l.b16 %v1140
      %v1144 = vpack.c.b16 %v1143, %v1143
      %v1146 = vunpack.c.l.b16 %v1141
      %v1147 = vpack.c.b16 %v614, %v1146
      %v1149 = vshrl.u32 %v1147, 16
      %v1151 = vshll.u32 %v1147, 16
      %v1153 = vrot.slane %v1151, 1
      %v1154 = vor.u32 %v1149, %v1153
      %v1156 = vshll.u32 %v731, 16
      %v1158 = vrot.slane %v1156, 1
      %v1159 = vsel %vm635, %v1154, %v1158
      %v1160 = vshrl.u32 %v731, 16
      %v1162 = vor.u32 %v1160, %v1158
      %v1164 = vshll.u32 %v732, 16
      %v1166 = vrot.slane %v1164, 1
      %v1167 = vsel %vm635, %v1162, %v1166
      %v1168 = vshrl.u32 %v732, 16
      %v1170 = vor.u32 %v1168, %v1166
      %v1172 = vshll.u32 %v733, 16
      %v1174 = vrot.slane %v1172, 1
      %v1175 = vsel %vm635, %v1170, %v1174
      %v1176 = vshrl.u32 %v733, 16
      %v1178 = vor.u32 %v1176, %v1174
      %v1180 = vshll.u32 %v734, 16
      %v1182 = vrot.slane %v1180, 1
      %v1183 = vsel %vm635, %v1178, %v1182
      %v1184 = vshrl.u32 %v734, 16
      %v1186 = vor.u32 %v1184, %v1182
      %v1188 = vshll.u32 %v1144, 16
      %v1190 = vrot.slane %v1188, 1
      %v1191 = vsel %vm635, %v1186, %v1190
      %v1192 = vshrl.u32 %v1144, 16
      %v1194 = vor.u32 %v1192, %v1190
      %s1195 = scalar_lea.vmem %s3, 256
      %v1196 = vld [vmem:[%s1195] sm:$0xf]
      %v1197 = vld [vmem:[%s1195 + $0x4] sm:$0xf]
      %v1198 = vld [vmem:[%s1195 + $0x8] sm:$0xf]
      %v1199 = vld [vmem:[%s1195 + $0xc] sm:$0xf]
      %v1200 = vld [vmem:[%s1195 + $0x10] sm:$0xf]
      %v1201 = vld [vmem:[%s1195 + $0x14] sm:$0xf]
      %v1202 = vld [vmem:[%s1195 + $0x18] sm:$0xf]
      %v1203 = vld [vmem:[%s1195 + $0x1c] sm:$0xf]
      %v1204 = vld [vmem:[%s1195 + $0x20] sm:$0xf]
      %v1205 = vld [vmem:[%s1195 + $0x24] sm:$0xf]
      %v1206 = vld [vmem:[%s1195 + $0x28] sm:$0xf]
      %v1207 = vld [vmem:[%s1195 + $0x2c] sm:$0xf]
      %v1208 = vld [vmem:[%s1195 + $0x30] sm:$0xf]
      %v1209 = vld [vmem:[%s1195 + $0x34] sm:$0xf]
      %v1210 = vld [vmem:[%s1195 + $0x38] sm:$0xf]
      %v1211 = vld [vmem:[%s1195 + $0x3c] sm:$0xf]
      %v1212 = vld [vmem:[%s1195 + $0x40] sm:$0xf]
      %v1213 = vld [vmem:[%s1195 + $0x44] sm:$0xf]
      %v1214 = vld [vmem:[%s1195 + $0x48] sm:$0xf]
      %v1215 = vld [vmem:[%s1195 + $0x4c] sm:$0xf]
      %v1216 = vld [vmem:[%s1195 + $0x50] sm:$0xf]
      %v1217 = vld [vmem:[%s1195 + $0x54] sm:$0xf]
      %v1218 = vld [vmem:[%s1195 + $0x58] sm:$0xf]
      %v1219 = vld [vmem:[%s1195 + $0x5c] sm:$0xf]
      %v1220 = vld [vmem:[%s1195 + $0x60] sm:$0xf]
      %v1221 = vld [vmem:[%s1195 + $0x64] sm:$0xf]
      %v1222 = vld [vmem:[%s1195 + $0x68] sm:$0xf]
      %v1223 = vld [vmem:[%s1195 + $0x6c] sm:$0xf]
      %v1224 = vld [vmem:[%s1195 + $0x70] sm:$0xf]
      %v1225 = vld [vmem:[%s1195 + $0x74] sm:$0xf]
      %v1226 = vld [vmem:[%s1195 + $0x78] sm:$0xf]
      %v1227 = vld [vmem:[%s1195 + $0x7c] sm:$0xf]
      %vm1228 = vsmask.f32 6400
      %v1230 = vshrl.u32 %v730, 16
      %v1232 = vrot.slane %v1230, 1
      %v1233 = vshll.u32 %v730, 16
      %v1235 = vrot.slane %v1233, 2
      %v1236 = vor.u32 %v1232, %v1235
      %v1237 = vrot.slane %v1160, 1
      %v1238 = vrot.slane %v1156, 2
      %v1239 = vor.u32 %v1237, %v1238
      %v1240 = vsel %vm1228, %v1236, %v1239
      %v1242 = vshrl.u32 %v1159, 16
      %v1244 = vrot.slane %v1242, 1
      %v1245 = vshll.u32 %v1159, 16
      %v1247 = vrot.slane %v1245, 2
      %v1248 = vor.u32 %v1244, %v1247
      %v1250 = vshrl.u32 %v1167, 16
      %v1252 = vrot.slane %v1250, 1
      %v1253 = vshll.u32 %v1167, 16
      %v1255 = vrot.slane %v1253, 2
      %v1256 = vor.u32 %v1252, %v1255
      %v1257 = vsel %vm1228, %v1248, %v1256
      %v1258 = vrot.slane %v1168, 1
      %v1259 = vrot.slane %v1164, 2
      %v1260 = vor.u32 %v1258, %v1259
      %v1261 = vsel %vm1228, %v1239, %v1260
      %v1263 = vshrl.u32 %v1175, 16
      %v1265 = vrot.slane %v1263, 1
      %v1266 = vshll.u32 %v1175, 16
      %v1268 = vrot.slane %v1266, 2
      %v1269 = vor.u32 %v1265, %v1268
      %v1270 = vsel %vm1228, %v1256, %v1269
      %v1271 = vrot.slane %v1176, 1
      %v1272 = vrot.slane %v1172, 2
      %v1273 = vor.u32 %v1271, %v1272
      %v1274 = vsel %vm1228, %v1260, %v1273
      %v1276 = vshrl.u32 %v1183, 16
      %v1278 = vrot.slane %v1276, 1
      %v1279 = vshll.u32 %v1183, 16
      %v1281 = vrot.slane %v1279, 2
      %v1282 = vor.u32 %v1278, %v1281
      %v1283 = vsel %vm1228, %v1269, %v1282
      %v1284 = vrot.slane %v1184, 1
      %v1285 = vrot.slane %v1180, 2
      %v1286 = vor.u32 %v1284, %v1285
      %v1287 = vsel %vm1228, %v1273, %v1286
      %v1289 = vshrl.u32 %v1191, 16
      %v1291 = vrot.slane %v1289, 1
      %v1292 = vshll.u32 %v1191, 16
      %v1294 = vrot.slane %v1292, 2
      %v1295 = vor.u32 %v1291, %v1294
      %v1296 = vsel %vm1228, %v1282, %v1295
      %v1297 = vrot.slane %v1192, 1
      %v1298 = vrot.slane %v1188, 2
      %v1299 = vor.u32 %v1297, %v1298
      %v1300 = vsel %vm1228, %v1286, %v1299
      %v1302 = vshrl.u32 %v1194, 16
      %v1304 = vrot.slane %v1302, 1
      %v1305 = vshll.u32 %v1194, 16
      %v1307 = vrot.slane %v1305, 2
      %v1308 = vor.u32 %v1304, %v1307
      %v1309 = vsel %vm1228, %v1295, %v1308
      %v1352 = vunpack.c.l.b16 %v1196
      %v1353 = vunpack.c.l.b16 %v1197
      %v1354 = vunpack.c.l.b16 %v1198
      %v1355 = vunpack.c.l.b16 %v1199
      %v1356 = vunpack.c.l.b16 %v1200
      %v1357 = vunpack.c.l.b16 %v1201
      %v1358 = vunpack.c.l.b16 %v1202
      %v1359 = vunpack.c.l.b16 %v1203
      %v1360 = vunpack.c.l.b16 %v1204
      %v1361 = vunpack.c.l.b16 %v1205
      %v1362 = vunpack.c.l.b16 %v1206
      %v1363 = vunpack.c.l.b16 %v1207
      %v1364 = vunpack.c.l.b16 %v1208
      %v1365 = vunpack.c.l.b16 %v1209
      %v1366 = vunpack.c.l.b16 %v1210
      %v1367 = vunpack.c.l.b16 %v1211
      %v1368 = vunpack.c.l.b16 %v1212
      %v1369 = vunpack.c.l.b16 %v1213
      %v1370 = vunpack.c.l.b16 %v1214
      %v1371 = vunpack.c.l.b16 %v1215
      %v1372 = vunpack.c.l.b16 %v1216
      %v1373 = vunpack.c.l.b16 %v1217
      %v1374 = vunpack.c.l.b16 %v1218
      %v1375 = vunpack.c.l.b16 %v1219
      %v1376 = vunpack.c.l.b16 %v1220
      %v1377 = vunpack.c.l.b16 %v1221
      %v1378 = vunpack.c.l.b16 %v1222
      %v1379 = vunpack.c.l.b16 %v1223
      %v1380 = vunpack.c.l.b16 %v1224
      %v1381 = vunpack.c.l.b16 %v1225
      %v1382 = vunpack.c.l.b16 %v1226
      %v1383 = vunpack.c.l.b16 %v1227
      %v1384 = vpack.c.b16 %v1353, %v1352
      %v1385 = vpack.c.b16 %v1355, %v1354
      %v1386 = vpack.c.b16 %v1357, %v1356
      %v1387 = vpack.c.b16 %v1359, %v1358
      %v1388 = vpack.c.b16 %v1361, %v1360
      %v1389 = vpack.c.b16 %v1363, %v1362
      %v1390 = vpack.c.b16 %v1365, %v1364
      %v1391 = vpack.c.b16 %v1367, %v1366
      %v1392 = vpack.c.b16 %v1369, %v1368
      %v1393 = vpack.c.b16 %v1371, %v1370
      %v1394 = vpack.c.b16 %v1373, %v1372
      %v1395 = vpack.c.b16 %v1375, %v1374
      %v1396 = vpack.c.b16 %v1377, %v1376
      %v1397 = vpack.c.b16 %v1379, %v1378
      %v1398 = vpack.c.b16 %v1381, %v1380
      %v1399 = vpack.c.b16 %v1383, %v1382
      %1416 = vmatprep.subr.bf16.mxu0 0
      %1417 = vmatpush1.bf16.msra.mxu0 %v1384
      %1418 = vmatprep.subr.bf16.mxu0 0
      %1419 = vmatpush1.bf16.msra.mxu0 %v1385
      %1420 = vmatprep.subr.bf16.mxu0 0
      %1421 = vmatpush1.bf16.msra.mxu0 %v1386
      %1422 = vmatprep.subr.bf16.mxu0 0
      %1423 = vmatpush1.bf16.msra.mxu0 %v1387
      %1424 = vmatprep.subr.bf16.mxu0 0
      %1425 = vmatpush1.bf16.msra.mxu0 %v1388
      %1426 = vmatprep.subr.bf16.mxu0 0
      %1427 = vmatpush1.bf16.msra.mxu0 %v1389
      %1428 = vmatprep.subr.bf16.mxu0 0
      %1429 = vmatpush1.bf16.msra.mxu0 %v1390
      %1430 = vmatprep.subr.bf16.mxu0 0
      %1431 = vmatpush1.bf16.msra.mxu0 %v1391
      %1432 = vmatprep.subr.bf16.mxu0 0
      %1433 = vmatpush1.bf16.msra.mxu0 %v1392
      %1434 = vmatprep.subr.bf16.mxu0 0
      %1435 = vmatpush1.bf16.msra.mxu0 %v1393
      %1436 = vmatprep.subr.bf16.mxu0 0
      %1437 = vmatpush1.bf16.msra.mxu0 %v1394
      %1438 = vmatprep.subr.bf16.mxu0 0
      %1439 = vmatpush1.bf16.msra.mxu0 %v1395
      %1440 = vmatprep.subr.bf16.mxu0 0
      %1441 = vmatpush1.bf16.msra.mxu0 %v1396
      %1442 = vmatprep.subr.bf16.mxu0 0
      %1443 = vmatpush1.bf16.msra.mxu0 %v1397
      %1444 = vmatprep.subr.bf16.mxu0 0
      %1445 = vmatpush1.bf16.msra.mxu0 %v1398
      %1446 = vmatprep.subr.bf16.mxu0 0
      %1447 = vmatpush1.bf16.msra.mxu0 %v1399
      %1448 = vmatprep.mubr.bf16.mxu0 %v1257
      %1449 = vmatmul.mubr.bf16.gmra.mrb[0].mxu0 %v1240
      %v1450 = vpop.f32.mrb[0].mxu0
      %v1451 = vadd.f32 0.0, %v1450
      %v1452 = vpop.f32.mrb[0].mxu0
      %v1453 = vpop.f32.mrb[0].mxu0
      %v1454 = vadd.f32 0.0, %v1453
      %v1455 = vpop.f32.mrb[0].mxu0
      %1456 = vmatprep.mubr.bf16.mxu0 %v1270
      %1457 = vmatmul.mubr.bf16.gmra.mrb[0].mxu0 %v1261
      %v1458 = vpop.f32.mrb[0].mxu0
      %v1459 = vadd.f32 0.0, %v1458
      %v1460 = vpop.f32.mrb[0].mxu0
      %v1461 = vpop.f32.mrb[0].mxu0
      %v1462 = vadd.f32 0.0, %v1461
      %v1463 = vpop.f32.mrb[0].mxu0
      %1464 = vmatprep.mubr.bf16.mxu0 %v1283
      %1465 = vmatmul.mubr.bf16.gmra.mrb[0].mxu0 %v1274
      %v1466 = vpop.f32.mrb[0].mxu0
      %v1467 = vadd.f32 0.0, %v1466
      %v1468 = vpop.f32.mrb[0].mxu0
      %v1469 = vpop.f32.mrb[0].mxu0
      %v1470 = vadd.f32 0.0, %v1469
      %v1471 = vpop.f32.mrb[0].mxu0
      %1472 = vmatprep.mubr.bf16.mxu0 %v1296
      %1473 = vmatmul.mubr.bf16.gmra.mrb[0].mxu0 %v1287
      %v1474 = vpop.f32.mrb[0].mxu0
      %v1475 = vadd.f32 0.0, %v1474
      %v1476 = vpop.f32.mrb[0].mxu0
      %v1477 = vpop.f32.mrb[0].mxu0
      %v1478 = vadd.f32 0.0, %v1477
      %v1479 = vpop.f32.mrb[0].mxu0
      %1480 = vmatprep.mubr.bf16.mxu0 %v1309
      %1481 = vmatmul.mubr.bf16.gmra.mrb[0].mxu0 %v1300
      %v1482 = vpop.f32.mrb[0].mxu0
      %v1483 = vadd.f32 0.0, %v1482
      %v1484 = vpop.f32.mrb[0].mxu0
      %v1485 = vpop.f32.mrb[0].mxu0
      %v1486 = vadd.f32 0.0, %v1485
      %v1487 = vpop.f32.mrb[0].mxu0
      %1488 = vdwg.mxu0
      %v1489 = vadd.f32 %v1102, %v1451
      %v1490 = vadd.f32 %v1105, %v1454
      %v1491 = vadd.f32 %v1110, %v1459
      %v1492 = vadd.f32 %v1113, %v1462
      %v1493 = vadd.f32 %v1118, %v1467
      %v1494 = vadd.f32 %v1121, %v1470
      %v1495 = vadd.f32 %v1126, %v1475
      %v1496 = vadd.f32 %v1129, %v1478
      %v1497 = vadd.f32 %v1134, %v1483
      %v1498 = vadd.f32 %v1137, %v1486
      %v1499 = vld [vmem:[#allocation2 + $0x8] sm:$0xc]
      %v1500 = vld [vmem:[#allocation2 + $0xc] sm:$0xf]
      %v1501 = vld [vmem:[#allocation2 + $0x10] sm:$0xf]
      %v1502 = vld [vmem:[#allocation2 + $0x14] sm:$0xf]
      %v1503 = vld [vmem:[#allocation2 + $0x18] sm:$0xf]
      %v1504 = vld [vmem:[#allocation2 + $0x1c] sm:$0xf]
      %v1505 = vld [vmem:[#allocation2 + $0x20] sm:$0xf]
      %v1506 = vld [vmem:[#allocation2 + $0x24] sm:$0xf]
      %v1507 = vld [vmem:[#allocation2 + $0x28] sm:$0xf]
      %v1508 = vld [vmem:[#allocation2 + $0x2c] sm:$0xf]
      %v1509 = vld [vmem:[#allocation2 + $0x30] sm:$0x3]
      %v1510 = vld [vmem:[#allocation2 + $0x30] sm:$0x7]
      %v1522 = vunpack.c.l.b16 %v1499
      %v1523 = vunpack.c.l.b16 %v1500
      %v1524 = vunpack.c.l.b16 %v1501
      %v1525 = vunpack.c.l.b16 %v1502
      %v1526 = vunpack.c.l.b16 %v1503
      %v1527 = vunpack.c.l.b16 %v1504
      %v1528 = vunpack.c.l.b16 %v1505
      %v1529 = vunpack.c.l.b16 %v1506
      %v1530 = vunpack.c.l.b16 %v1507
      %v1531 = vunpack.c.l.b16 %v1508
      %v1532 = vunpack.c.l.b16 %v1509
      %v1533 = vpack.c.b16 %v1523, %v1522
      %v1534 = vpack.c.b16 %v1525, %v1524
      %v1535 = vpack.c.b16 %v1527, %v1526
      %v1536 = vpack.c.b16 %v1529, %v1528
      %v1537 = vpack.c.b16 %v1531, %v1530
      %v1538 = vpack.c.b16 %v1532, %v1532
      %v1540 = vunpack.c.l.b16 %v1510
      %v1541 = vpack.c.b16 %v1540, %v1540
      %v1543 = vshrl.u32 %v1533, 16
      %v1545 = vshll.u32 %v1533, 16
      %v1547 = vrot.slane %v1545, 1
      %v1548 = vor.u32 %v1543, %v1547
      %v1550 = vshll.u32 %v1534, 16
      %v1552 = vrot.slane %v1550, 1
      %v1553 = vsel %vm635, %v1548, %v1552
      %v1554 = vshrl.u32 %v1534, 16
      %v1556 = vor.u32 %v1554, %v1552
      %v1558 = vshll.u32 %v1535, 16
      %v1560 = vrot.slane %v1558, 1
      %v1561 = vsel %vm635, %v1556, %v1560
      %v1562 = vshrl.u32 %v1535, 16
      %v1564 = vor.u32 %v1562, %v1560
      %v1566 = vshll.u32 %v1536, 16
      %v1568 = vrot.slane %v1566, 1
      %v1569 = vsel %vm635, %v1564, %v1568
      %v1570 = vshrl.u32 %v1536, 16
      %v1572 = vor.u32 %v1570, %v1568
      %v1574 = vshll.u32 %v1537, 16
      %v1576 = vrot.slane %v1574, 1
      %v1577 = vsel %vm635, %v1572, %v1576
      %v1578 = vshrl.u32 %v1537, 16
      %v1580 = vor.u32 %v1578, %v1576
      %v1582 = vshll.u32 %v1541, 16
      %v1584 = vrot.slane %v1582, 1
      %v1585 = vsel %vm635, %v1580, %v1584
      %v1586 = vshrl.u32 %v1541, 16
      %v1588 = vor.u32 %v1586, %v1584
      %s1589 = scalar_lea.vmem %s3, 384
      %v1590 = vld [vmem:[%s1589] sm:$0xf]
      %v1591 = vld [vmem:[%s1589 + $0x4] sm:$0xf]
      %v1592 = vld [vmem:[%s1589 + $0x8] sm:$0xf]
      %v1593 = vld [vmem:[%s1589 + $0xc] sm:$0xf]
      %v1594 = vld [vmem:[%s1589 + $0x10] sm:$0xf]
      %v1595 = vld [vmem:[%s1589 + $0x14] sm:$0xf]
      %v1596 = vld [vmem:[%s1589 + $0x18] sm:$0xf]
      %v1597 = vld [vmem:[%s1589 + $0x1c] sm:$0xf]
      %v1598 = vld [vmem:[%s1589 + $0x20] sm:$0xf]
      %v1599 = vld [vmem:[%s1589 + $0x24] sm:$0xf]
      %v1600 = vld [vmem:[%s1589 + $0x28] sm:$0xf]
      %v1601 = vld [vmem:[%s1589 + $0x2c] sm:$0xf]
      %v1602 = vld [vmem:[%s1589 + $0x30] sm:$0xf]
      %v1603 = vld [vmem:[%s1589 + $0x34] sm:$0xf]
      %v1604 = vld [vmem:[%s1589 + $0x38] sm:$0xf]
      %v1605 = vld [vmem:[%s1589 + $0x3c] sm:$0xf]
      %v1606 = vld [vmem:[%s1589 + $0x40] sm:$0xf]
      %v1607 = vld [vmem:[%s1589 + $0x44] sm:$0xf]
      %v1608 = vld [vmem:[%s1589 + $0x48] sm:$0xf]
      %v1609 = vld [vmem:[%s1589 + $0x4c] sm:$0xf]
      %v1610 = vld [vmem:[%s1589 + $0x50] sm:$0xf]
      %v1611 = vld [vmem:[%s1589 + $0x54] sm:$0xf]
      %v1612 = vld [vmem:[%s1589 + $0x58] sm:$0xf]
      %v1613 = vld [vmem:[%s1589 + $0x5c] sm:$0xf]
      %v1614 = vld [vmem:[%s1589 + $0x60] sm:$0xf]
      %v1615 = vld [vmem:[%s1589 + $0x64] sm:$0xf]
      %v1616 = vld [vmem:[%s1589 + $0x68] sm:$0xf]
      %v1617 = vld [vmem:[%s1589 + $0x6c] sm:$0xf]
      %v1618 = vld [vmem:[%s1589 + $0x70] sm:$0xf]
      %v1619 = vld [vmem:[%s1589 + $0x74] sm:$0xf]
      %v1620 = vld [vmem:[%s1589 + $0x78] sm:$0xf]
      %v1621 = vld [vmem:[%s1589 + $0x7c] sm:$0xf]
      %vm1622 = vcmask 1045504
      %v1623 = vrot.slane %v1533, 2
      %v1624 = vrot.slane %v1534, 2
      %v1625 = vsel %vm1622, %v1623, %v1624
      %v1626 = vrot.slane %v1553, 2
      %v1627 = vrot.slane %v1561, 2
      %v1628 = vsel %vm1622, %v1626, %v1627
      %v1629 = vrot.slane %v1535, 2
      %v1630 = vsel %vm1622, %v1624, %v1629
      %v1631 = vrot.slane %v1569, 2
      %v1632 = vsel %vm1622, %v1627, %v1631
      %v1633 = vrot.slane %v1536, 2
      %v1634 = vsel %vm1622, %v1629, %v1633
      %v1635 = vrot.slane %v1577, 2
      %v1636 = vsel %vm1622, %v1631, %v1635
      %v1637 = vrot.slane %v1537, 2
      %v1638 = vsel %vm1622, %v1633, %v1637
      %v1639 = vrot.slane %v1585, 2
      %v1640 = vsel %vm1622, %v1635, %v1639
      %v1641 = vrot.slane %v1538, 2
      %v1642 = vsel %vm1622, %v1637, %v1641
      %v1643 = vrot.slane %v1588, 2
      %v1644 = vsel %vm1622, %v1639, %v1643
      %v1687 = vunpack.c.l.b16 %v1590
      %v1688 = vunpack.c.l.b16 %v1591
      %v1689 = vunpack.c.l.b16 %v1592
      %v1690 = vunpack.c.l.b16 %v1593
      %v1691 = vunpack.c.l.b16 %v1594
      %v1692 = vunpack.c.l.b16 %v1595
      %v1693 = vunpack.c.l.b16 %v1596
      %v1694 = vunpack.c.l.b16 %v1597
      %v1695 = vunpack.c.l.b16 %v1598
      %v1696 = vunpack.c.l.b16 %v1599
      %v1697 = vunpack.c.l.b16 %v1600
      %v1698 = vunpack.c.l.b16 %v1601
      %v1699 = vunpack.c.l.b16 %v1602
      %v1700 = vunpack.c.l.b16 %v1603
      %v1701 = vunpack.c.l.b16 %v1604
      %v1702 = vunpack.c.l.b16 %v1605
      %v1703 = vunpack.c.l.b16 %v1606
      %v1704 = vunpack.c.l.b16 %v1607
      %v1705 = vunpack.c.l.b16 %v1608
      %v1706 = vunpack.c.l.b16 %v1609
      %v1707 = vunpack.c.l.b16 %v1610
      %v1708 = vunpack.c.l.b16 %v1611
      %v1709 = vunpack.c.l.b16 %v1612
      %v1710 = vunpack.c.l.b16 %v1613
      %v1711 = vunpack.c.l.b16 %v1614
      %v1712 = vunpack.c.l.b16 %v1615
      %v1713 = vunpack.c.l.b16 %v1616
      %v1714 = vunpack.c.l.b16 %v1617
      %v1715 = vunpack.c.l.b16 %v1618
      %v1716 = vunpack.c.l.b16 %v1619
      %v1717 = vunpack.c.l.b16 %v1620
      %v1718 = vunpack.c.l.b16 %v1621
      %v1719 = vpack.c.b16 %v1688, %v1687
      %v1720 = vpack.c.b16 %v1690, %v1689
      %v1721 = vpack.c.b16 %v1692, %v1691
      %v1722 = vpack.c.b16 %v1694, %v1693
      %v1723 = vpack.c.b16 %v1696, %v1695
      %v1724 = vpack.c.b16 %v1698, %v1697
      %v1725 = vpack.c.b16 %v1700, %v1699
      %v1726 = vpack.c.b16 %v1702, %v1701
      %v1727 = vpack.c.b16 %v1704, %v1703
      %v1728 = vpack.c.b16 %v1706, %v1705
      %v1729 = vpack.c.b16 %v1708, %v1707
      %v1730 = vpack.c.b16 %v1710, %v1709
      %v1731 = vpack.c.b16 %v1712, %v1711
      %v1732 = vpack.c.b16 %v1714, %v1713
      %v1733 = vpack.c.b16 %v1716, %v1715
      %v1734 = vpack.c.b16 %v1718, %v1717
      %1751 = vmatprep.subr.bf16.mxu0 0
      %1752 = vmatpush1.bf16.msra.mxu0 %v1719
      %1753 = vmatprep.subr.bf16.mxu0 0
      %1754 = vmatpush1.bf16.msra.mxu0 %v1720
      %1755 = vmatprep.subr.bf16.mxu0 0
      %1756 = vmatpush1.bf16.msra.mxu0 %v1721
      %1757 = vmatprep.subr.bf16.mxu0 0
      %1758 = vmatpush1.bf16.msra.mxu0 %v1722
      %1759 = vmatprep.subr.bf16.mxu0 0
      %1760 = vmatpush1.bf16.msra.mxu0 %v1723
      %1761 = vmatprep.subr.bf16.mxu0 0
      %1762 = vmatpush1.bf16.msra.mxu0 %v1724
      %1763 = vmatprep.subr.bf16.mxu0 0
      %1764 = vmatpush1.bf16.msra.mxu0 %v1725
      %1765 = vmatprep.subr.bf16.mxu0 0
      %1766 = vmatpush1.bf16.msra.mxu0 %v1726
      %1767 = vmatprep.subr.bf16.mxu0 0
      %1768 = vmatpush1.bf16.msra.mxu0 %v1727
      %1769 = vmatprep.subr.bf16.mxu0 0
      %1770 = vmatpush1.bf16.msra.mxu0 %v1728
      %1771 = vmatprep.subr.bf16.mxu0 0
      %1772 = vmatpush1.bf16.msra.mxu0 %v1729
      %1773 = vmatprep.subr.bf16.mxu0 0
      %1774 = vmatpush1.bf16.msra.mxu0 %v1730
      %1775 = vmatprep.subr.bf16.mxu0 0
      %1776 = vmatpush1.bf16.msra.mxu0 %v1731
      %1777 = vmatprep.subr.bf16.mxu0 0
      %1778 = vmatpush1.bf16.msra.mxu0 %v1732
      %1779 = vmatprep.subr.bf16.mxu0 0
      %1780 = vmatpush1.bf16.msra.mxu0 %v1733
      %1781 = vmatprep.subr.bf16.mxu0 0
      %1782 = vmatpush1.bf16.msra.mxu0 %v1734
      %1783 = vmatprep.mubr.bf16.mxu0 %v1628
      %1784 = vmatmul.mubr.bf16.gmra.mrb[0].mxu0 %v1625
      %v1785 = vpop.f32.mrb[0].mxu0
      %v1786 = vadd.f32 0.0, %v1785
      %v1787 = vpop.f32.mrb[0].mxu0
      %v1788 = vpop.f32.mrb[0].mxu0
      %v1789 = vadd.f32 0.0, %v1788
      %v1790 = vpop.f32.mrb[0].mxu0
      %1791 = vmatprep.mubr.bf16.mxu0 %v1632
      %1792 = vmatmul.mubr.bf16.gmra.mrb[0].mxu0 %v1630
      %v1793 = vpop.f32.mrb[0].mxu0
      %v1794 = vadd.f32 0.0, %v1793
      %v1795 = vpop.f32.mrb[0].mxu0
      %v1796 = vpop.f32.mrb[0].mxu0
      %v1797 = vadd.f32 0.0, %v1796
      %v1798 = vpop.f32.mrb[0].mxu0
      %1799 = vmatprep.mubr.bf16.mxu0 %v1636
      %1800 = vmatmul.mubr.bf16.gmra.mrb[0].mxu0 %v1634
      %v1801 = vpop.f32.mrb[0].mxu0
      %v1802 = vadd.f32 0.0, %v1801
      %v1803 = vpop.f32.mrb[0].mxu0
      %v1804 = vpop.f32.mrb[0].mxu0
      %v1805 = vadd.f32 0.0, %v1804
      %v1806 = vpop.f32.mrb[0].mxu0
      %1807 = vmatprep.mubr.bf16.mxu0 %v1640
      %1808 = vmatmul.mubr.bf16.gmra.mrb[0].mxu0 %v1638
      %v1809 = vpop.f32.mrb[0].mxu0
      %v1810 = vadd.f32 0.0, %v1809
      %v1811 = vpop.f32.mrb[0].mxu0
      %v1812 = vpop.f32.mrb[0].mxu0
      %v1813 = vadd.f32 0.0, %v1812
      %v1814 = vpop.f32.mrb[0].mxu0
      %1815 = vmatprep.mubr.bf16.mxu0 %v1644
      %1816 = vmatmul.mubr.bf16.gmra.mrb[0].mxu0 %v1642
      %v1817 = vpop.f32.mrb[0].mxu0
      %v1818 = vadd.f32 0.0, %v1817
      %v1819 = vpop.f32.mrb[0].mxu0
      %v1820 = vpop.f32.mrb[0].mxu0
      %v1821 = vadd.f32 0.0, %v1820
      %v1822 = vpop.f32.mrb[0].mxu0
      %1823 = vdwg.mxu0
      %v1824 = vadd.f32 %v1489, %v1786
      %v1825 = vadd.f32 %v1490, %v1789
      %v1826 = vadd.f32 %v1491, %v1794
      %v1827 = vadd.f32 %v1492, %v1797
      %v1828 = vadd.f32 %v1493, %v1802
      %v1829 = vadd.f32 %v1494, %v1805
      %v1830 = vadd.f32 %v1495, %v1810
      %v1831 = vadd.f32 %v1496, %v1813
      %v1832 = vadd.f32 %v1497, %v1818
      %v1833 = vadd.f32 %v1498, %v1821
      %v1834 = vld [vmem:[#allocation2 + $0x8] sm:$0x8]
      %v1836 = vunpack.c.l.b16 %v1834
      %v1837 = vpack.c.b16 %v1523, %v1836
      %s1838 = scalar_lea.vmem %s3, 512
      %v1839 = vld [vmem:[%s1838] sm:$0xf]
      %v1840 = vld [vmem:[%s1838 + $0x4] sm:$0xf]
      %v1841 = vld [vmem:[%s1838 + $0x8] sm:$0xf]
      %v1842 = vld [vmem:[%s1838 + $0xc] sm:$0xf]
      %v1843 = vld [vmem:[%s1838 + $0x10] sm:$0xf]
      %v1844 = vld [vmem:[%s1838 + $0x14] sm:$0xf]
      %v1845 = vld [vmem:[%s1838 + $0x18] sm:$0xf]
      %v1846 = vld [vmem:[%s1838 + $0x1c] sm:$0xf]
      %v1847 = vld [vmem:[%s1838 + $0x20] sm:$0xf]
      %v1848 = vld [vmem:[%s1838 + $0x24] sm:$0xf]
      %v1849 = vld [vmem:[%s1838 + $0x28] sm:$0xf]
      %v1850 = vld [vmem:[%s1838 + $0x2c] sm:$0xf]
      %v1851 = vld [vmem:[%s1838 + $0x30] sm:$0xf]
      %v1852 = vld [vmem:[%s1838 + $0x34] sm:$0xf]
      %v1853 = vld [vmem:[%s1838 + $0x38] sm:$0xf]
      %v1854 = vld [vmem:[%s1838 + $0x3c] sm:$0xf]
      %v1855 = vld [vmem:[%s1838 + $0x40] sm:$0xf]
      %v1856 = vld [vmem:[%s1838 + $0x44] sm:$0xf]
      %v1857 = vld [vmem:[%s1838 + $0x48] sm:$0xf]
      %v1858 = vld [vmem:[%s1838 + $0x4c] sm:$0xf]
      %v1859 = vld [vmem:[%s1838 + $0x50] sm:$0xf]
      %v1860 = vld [vmem:[%s1838 + $0x54] sm:$0xf]
      %v1861 = vld [vmem:[%s1838 + $0x58] sm:$0xf]
      %v1862 = vld [vmem:[%s1838 + $0x5c] sm:$0xf]
      %v1863 = vld [vmem:[%s1838 + $0x60] sm:$0xf]
      %v1864 = vld [vmem:[%s1838 + $0x64] sm:$0xf]
      %v1865 = vld [vmem:[%s1838 + $0x68] sm:$0xf]
      %v1866 = vld [vmem:[%s1838 + $0x6c] sm:$0xf]
      %v1867 = vld [vmem:[%s1838 + $0x70] sm:$0xf]
      %v1868 = vld [vmem:[%s1838 + $0x74] sm:$0xf]
      %v1869 = vld [vmem:[%s1838 + $0x78] sm:$0xf]
      %v1870 = vld [vmem:[%s1838 + $0x7c] sm:$0xf]
      %vm1871 = vcmask 1044480
      %v1872 = vrot.slane %v1837, 3
      %v1873 = vrot.slane %v1534, 3
      %v1874 = vsel %vm1871, %v1872, %v1873
      %v1875 = vrot.slane %v1535, 3
      %v1876 = vsel %vm1871, %v1873, %v1875
      %v1877 = vrot.slane %v1536, 3
      %v1878 = vsel %vm1871, %v1875, %v1877
      %v1879 = vrot.slane %v1537, 3
      %v1880 = vsel %vm1871, %v1877, %v1879
      %v1881 = vrot.slane %v1541, 3
      %v1882 = vsel %vm1871, %v1879, %v1881
      %v1920 = vunpack.c.l.b16 %v1839
      %v1921 = vunpack.c.l.b16 %v1840
      %v1922 = vunpack.c.l.b16 %v1841
      %v1923 = vunpack.c.l.b16 %v1842
      %v1924 = vunpack.c.l.b16 %v1843
      %v1925 = vunpack.c.l.b16 %v1844
      %v1926 = vunpack.c.l.b16 %v1845
      %v1927 = vunpack.c.l.b16 %v1846
      %v1928 = vunpack.c.l.b16 %v1847
      %v1929 = vunpack.c.l.b16 %v1848
      %v1930 = vunpack.c.l.b16 %v1849
      %v1931 = vunpack.c.l.b16 %v1850
      %v1932 = vunpack.c.l.b16 %v1851
      %v1933 = vunpack.c.l.b16 %v1852
      %v1934 = vunpack.c.l.b16 %v1853
      %v1935 = vunpack.c.l.b16 %v1854
      %v1936 = vunpack.c.l.b16 %v1855
      %v1937 = vunpack.c.l.b16 %v1856
      %v1938 = vunpack.c.l.b16 %v1857
      %v1939 = vunpack.c.l.b16 %v1858
      %v1940 = vunpack.c.l.b16 %v1859
      %v1941 = vunpack.c.l.b16 %v1860
      %v1942 = vunpack.c.l.b16 %v1861
      %v1943 = vunpack.c.l.b16 %v1862
      %v1944 = vunpack.c.l.b16 %v1863
      %v1945 = vunpack.c.l.b16 %v1864
      %v1946 = vunpack.c.l.b16 %v1865
      %v1947 = vunpack.c.l.b16 %v1866
      %v1948 = vunpack.c.l.b16 %v1867
      %v1949 = vunpack.c.l.b16 %v1868
      %v1950 = vunpack.c.l.b16 %v1869
      %v1951 = vunpack.c.l.b16 %v1870
      %v1952 = vpack.c.b16 %v1921, %v1920
      %v1953 = vpack.c.b16 %v1923, %v1922
      %v1954 = vpack.c.b16 %v1925, %v1924
      %v1955 = vpack.c.b16 %v1927, %v1926
      %v1956 = vpack.c.b16 %v1929, %v1928
      %v1957 = vpack.c.b16 %v1931, %v1930
      %v1958 = vpack.c.b16 %v1933, %v1932
      %v1959 = vpack.c.b16 %v1935, %v1934
      %v1960 = vpack.c.b16 %v1937, %v1936
      %v1961 = vpack.c.b16 %v1939, %v1938
      %v1962 = vpack.c.b16 %v1941, %v1940
      %v1963 = vpack.c.b16 %v1943, %v1942
      %v1964 = vpack.c.b16 %v1945, %v1944
      %v1965 = vpack.c.b16 %v1947, %v1946
      %v1966 = vpack.c.b16 %v1949, %v1948
      %v1967 = vpack.c.b16 %v1951, %v1950
      %1984 = vmatprep.subr.bf16.mxu0 0
      %1985 = vmatpush1.bf16.msra.mxu0 %v1952
      %1986 = vmatprep.subr.bf16.mxu0 0
      %1987 = vmatpush1.bf16.msra.mxu0 %v1953
      %1988 = vmatprep.subr.bf16.mxu0 0
      %1989 = vmatpush1.bf16.msra.mxu0 %v1954
      %1990 = vmatprep.subr.bf16.mxu0 0
      %1991 = vmatpush1.bf16.msra.mxu0 %v1955
      %1992 = vmatprep.subr.bf16.mxu0 0
      %1993 = vmatpush1.bf16.msra.mxu0 %v1956
      %1994 = vmatprep.subr.bf16.mxu0 0
      %1995 = vmatpush1.bf16.msra.mxu0 %v1957
      %1996 = vmatprep.subr.bf16.mxu0 0
      %1997 = vmatpush1.bf16.msra.mxu0 %v1958
      %1998 = vmatprep.subr.bf16.mxu0 0
      %1999 = vmatpush1.bf16.msra.mxu0 %v1959
      %2000 = vmatprep.subr.bf16.mxu0 0
      %2001 = vmatpush1.bf16.msra.mxu0 %v1960
      %2002 = vmatprep.subr.bf16.mxu0 0
      %2003 = vmatpush1.bf16.msra.mxu0 %v1961
      %2004 = vmatprep.subr.bf16.mxu0 0
      %2005 = vmatpush1.bf16.msra.mxu0 %v1962
      %2006 = vmatprep.subr.bf16.mxu0 0
      %2007 = vmatpush1.bf16.msra.mxu0 %v1963
      %2008 = vmatprep.subr.bf16.mxu0 0
      %2009 = vmatpush1.bf16.msra.mxu0 %v1964
      %2010 = vmatprep.subr.bf16.mxu0 0
      %2011 = vmatpush1.bf16.msra.mxu0 %v1965
      %2012 = vmatprep.subr.bf16.mxu0 0
      %2013 = vmatpush1.bf16.msra.mxu0 %v1966
      %2014 = vmatprep.subr.bf16.mxu0 0
      %2015 = vmatpush1.bf16.msra.mxu0 %v1967
      %2016 = vmatprep.mubr.bf16.mxu0 %v1874
      %2017 = vmatmul.mubr.bf16.gmra.mrb[0].mxu0 %v1874
      %v2018 = vpop.f32.mrb[0].mxu0
      %v2019 = vadd.f32 0.0, %v2018
      %v2020 = vpop.f32.mrb[0].mxu0
      %v2021 = vpop.f32.mrb[0].mxu0
      %v2022 = vadd.f32 0.0, %v2021
      %v2023 = vpop.f32.mrb[0].mxu0
      %2024 = vmatprep.mubr.bf16.mxu0 %v1876
      %2025 = vmatmul.mubr.bf16.gmra.mrb[0].mxu0 %v1876
      %v2026 = vpop.f32.mrb[0].mxu0
      %v2027 = vadd.f32 0.0, %v2026
      %v2028 = vpop.f32.mrb[0].mxu0
      %v2029 = vpop.f32.mrb[0].mxu0
      %v2030 = vadd.f32 0.0, %v2029
      %v2031 = vpop.f32.mrb[0].mxu0
      %2032 = vmatprep.mubr.bf16.mxu0 %v1878
      %2033 = vmatmul.mubr.bf16.gmra.mrb[0].mxu0 %v1878
      %v2034 = vpop.f32.mrb[0].mxu0
      %v2035 = vadd.f32 0.0, %v2034
      %v2036 = vpop.f32.mrb[0].mxu0
      %v2037 = vpop.f32.mrb[0].mxu0
      %v2038 = vadd.f32 0.0, %v2037
      %v2039 = vpop.f32.mrb[0].mxu0
      %2040 = vmatprep.mubr.bf16.mxu0 %v1880
      %2041 = vmatmul.mubr.bf16.gmra.mrb[0].mxu0 %v1880
      %v2042 = vpop.f32.mrb[0].mxu0
      %v2043 = vadd.f32 0.0, %v2042
      %v2044 = vpop.f32.mrb[0].mxu0
      %v2045 = vpop.f32.mrb[0].mxu0
      %v2046 = vadd.f32 0.0, %v2045
      %v2047 = vpop.f32.mrb[0].mxu0
      %2048 = vmatprep.mubr.bf16.mxu0 %v1882
      %2049 = vmatmul.mubr.bf16.gmra.mrb[0].mxu0 %v1882
      %v2050 = vpop.f32.mrb[0].mxu0
      %v2051 = vadd.f32 0.0, %v2050
      %v2052 = vpop.f32.mrb[0].mxu0
      %v2053 = vpop.f32.mrb[0].mxu0
      %v2054 = vadd.f32 0.0, %v2053
      %v2055 = vpop.f32.mrb[0].mxu0
      %2056 = vdwg.mxu0
      %v2057 = vadd.f32 %v1824, %v2019
      %v2058 = vadd.f32 %v1825, %v2022
      %v2059 = vadd.f32 %v1826, %v2027
      %v2060 = vadd.f32 %v1827, %v2030
      %v2061 = vadd.f32 %v1828, %v2035
      %v2062 = vadd.f32 %v1829, %v2038
      %v2063 = vadd.f32 %v1830, %v2043
      %v2064 = vadd.f32 %v1831, %v2046
      %v2065 = vadd.f32 %v1832, %v2051
      %v2066 = vadd.f32 %v1833, %v2054
      %v2067 = vpack.c.bf16 %v2058, %v2057
      %v2068 = vpack.c.bf16 %v2060, %v2059
      %v2069 = vpack.c.bf16 %v2062, %v2061
      %v2070 = vpack.c.bf16 %v2064, %v2063
      %v2071 = vpack.c.bf16 %v2066, %v2065
      %v2077 = vunpack.c.l.b16 %v2067
      %v2078 = vunpack.c.h.b16 %v2067
      %v2079 = vunpack.c.l.b16 %v2068
      %v2080 = vunpack.c.h.b16 %v2068
      %v2081 = vunpack.c.l.b16 %v2069
      %v2082 = vunpack.c.h.b16 %v2069
      %v2083 = vunpack.c.l.b16 %v2070
      %v2084 = vunpack.c.h.b16 %v2070
      %v2085 = vunpack.c.l.b16 %v2071
      %v2086 = vunpack.c.h.b16 %v2071
      %v2087 = vpack.c.b16 %v2077, %v2077
      %v2088 = vpack.c.b16 %v2078, %v2078
      %v2089 = vpack.c.b16 %v2079, %v2079
      %v2090 = vpack.c.b16 %v2080, %v2080
      %v2091 = vpack.c.b16 %v2081, %v2081
      %v2092 = vpack.c.b16 %v2082, %v2082
      %v2093 = vpack.c.b16 %v2083, %v2083
      %v2094 = vpack.c.b16 %v2084, %v2084
      %v2095 = vpack.c.b16 %v2085, %v2085
      %v2096 = vpack.c.b16 %v2086, %v2086
      %2107 = vst [vmem:[%s231] sm:$0xf] %v2087
      %2108 = vst [vmem:[%s231 + $0x4] sm:$0xf] %v2088
      %2109 = vst [vmem:[%s231 + $0x8] sm:$0xf] %v2089
      %2110 = vst [vmem:[%s231 + $0xc] sm:$0xf] %v2090
      %2111 = vst [vmem:[%s231 + $0x10] sm:$0xf] %v2091
      %2112 = vst [vmem:[%s231 + $0x14] sm:$0xf] %v2092
      %2113 = vst [vmem:[%s231 + $0x18] sm:$0xf] %v2093
      %2114 = vst [vmem:[%s231 + $0x1c] sm:$0xf] %v2094
      %2115 = vst [vmem:[%s231 + $0x20] sm:$0xf] %v2095
      %2116 = vst [vmem:[%s231 + $0x24] sm:$0xf] %v2096
      %v2117 = vsel %vm400, %v2057, 0.0
      %v2118 = vsel %vm401, %v2058, 0.0
      %v2119 = vsel %vm402, %v2059, 0.0
      %v2120 = vsel %vm403, %v2060, 0.0
      %v2121 = vsel %vm404, %v2061, 0.0
      %v2122 = vsel %vm405, %v2062, 0.0
      %v2123 = vsel %vm406, %v2063, 0.0
      %v2124 = vsel %vm407, %v2064, 0.0
      %v2125 = vsel %vm408, %v2065, 0.0
      %v2126 = vsel %vm409, %v2066, 0.0
      %v2127 = vadd.f32 %v2117, %v2118
      %v2128 = vadd.f32 %v2127, %v2119
      %v2129 = vadd.f32 %v2128, %v2120
      %v2130 = vadd.f32 %v2129, %v2121
      %v2131 = vadd.f32 %v2130, %v2122
      %v2132 = vadd.f32 %v2131, %v2123
      %v2133 = vadd.f32 %v2132, %v2124
      %v2134 = vadd.f32 %v2133, %v2125
      %v2135 = vadd.f32 %v2134, %v2126
      %v2136 = vrot.slane %v2135, 4
      %v2137 = vadd.f32 %v2135, %v2136
      %v2138 = vrot.slane %v2137, 2
      %v2139 = vadd.f32 %v2137, %v2138
      %v2140 = vrot.slane %v2139, 1
      %v2141 = vadd.f32 %v2139, %v2140
      %v2142 = vmul.f32 %v2117, %v2057
      %v2143 = vmul.f32 %v2118, %v2058
      %v2144 = vmul.f32 %v2119, %v2059
      %v2145 = vmul.f32 %v2120, %v2060
      %v2146 = vmul.f32 %v2121, %v2061
      %v2147 = vmul.f32 %v2122, %v2062
      %v2148 = vmul.f32 %v2123, %v2063
      %v2149 = vmul.f32 %v2124, %v2064
      %v2150 = vmul.f32 %v2125, %v2065
      %v2151 = vmul.f32 %v2126, %v2066
      %v2152 = vadd.f32 %v2142, %v2143
      %v2153 = vadd.f32 %v2152, %v2144
      %v2154 = vadd.f32 %v2153, %v2145
      %v2155 = vadd.f32 %v2154, %v2146
      %v2156 = vadd.f32 %v2155, %v2147
      %v2157 = vadd.f32 %v2156, %v2148
      %v2158 = vadd.f32 %v2157, %v2149
      %v2159 = vadd.f32 %v2158, %v2150
      %v2160 = vadd.f32 %v2159, %v2151
      %v2161 = vrot.slane %v2160, 4
      %v2162 = vadd.f32 %v2160, %v2161
      %v2163 = vrot.slane %v2162, 2
      %v2164 = vadd.f32 %v2162, %v2163
      %v2165 = vrot.slane %v2164, 1
      %v2166 = vadd.f32 %v2164, %v2165
      %vm2167 = vcmask 1040384
      %v2168 = vsel %vm2167, %v2141, %v2166
      %2169 = vst [vmem:[%s235] sm:$0x3] %v2168
      %p2170 = scmp.lt.s32.totalorder %s17, 1
      %s2171 = scalar_select %p2170, %s17, 1
      %s2172 = smul.addr %s2171, 10
      %s2173 = smul.addr %s2172, 4
      %s2174 = scalar_lea.vmem %s4, %s2173
      %p2175 = scmp.lt.s32.totalorder %s17, 1
      %s2176 = scalar_select %p2175, %s17, 1
      %s2177 = smul.addr %s2176, 2
      %s2178 = scalar_lea.vmem %s5, %s2177
      // Predicated region
      $region37: #{_lambda_.4} parent=35 // pred_check
        %p2179 = pneg %p124
      $region38: #{_lambda_.4} parent=35 // pred_check_branch
        %2181 = sbr.rel (%p2179) target = $region40
      $region39: #{_lambda_.4} parent=35 // pred_region
        _
      $region40: #{_lambda_.4} parent=35 // pred_fallthru
        _
      // Predicated region
      $region41: #{_lambda_.4} parent=35 // pred_check
        %p2182 = pneg %p150
      $region42: #{_lambda_.4} parent=35 // pred_check_branch
        %2184 = sbr.rel (%p2182) target = $region44
      $region43: #{_lambda_.4} parent=35 // pred_region
        _
      $region44: #{_lambda_.4} parent=35 // pred_fallthru
        _
    $region36: #{_lambda_.4} parent=5 // pred_fallthru
      _
    %p2185 = scmp.le.s32.totalorder 2, %s12
    // Predicated region
    $region45: #{_lambda_.4} parent=5 // pred_check
      %p2186 = pneg %p2185
    $region46: #{_lambda_.4} parent=5 // pred_check_branch
      %2188 = sbr.rel (%p2186) target = $region48
    $region47: #{_lambda_.4} parent=5 // pred_region
      %s2189 = ssub.s32 %s12, 2
      // Predicated region
      $region49: #{_lambda_.4} parent=47 // pred_check
        %p2190 = pneg %p130
      $region50: #{_lambda_.4} parent=47 // pred_check_branch
        %2192 = sbr.rel (%p2190) target = $region52
      $region51: #{_lambda_.4} parent=47 // pred_region
        %p2193 = scmp.lt.s32.totalorder %s18, 1
        %s2194 = scalar_select %p2193, %s18, 1
        %s2195 = smul.addr %s2194, 10
        %s2196 = smul.addr %s2195, 4
        %s2197 = scalar_lea.vmem %s4, %s2196
      $region52: #{_lambda_.4} parent=47 // pred_fallthru
        _
      // Predicated region
      $region53: #{_lambda_.4} parent=47 // pred_check
        %p2198 = pneg %p156
      $region54: #{_lambda_.4} parent=47 // pred_check_branch
        %2200 = sbr.rel (%p2198) target = $region56
      $region55: #{_lambda_.4} parent=47 // pred_region
        %p2201 = scmp.lt.s32.totalorder %s18, 1
        %s2202 = scalar_select %p2201, %s18, 1
        %s2203 = smul.addr %s2202, 2
        %s2204 = scalar_lea.vmem %s5, %s2203
      $region56: #{_lambda_.4} parent=47 // pred_fallthru
        _
    $region48: #{_lambda_.4} parent=5 // pred_fallthru
      _
  $region6: #{_lambda_.4} parent=0 // loop_footer
    %s16 = sadd.s32 1, %s12
  $region7: #{_lambda_.4} parent=0 // loop_footer_branch
    %11 = sbr.rel target = $region3
  $region8: #{_lambda_.4} parent=0 // loop_exit
    _

</llo_original>
